<compile_context>
chip_gen: v5e
topology: v5e:2x2
jax: 0.10.0
libtpu: 0.0.40
codegen_flags: <defaults>
</compile_context>

<pallas_src>
import functools

import jax
import jax.numpy as jnp
from jax import lax
from jax.experimental import pallas as pl
from jax.experimental.pallas import tpu as pltpu


_HALO = 8  # sublane-aligned halo per tile side (true cascade radius is 3)


def _tpu_vmem_capacity():
    """Per-core VMEM capacity in bytes (conservative v7x fallback)."""
    try:
        cap = int(pltpu.get_tpu_info().vmem_capacity_bytes)
        if cap > 0:
            return cap
    except Exception:
        pass
    return 64 * 1024 * 1024


# ----------------------------------------------------------------------------
# Shared SurfaceNet math on one (R, W) f32 tile.
# ----------------------------------------------------------------------------
def _surface_math(x, inv_2ax, inv_2ay, m_rp, m_rm, m_cp, m_cm):
    """Boundary masks (zero padding of the 3x3 convs / avg-pool at the *image*
    boundary), in global coordinates:
      m_rp[i]: row i may read row i+1      m_rm[i]: row i may read row i-1
      m_cp[j]: col j may read col j+1      m_cm[j]: col j may read col j-1
    m_rp / m_rm may be None (interior H-tiles: all-true, select skipped).
    Rows within the cascade radius (3) of a tile boundary that is not an image
    boundary are garbage; the caller only stores the valid interior rows.
    """
    R, W = x.shape

    def sh_rp(v):  # v[i + 1, j], zero outside the image
        r = pltpu.roll(v, shift=R - 1, axis=0)
        return r if m_rp is None else jnp.where(m_rp, r, 0.0)

    def sh_rm(v):  # v[i - 1, j]
        r = pltpu.roll(v, shift=1, axis=0)
        return r if m_rm is None else jnp.where(m_rm, r, 0.0)

    def sh_cp(v):  # v[i, j + 1]
        return jnp.where(m_cp, pltpu.roll(v, shift=W - 1, axis=1), 0.0)

    def sh_cm(v):  # v[i, j - 1]
        return jnp.where(m_cm, pltpu.roll(v, shift=1, axis=1), 0.0)

    # delta_x = x/ax + 1e-6 ; dzdx = conv_x(x)/2/delta_x ; nx = -dzdx
    #   => nx = (x[j-1] - x[j+1]) / (2*x/ax + 2e-6)     (the /2 is folded)
    delta2_x = x * inv_2ax + 2e-6           # inv_2ax = 2/ax (scalar)
    delta2_y = x * inv_2ay + 2e-6
    nx = (sh_cm(x) - sh_cp(x)) / delta2_x
    ny = (sh_rm(x) - sh_rp(x)) / delta2_y

    inv_n = 1.0 / jnp.sqrt(nx * nx + ny * ny + 1.0)   # delzdelz == 1 everywhere
    snx = nx * inv_n
    sny = ny * inv_n
    snz = inv_n

    # mean_cur = (conv_x(snx)/2 + conv_y(sny)/2)/2 ; avg_pool 3x3 s1 p1 /9 ;
    # all constants folded into a single *(1/36) after the separable 3x3 sum.
    mc = (sh_cp(snx) - sh_cm(snx)) + (sh_rp(sny) - sh_rm(sny))
    rs = sh_rm(mc) + mc + sh_rp(mc)
    curv = jnp.abs(sh_cm(rs) + rs + sh_cp(rs)) * (1.0 / 36.0)
    return snx, sny, snz, curv


# ----------------------------------------------------------------------------
# H-tiled kernel with double-buffered manual halo DMA (primary path).
# ----------------------------------------------------------------------------
def _surfacenet_tiled_kernel(ax_ref, ay_ref, x_hbm, norm_ref, curv_ref,
                             xbuf, sem, *, H, W_img, th):
    b = pl.program_id(0)
    t = pl.program_id(1)
    T = pl.num_programs(1)
    _, tbh, W = xbuf.shape

    def window_start(tt):
        # Global row window [start, start + tbh), clamped inside the frame;
        # start stays a multiple of 8 (th and H are multiples of 8).
        s = jnp.clip(tt * th - _HALO, 0, H - tbh)
        return pl.multiple_of(s, 8)

    def fetch(tt, slot):
        s = window_start(tt)
        pltpu.make_async_copy(x_hbm.at[b, pl.ds(s, tbh), :],
                              xbuf.at[slot], sem.at[slot]).start()

    cur = lax.rem(t, 2)

    # Prime the pipeline on the first tile of each image; the prefetch chain
    # never crosses the (megacore-parallel) batch axis.
    @pl.when(t == 0)
    def _():
        fetch(t, cur)

    # Prefetch the next tile of the same image into the other buffer.
    @pl.when(t + 1 < T)
    def _():
        fetch(t + 1, 1 - cur)

    # DMA-independent prep while the current fetch is in flight (SMEM scalar
    # reads before the wait: .wait() breaks sst->sld forwarding).
    inv_2ax = 2.0 / ax_ref[b]
    inv_2ay = 2.0 / ay_ref[b]
    start = window_start(t)
    grow = start + lax.broadcasted_iota(jnp.int32, (tbh, 1), 0)
    col = lax.broadcasted_iota(jnp.int32, (1, W), 1)
    m_rp = grow < H - 1
    m_rm = grow >= 1
    m_cp = col < W_img - 1
    m_cm = col >= 1

    pltpu.make_async_copy(x_hbm.at[b, pl.ds(start, tbh), :],
                          xbuf.at[cur], sem.at[cur]).wait()
    xv = xbuf[cur]

    def compute_and_store(row_p, row_m, off):
        snx, sny, snz, curv = _surface_math(
            xv, inv_2ax, inv_2ay, row_p, row_m, m_cp, m_cm)
        rows = slice(off, off + th)     # static, 8-aligned valid-interior rows
        norm_ref[0, 0] = snx[rows].astype(norm_ref.dtype)
        norm_ref[0, 1] = sny[rows].astype(norm_ref.dtype)
        norm_ref[0, 2] = snz[rows].astype(norm_ref.dtype)
        curv_ref[0] = curv[rows].astype(curv_ref.dtype)

    # off takes exactly three static values: 0 / HALO / 2*HALO.  Interior
    # tiles additionally skip the (all-true) row-boundary selects.
    @pl.when(t == 0)
    def _():
        compute_and_store(m_rp, m_rm, 0)

    @pl.when(jnp.logical_and(t > 0, t + 1 < T))
    def _():
        compute_and_store(None, None, _HALO)

    @pl.when(jnp.logical_and(t > 0, t + 1 == T))
    def _():
        compute_and_store(m_rp, m_rm, 2 * _HALO)


def _surfacenet_tiled(x, ax_b, ay_b, th, W_img, out_dtype):
    B, H, W = x.shape
    T = H // th
    tbh = th + 2 * _HALO
    cap = _tpu_vmem_capacity()
    vmem_limit = int(min(cap * 3 // 4, 96 * 1024 * 1024))
    kernel = functools.partial(_surfacenet_tiled_kernel, H=H, W_img=W_img, th=th)
    smem_spec = pl.BlockSpec(memory_space=pltpu.MemorySpace.SMEM)
    grid_spec = pltpu.PrefetchScalarGridSpec(
        num_scalar_prefetch=0,
        grid=(B, T),
        in_specs=[
            smem_spec,                          # ax  (B,) scalar per image
            smem_spec,                          # ay  (B,)
            pl.BlockSpec(memory_space=pl.ANY),  # x stays in HBM, DMA'd manually
        ],
        out_specs=[
            pl.BlockSpec((1, 3, th, W), lambda b, t: (b, 0, t, 0)),
            pl.BlockSpec((1, th, W), lambda b, t: (b, t, 0)),
        ],
        scratch_shapes=[
            pltpu.VMEM((2, tbh, W), jnp.float32),   # double-buffered halo'd x
            pltpu.SemaphoreType.DMA((2,)),
        ],
    )
    return pl.pallas_call(
        kernel,
        out_shape=(
            jax.ShapeDtypeStruct((B, 3, H, W), out_dtype),
            jax.ShapeDtypeStruct((B, H, W), out_dtype),
        ),
        grid_spec=grid_spec,
        compiler_params=pltpu.CompilerParams(
            dimension_semantics=("parallel", "arbitrary"),
            vmem_limit_bytes=vmem_limit),
    )(ax_b, ay_b, x)


# ----------------------------------------------------------------------------
# Full-frame fallback kernel (small / oddly shaped frames).
# ----------------------------------------------------------------------------
def _surfacenet_full_kernel(ax_ref, ay_ref, x_ref, norm_ref, curv_ref):
    b = pl.program_id(0)
    x = x_ref[0]                                 # (H, W)
    H, W = x.shape
    inv_2ax = 2.0 / ax_ref[b]
    inv_2ay = 2.0 / ay_ref[b]
    row = lax.broadcasted_iota(jnp.int32, (H, 1), 0)
    col = lax.broadcasted_iota(jnp.int32, (1, W), 1)
    snx, sny, snz, curv = _surface_math(
        x, inv_2ax, inv_2ay, row < H - 1, row >= 1, col < W - 1, col >= 1)
    norm_ref[0, 0] = snx.astype(norm_ref.dtype)
    norm_ref[0, 1] = sny.astype(norm_ref.dtype)
    norm_ref[0, 2] = snz.astype(norm_ref.dtype)
    curv_ref[0] = curv.astype(curv_ref.dtype)


def _surfacenet_full(x, ax_b, ay_b, out_dtype):
    B, H, W = x.shape
    plane = H * W * 4
    needed = 26 * plane + (2 << 20)              # I/O double-buffers + temps
    cap = _tpu_vmem_capacity()
    vmem_limit = int(min(needed, cap * 3 // 4)) if needed > (16 << 20) else None
    smem_spec = pl.BlockSpec(memory_space=pltpu.MemorySpace.SMEM)
    grid_spec = pltpu.PrefetchScalarGridSpec(
        num_scalar_prefetch=0,
        grid=(B,),
        in_specs=[
            smem_spec,
            smem_spec,
            pl.BlockSpec((1, H, W), lambda b: (b, 0, 0)),
        ],
        out_specs=[
            pl.BlockSpec((1, 3, H, W), lambda b: (b, 0, 0, 0)),
            pl.BlockSpec((1, H, W), lambda b: (b, 0, 0)),
        ],
    )
    return pl.pallas_call(
        _surfacenet_full_kernel,
        out_shape=(
            jax.ShapeDtypeStruct((B, 3, H, W), out_dtype),
            jax.ShapeDtypeStruct((B, H, W), out_dtype),
        ),
        grid_spec=grid_spec,
        compiler_params=pltpu.CompilerParams(
            dimension_semantics=("parallel",),
            vmem_limit_bytes=vmem_limit),
    )(ax_b, ay_b, x)


# ----------------------------------------------------------------------------
# Public wrapper.
# ----------------------------------------------------------------------------
def _pick_tile_h(H, W):
    if H % 8 != 0:
        return None
    W = -(-W // 128) * 128                       # lane-padded width
    feasible = [c for c in (512, 256, 128, 64, 32, 16, 8)
                if H % c == 0 and H >= c + 2 * _HALO]
    if not feasible:
        return None
    cap = _tpu_vmem_capacity()
    budget = min(cap * 2 // 5, 40 * 1024 * 1024)   # live-set target per step
    for c in feasible:                             # descending: biggest first
        tbh = c + 2 * _HALO
        # 2x halo'd xbuf + ~12 live f32 temps + double-buffered out blocks
        est = 4 * W * (14 * tbh + 8 * c)
        if est <= budget:
            return c
    return feasible[-1]


def surfacenet_pallas(x, ax, ay, *, tile_h=None, out_dtype=jnp.float32):
    """SurfaceNet.forward.

    x      : (B, 1, H, W) or (B, H, W) depth map (nb_channels == 1).
    ax, ay : scalar or one value per image (camera intrinsics).
    Returns (surface_norm (B, 3, H, W), curvature (B, H, W)).
    """
    x = jnp.asarray(x, jnp.float32)
    if x.ndim == 4:
        assert x.shape[1] == 1, "SurfaceNet expects nb_channels == 1"
        x = x[:, 0]
    assert x.ndim == 3
    B, H, W = x.shape

    def per_image(v, name):
        v = jnp.asarray(v, jnp.float32).reshape(-1)
        if v.size == 1:
            return jnp.broadcast_to(v, (B,))
        if v.size == B:
            return v
        # TODO(synk): per-pixel ax/ay maps would need an extra tiled input
        # plane; MVS4net only passes per-image intrinsics here.
        raise ValueError(f"{name} must be a scalar or one value per image")

    ax_b = per_image(ax, "ax")
    ay_b = per_image(ay, "ay")

    th = tile_h if tile_h is not None else _pick_tile_h(H, W)
    if th is not None and th % 8 == 0 and H % th == 0 and H >= th + 2 * _HALO:
        Wp = -(-W // 128) * 128
        xp = x if Wp == W else jnp.pad(x, ((0, 0), (0, 0), (0, Wp - W)),
                                       mode="edge")
        norm, curv = _surfacenet_tiled(xp, ax_b, ay_b, th, W, out_dtype)
        if Wp != W:
            norm = norm[..., :W]
            curv = curv[..., :W]
        return norm, curv
    return _surfacenet_full(x, ax_b, ay_b, out_dtype)


# ----------------------------------------------------------------------------
# Pure-JAX reference (mirrors the torch code) for correctness checking.
# ----------------------------------------------------------------------------
def surfacenet_ref(x, ax, ay):
    x = jnp.asarray(x, jnp.float32)
    B = x.shape[0]
    ax = jnp.broadcast_to(jnp.asarray(ax, jnp.float32).reshape(-1), (B,))[:, None, None]
    ay = jnp.broadcast_to(jnp.asarray(ay, jnp.float32).reshape(-1), (B,))[:, None, None]

    kx = jnp.array([[0., 0., 0.], [-1., 0., 1.], [0., 0., 0.]], jnp.float32)
    ky = jnp.array([[0., -1., 0.], [0., 0., 0.], [0., 1., 0.]], jnp.float32)

    def conv(img, k):  # img: (B, H, W)
        return lax.conv_general_dilated(
            img[:, None], k[None, None], (1, 1), ((1, 1), (1, 1)),
            dimension_numbers=("NCHW", "OIHW", "NCHW"))[:, 0]

    delta_x = x / ax + 1e-6
    delta_y = x / ay + 1e-6
    dzx = conv(x, kx) / 2.0 / delta_x
    dzy = conv(x, ky) / 2.0 / delta_y
    nx, ny = -dzx, -dzy
    n = jnp.sqrt(nx * nx + ny * ny + 1.0)
    snx, sny, snz = nx / n, ny / n, 1.0 / n
    cur_x = conv(snx, kx) / 2.0
    cur_y = conv(sny, ky) / 2.0
    mean_cur = (cur_x + cur_y) / 2.0
    pooled = lax.reduce_window(mean_cur, 0.0, lax.add, (1, 3, 3), (1, 1, 1),
                               padding=((0, 0), (1, 1), (1, 1))) / 9.0
    return jnp.stack([snx, sny, snz], axis=1), jnp.abs(pooled)


# ----------------------------------------------------------------------------
# MVS4net (partial port, reg_net='reg2d_no_n'): only SurfaceNet is specified
# in the reference source, so it is the Pallas hot path exposed here.
# ----------------------------------------------------------------------------
class MVS4netPallas:
    def __init__(self, num_stage=4, stage_splits=(8, 8, 4, 4)):
        self.num_stage = num_stage
        self.stage_splits = list(stage_splits)
        # reg_net='reg2d_no_n' -> normalnet is a list of parameter-free SurfaceNets
        self.normalnet = [surfacenet_pallas for _ in range(num_stage)]
        # TODO(synk): FPN4, stagenet, reg2d/reg2d_no_n, NormalNet, ConfidenceNet,
        # ASFF, mono_depth_decoder and init_range/schedule_range are referenced by
        # MVS4net.forward but their source was not provided; not faked here.

    def normal_stage(self, depth_est, ax, ay, stage_idx=0):
        return self.normalnet[stage_idx](depth_est, ax, ay)


if __name__ == "__main__":
    key = jax.random.PRNGKey(0)
    kx_, ka_, kb_, kx2_, kx3_ = jax.random.split(key, 5)

    # Main case: H-tiled double-buffered halo path (tile_h=32 -> first /
    # interior / last tile branches), per-image scalar ax/ay.
    B, H, W = 2, 96, 256
    x = jax.random.uniform(kx_, (B, 1, H, W), jnp.float32, minval=1.0, maxval=2.0)
    ax = jax.random.uniform(ka_, (B,), jnp.float32, minval=100.0, maxval=200.0)
    ay = jax.random.uniform(kb_, (B,), jnp.float32, minval=100.0, maxval=200.0)

    net = MVS4netPallas()
    surface_norm, curvature = net.normal_stage(x, ax, ay, stage_idx=0)
    jax.block_until_ready((surface_norm, curvature))

    sn_ref, cv_ref = surfacenet_ref(x[:, 0], ax, ay)
    assert surface_norm.shape == (B, 3, H, W) and curvature.shape == (B, H, W)
    assert jnp.allclose(surface_norm, sn_ref, rtol=5e-4, atol=5e-4)
    assert jnp.allclose(curvature, cv_ref, rtol=5e-4, atol=5e-4)

    # Unaligned width: exercises the lane-padding (W=200 -> 256) + cropping
    # path with B=1 and an interior tile (th=16, 3 tiles).
    B3, H3, W3 = 1, 48, 200
    x3 = jax.random.uniform(kx3_, (B3, 1, H3, W3), jnp.float32, minval=1.0, maxval=2.0)
    sn3, cv3 = surfacenet_pallas(x3, 120.0, 130.0)
    jax.block_until_ready((sn3, cv3))
    sn3_ref, cv3_ref = surfacenet_ref(x3[:, 0], 120.0, 130.0)
    assert sn3.shape == (B3, 3, H3, W3) and cv3.shape == (B3, H3, W3)
    assert jnp.allclose(sn3, sn3_ref, rtol=5e-4, atol=5e-4)
    assert jnp.allclose(cv3, cv3_ref, rtol=5e-4, atol=5e-4)

    # Small-frame case: full-frame fallback (H too small to tile with a halo).
    B2, H2, W2 = 2, 16, 128
    x2 = jax.random.uniform(kx2_, (B2, 1, H2, W2), jnp.float32, minval=1.0, maxval=2.0)
    sn2, cv2 = surfacenet_pallas(x2, 150.0, 175.0)
    jax.block_until_ready((sn2, cv2))
    sn2_ref, cv2_ref = surfacenet_ref(x2[:, 0], 150.0, 175.0)
    assert jnp.allclose(sn2, sn2_ref, rtol=5e-4, atol=5e-4)
    assert jnp.allclose(cv2, cv2_ref, rtol=5e-4, atol=5e-4)

    print("KERNEL_OK")
</pallas_src>

<mosaic_0001>
module attributes {stable_mosaic.version = 11 : i64} {
  func.func @_surfacenet_tiled_kernel(%arg0: i32, %arg1: i32, %arg2: memref<2xf32, #tpu.memory_space<smem>>, %arg3: memref<2xf32, #tpu.memory_space<smem>>, %arg4: memref<2x96x256xf32, #tpu.memory_space<any>>, %arg5: memref<1x3x32x256xf32, #tpu.memory_space<vmem>>, %arg6: memref<1x32x256xf32, #tpu.memory_space<vmem>>, %arg7: memref<2x48x256xf32, #tpu.memory_space<vmem>>, %arg8: memref<2x!tpu.dma_semaphore, #tpu.memory_space<semaphore_mem>>) attributes {dimension_semantics = [#tpu.dimension_semantics<parallel>, #tpu.dimension_semantics<arbitrary>], iteration_bounds = array<i64: 2, 3>, scalar_prefetch = 0 : i64, scratch_operands = 2 : i64, tpu.core_type = #tpu.core_type<tc>, window_params = [{transform_indices = @transform_0, window_bounds = array<i64: 2>}, {transform_indices = @transform_1, window_bounds = array<i64: 2>}, {}, {transform_indices = @transform_3, window_bounds = array<i64: 1, 3, 32, 256>}, {transform_indices = @transform_4, window_bounds = array<i64: 1, 32, 256>}]} {
    %c2_i32 = arith.constant 2 : i32
    %0 = arith.remsi %arg1, %c2_i32 : i32
    %c0_i32 = arith.constant 0 : i32
    %1 = arith.cmpi eq, %arg1, %c0_i32 : i32
    %2 = arith.extui %1 : i1 to i32
    %c0_i32_0 = arith.constant 0 : i32
    %3 = arith.cmpi ne, %2, %c0_i32_0 : i32
    scf.if %3 {
      %c32_i32_20 = arith.constant 32 : i32
      %55 = arith.muli %arg1, %c32_i32_20 : i32
      %c8_i32_21 = arith.constant 8 : i32
      %56 = arith.subi %55, %c8_i32_21 : i32
      %c0_i32_22 = arith.constant 0 : i32
      %c48_i32_23 = arith.constant 48 : i32
      %57 = arith.maxsi %c0_i32_22, %56 : i32
      %58 = arith.minsi %c48_i32_23, %57 : i32
      %59 = tpu.assume_multiple %58, 8 : i32
      %c0_i32_24 = arith.constant 0 : i32
      %60 = tpu.memref_slice %arg4[%arg0, %59, %c0_i32_24] : memref<2x96x256xf32, #tpu.memory_space<any>> -> memref<1x48x256xf32, #tpu.memory_space<any>>
      %61 = tpu.memref_squeeze %60 : memref<1x48x256xf32, #tpu.memory_space<any>> -> memref<48x256xf32, #tpu.memory_space<any>>
      %c0_i32_25 = arith.constant 0 : i32
      %c0_i32_26 = arith.constant 0 : i32
      %62 = tpu.memref_slice %arg7[%0, %c0_i32_25, %c0_i32_26] : memref<2x48x256xf32, #tpu.memory_space<vmem>> -> memref<1x48x256xf32, #tpu.memory_space<vmem>>
      %63 = tpu.memref_squeeze %62 : memref<1x48x256xf32, #tpu.memory_space<vmem>> -> memref<48x256xf32, #tpu.memory_space<vmem>>
      %64 = tpu.memref_slice %arg8[%0] : memref<2x!tpu.dma_semaphore, #tpu.memory_space<semaphore_mem>> -> memref<1x!tpu.dma_semaphore, #tpu.memory_space<semaphore_mem>>
      %65 = tpu.memref_squeeze %64 : memref<1x!tpu.dma_semaphore, #tpu.memory_space<semaphore_mem>> -> memref<!tpu.dma_semaphore, #tpu.memory_space<semaphore_mem>>
      tpu.enqueue_dma source(%61 : memref<48x256xf32, #tpu.memory_space<any>>) target(%63 : memref<48x256xf32, #tpu.memory_space<vmem>>) target_semaphore(%65 : memref<!tpu.dma_semaphore, #tpu.memory_space<semaphore_mem>>)
    } else {
    }
    %c1_i32 = arith.constant 1 : i32
    %4 = arith.addi %arg1, %c1_i32 : i32
    %c3_i32 = arith.constant 3 : i32
    %5 = arith.cmpi slt, %4, %c3_i32 : i32
    %6 = arith.extui %5 : i1 to i32
    %c0_i32_1 = arith.constant 0 : i32
    %7 = arith.cmpi ne, %6, %c0_i32_1 : i32
    scf.if %7 {
      %c1_i32_20 = arith.constant 1 : i32
      %55 = arith.addi %arg1, %c1_i32_20 : i32
      %c1_i32_21 = arith.constant 1 : i32
      %56 = arith.subi %c1_i32_21, %0 : i32
      %c32_i32_22 = arith.constant 32 : i32
      %57 = arith.muli %55, %c32_i32_22 : i32
      %c8_i32_23 = arith.constant 8 : i32
      %58 = arith.subi %57, %c8_i32_23 : i32
      %c0_i32_24 = arith.constant 0 : i32
      %c48_i32_25 = arith.constant 48 : i32
      %59 = arith.maxsi %c0_i32_24, %58 : i32
      %60 = arith.minsi %c48_i32_25, %59 : i32
      %61 = tpu.assume_multiple %60, 8 : i32
      %c0_i32_26 = arith.constant 0 : i32
      %62 = tpu.memref_slice %arg4[%arg0, %61, %c0_i32_26] : memref<2x96x256xf32, #tpu.memory_space<any>> -> memref<1x48x256xf32, #tpu.memory_space<any>>
      %63 = tpu.memref_squeeze %62 : memref<1x48x256xf32, #tpu.memory_space<any>> -> memref<48x256xf32, #tpu.memory_space<any>>
      %c0_i32_27 = arith.constant 0 : i32
      %c0_i32_28 = arith.constant 0 : i32
      %64 = tpu.memref_slice %arg7[%56, %c0_i32_27, %c0_i32_28] : memref<2x48x256xf32, #tpu.memory_space<vmem>> -> memref<1x48x256xf32, #tpu.memory_space<vmem>>
      %65 = tpu.memref_squeeze %64 : memref<1x48x256xf32, #tpu.memory_space<vmem>> -> memref<48x256xf32, #tpu.memory_space<vmem>>
      %66 = tpu.memref_slice %arg8[%56] : memref<2x!tpu.dma_semaphore, #tpu.memory_space<semaphore_mem>> -> memref<1x!tpu.dma_semaphore, #tpu.memory_space<semaphore_mem>>
      %67 = tpu.memref_squeeze %66 : memref<1x!tpu.dma_semaphore, #tpu.memory_space<semaphore_mem>> -> memref<!tpu.dma_semaphore, #tpu.memory_space<semaphore_mem>>
      tpu.enqueue_dma source(%63 : memref<48x256xf32, #tpu.memory_space<any>>) target(%65 : memref<48x256xf32, #tpu.memory_space<vmem>>) target_semaphore(%67 : memref<!tpu.dma_semaphore, #tpu.memory_space<semaphore_mem>>)
    } else {
    }
    %8 = arith.index_cast %arg0 : i32 to index
    %9 = memref.load %arg2[%8] : memref<2xf32, #tpu.memory_space<smem>>
    %cst = arith.constant 2.000000e+00 : f32
    %10 = arith.divf %cst, %9 : f32
    %11 = arith.index_cast %arg0 : i32 to index
    %12 = memref.load %arg3[%11] : memref<2xf32, #tpu.memory_space<smem>>
    %cst_2 = arith.constant 2.000000e+00 : f32
    %13 = arith.divf %cst_2, %12 : f32
    %c32_i32 = arith.constant 32 : i32
    %14 = arith.muli %arg1, %c32_i32 : i32
    %c8_i32 = arith.constant 8 : i32
    %15 = arith.subi %14, %c8_i32 : i32
    %c0_i32_3 = arith.constant 0 : i32
    %c48_i32 = arith.constant 48 : i32
    %16 = arith.maxsi %c0_i32_3, %15 : i32
    %17 = arith.minsi %c48_i32, %16 : i32
    %18 = tpu.assume_multiple %17, 8 : i32
    %19 = tpu.iota {dimensions = array<i32: 0>} : vector<48x1xi32>
    %20 = vector.broadcast %18 : i32 to vector<48x1xi32>
    %21 = arith.addi %20, %19 : vector<48x1xi32>
    %22 = tpu.iota {dimensions = array<i32: 1>} : vector<1x256xi32>
    %c95_i32 = arith.constant 95 : i32
    %23 = vector.broadcast %c95_i32 : i32 to vector<48x1xi32>
    %24 = arith.cmpi slt, %21, %23 : vector<48x1xi32>
    %c1_i32_4 = arith.constant 1 : i32
    %25 = vector.broadcast %c1_i32_4 : i32 to vector<48x1xi32>
    %26 = arith.cmpi sge, %21, %25 : vector<48x1xi32>
    %c255_i32 = arith.constant 255 : i32
    %27 = vector.broadcast %c255_i32 : i32 to vector<1x256xi32>
    %28 = arith.cmpi slt, %22, %27 : vector<1x256xi32>
    %c1_i32_5 = arith.constant 1 : i32
    %29 = vector.broadcast %c1_i32_5 : i32 to vector<1x256xi32>
    %30 = arith.cmpi sge, %22, %29 : vector<1x256xi32>
    %c0_i32_6 = arith.constant 0 : i32
    %31 = tpu.memref_slice %arg4[%arg0, %18, %c0_i32_6] : memref<2x96x256xf32, #tpu.memory_space<any>> -> memref<1x48x256xf32, #tpu.memory_space<any>>
    %32 = tpu.memref_squeeze %31 : memref<1x48x256xf32, #tpu.memory_space<any>> -> memref<48x256xf32, #tpu.memory_space<any>>
    %c0_i32_7 = arith.constant 0 : i32
    %c0_i32_8 = arith.constant 0 : i32
    %33 = tpu.memref_slice %arg7[%0, %c0_i32_7, %c0_i32_8] : memref<2x48x256xf32, #tpu.memory_space<vmem>> -> memref<1x48x256xf32, #tpu.memory_space<vmem>>
    %34 = tpu.memref_squeeze %33 : memref<1x48x256xf32, #tpu.memory_space<vmem>> -> memref<48x256xf32, #tpu.memory_space<vmem>>
    %35 = tpu.memref_slice %arg8[%0] : memref<2x!tpu.dma_semaphore, #tpu.memory_space<semaphore_mem>> -> memref<1x!tpu.dma_semaphore, #tpu.memory_space<semaphore_mem>>
    %36 = tpu.memref_squeeze %35 : memref<1x!tpu.dma_semaphore, #tpu.memory_space<semaphore_mem>> -> memref<!tpu.dma_semaphore, #tpu.memory_space<semaphore_mem>>
    tpu.wait_dma2 semaphore(%36 : memref<!tpu.dma_semaphore, #tpu.memory_space<semaphore_mem>>) src(%32 : memref<48x256xf32, #tpu.memory_space<any>>) dst(%34 : memref<48x256xf32, #tpu.memory_space<vmem>>)
    %37 = arith.index_cast %0 : i32 to index
    %c0 = arith.constant 0 : index
    %c0_9 = arith.constant 0 : index
    %38 = vector.load %arg7[%37, %c0, %c0_9] : memref<2x48x256xf32, #tpu.memory_space<vmem>>, vector<1x48x256xf32>
    %39 = vector.shape_cast %38 : vector<1x48x256xf32> to vector<48x256xf32>
    %c0_i32_10 = arith.constant 0 : i32
    %40 = arith.cmpi eq, %arg1, %c0_i32_10 : i32
    %41 = arith.extui %40 : i1 to i32
    %c0_i32_11 = arith.constant 0 : i32
    %42 = arith.cmpi ne, %41, %c0_i32_11 : i32
    scf.if %42 {
      %55 = vector.broadcast %10 : f32 to vector<48x256xf32>
      %56 = arith.mulf %39, %55 : vector<48x256xf32>
      %cst_20 = arith.constant 2.000000e-06 : f32
      %57 = vector.broadcast %cst_20 : f32 to vector<48x256xf32>
      %58 = arith.addf %56, %57 : vector<48x256xf32>
      %59 = vector.broadcast %13 : f32 to vector<48x256xf32>
      %60 = arith.mulf %39, %59 : vector<48x256xf32>
      %cst_21 = arith.constant 2.000000e-06 : f32
      %61 = vector.broadcast %cst_21 : f32 to vector<48x256xf32>
      %62 = arith.addf %60, %61 : vector<48x256xf32>
      %c1_i32_22 = arith.constant 1 : i32
      %63 = tpu.dynamic_rotate %39 by %c1_i32_22 dim 1 : vector<48x256xf32>, i32 -> vector<48x256xf32>
      %cst_23 = arith.constant 0.000000e+00 : f32
      %64 = vector.shape_cast %30 : vector<1x256xi1> to vector<1x256xi1>
      %65 = vector.broadcast %64 : vector<1x256xi1> to vector<48x256xi1>
      %66 = vector.broadcast %cst_23 : f32 to vector<48x256xf32>
      %67 = arith.select %65, %63, %66 : vector<48x256xi1>, vector<48x256xf32>
      %c255_i32_24 = arith.constant 255 : i32
      %68 = tpu.dynamic_rotate %39 by %c255_i32_24 dim 1 : vector<48x256xf32>, i32 -> vector<48x256xf32>
      %cst_25 = arith.constant 0.000000e+00 : f32
      %69 = vector.shape_cast %28 : vector<1x256xi1> to vector<1x256xi1>
      %70 = vector.broadcast %69 : vector<1x256xi1> to vector<48x256xi1>
      %71 = vector.broadcast %cst_25 : f32 to vector<48x256xf32>
      %72 = arith.select %70, %68, %71 : vector<48x256xi1>, vector<48x256xf32>
      %73 = arith.subf %67, %72 : vector<48x256xf32>
      %74 = arith.divf %73, %58 : vector<48x256xf32>
      %c1_i32_26 = arith.constant 1 : i32
      %75 = tpu.dynamic_rotate %39 by %c1_i32_26 dim 0 : vector<48x256xf32>, i32 -> vector<48x256xf32>
      %cst_27 = arith.constant 0.000000e+00 : f32
      %76 = vector.shape_cast %26 : vector<48x1xi1> to vector<48x1xi1>
      %77 = vector.broadcast %76 : vector<48x1xi1> to vector<48x256xi1>
      %78 = vector.broadcast %cst_27 : f32 to vector<48x256xf32>
      %79 = arith.select %77, %75, %78 : vector<48x256xi1>, vector<48x256xf32>
      %c47_i32 = arith.constant 47 : i32
      %80 = tpu.dynamic_rotate %39 by %c47_i32 dim 0 : vector<48x256xf32>, i32 -> vector<48x256xf32>
      %cst_28 = arith.constant 0.000000e+00 : f32
      %81 = vector.shape_cast %24 : vector<48x1xi1> to vector<48x1xi1>
      %82 = vector.broadcast %81 : vector<48x1xi1> to vector<48x256xi1>
      %83 = vector.broadcast %cst_28 : f32 to vector<48x256xf32>
      %84 = arith.select %82, %80, %83 : vector<48x256xi1>, vector<48x256xf32>
      %85 = arith.subf %79, %84 : vector<48x256xf32>
      %86 = arith.divf %85, %62 : vector<48x256xf32>
      %87 = arith.mulf %74, %74 : vector<48x256xf32>
      %88 = arith.mulf %86, %86 : vector<48x256xf32>
      %89 = arith.addf %87, %88 : vector<48x256xf32>
      %cst_29 = arith.constant 1.000000e+00 : f32
      %90 = vector.broadcast %cst_29 : f32 to vector<48x256xf32>
      %91 = arith.addf %89, %90 : vector<48x256xf32>
      %92 = math.sqrt %91 : vector<48x256xf32>
      %cst_30 = arith.constant 1.000000e+00 : f32
      %93 = vector.broadcast %cst_30 : f32 to vector<48x256xf32>
      %94 = arith.divf %93, %92 : vector<48x256xf32>
      %95 = arith.mulf %74, %94 : vector<48x256xf32>
      %96 = arith.mulf %86, %94 : vector<48x256xf32>
      %c255_i32_31 = arith.constant 255 : i32
      %97 = tpu.dynamic_rotate %95 by %c255_i32_31 dim 1 : vector<48x256xf32>, i32 -> vector<48x256xf32>
      %cst_32 = arith.constant 0.000000e+00 : f32
      %98 = vector.shape_cast %28 : vector<1x256xi1> to vector<1x256xi1>
      %99 = vector.broadcast %98 : vector<1x256xi1> to vector<48x256xi1>
      %100 = vector.broadcast %cst_32 : f32 to vector<48x256xf32>
      %101 = arith.select %99, %97, %100 : vector<48x256xi1>, vector<48x256xf32>
      %c1_i32_33 = arith.constant 1 : i32
      %102 = tpu.dynamic_rotate %95 by %c1_i32_33 dim 1 : vector<48x256xf32>, i32 -> vector<48x256xf32>
      %cst_34 = arith.constant 0.000000e+00 : f32
      %103 = vector.shape_cast %30 : vector<1x256xi1> to vector<1x256xi1>
      %104 = vector.broadcast %103 : vector<1x256xi1> to vector<48x256xi1>
      %105 = vector.broadcast %cst_34 : f32 to vector<48x256xf32>
      %106 = arith.select %104, %102, %105 : vector<48x256xi1>, vector<48x256xf32>
      %107 = arith.subf %101, %106 : vector<48x256xf32>
      %c47_i32_35 = arith.constant 47 : i32
      %108 = tpu.dynamic_rotate %96 by %c47_i32_35 dim 0 : vector<48x256xf32>, i32 -> vector<48x256xf32>
      %cst_36 = arith.constant 0.000000e+00 : f32
      %109 = vector.shape_cast %24 : vector<48x1xi1> to vector<48x1xi1>
      %110 = vector.broadcast %109 : vector<48x1xi1> to vector<48x256xi1>
      %111 = vector.broadcast %cst_36 : f32 to vector<48x256xf32>
      %112 = arith.select %110, %108, %111 : vector<48x256xi1>, vector<48x256xf32>
      %c1_i32_37 = arith.constant 1 : i32
      %113 = tpu.dynamic_rotate %96 by %c1_i32_37 dim 0 : vector<48x256xf32>, i32 -> vector<48x256xf32>
      %cst_38 = arith.constant 0.000000e+00 : f32
      %114 = vector.shape_cast %26 : vector<48x1xi1> to vector<48x1xi1>
      %115 = vector.broadcast %114 : vector<48x1xi1> to vector<48x256xi1>
      %116 = vector.broadcast %cst_38 : f32 to vector<48x256xf32>
      %117 = arith.select %115, %113, %116 : vector<48x256xi1>, vector<48x256xf32>
      %118 = arith.subf %112, %117 : vector<48x256xf32>
      %119 = arith.addf %107, %118 : vector<48x256xf32>
      %c1_i32_39 = arith.constant 1 : i32
      %120 = tpu.dynamic_rotate %119 by %c1_i32_39 dim 0 : vector<48x256xf32>, i32 -> vector<48x256xf32>
      %cst_40 = arith.constant 0.000000e+00 : f32
      %121 = vector.shape_cast %26 : vector<48x1xi1> to vector<48x1xi1>
      %122 = vector.broadcast %121 : vector<48x1xi1> to vector<48x256xi1>
      %123 = vector.broadcast %cst_40 : f32 to vector<48x256xf32>
      %124 = arith.select %122, %120, %123 : vector<48x256xi1>, vector<48x256xf32>
      %125 = arith.addf %124, %119 : vector<48x256xf32>
      %c47_i32_41 = arith.constant 47 : i32
      %126 = tpu.dynamic_rotate %119 by %c47_i32_41 dim 0 : vector<48x256xf32>, i32 -> vector<48x256xf32>
      %cst_42 = arith.constant 0.000000e+00 : f32
      %127 = vector.shape_cast %24 : vector<48x1xi1> to vector<48x1xi1>
      %128 = vector.broadcast %127 : vector<48x1xi1> to vector<48x256xi1>
      %129 = vector.broadcast %cst_42 : f32 to vector<48x256xf32>
      %130 = arith.select %128, %126, %129 : vector<48x256xi1>, vector<48x256xf32>
      %131 = arith.addf %125, %130 : vector<48x256xf32>
      %c1_i32_43 = arith.constant 1 : i32
      %132 = tpu.dynamic_rotate %131 by %c1_i32_43 dim 1 : vector<48x256xf32>, i32 -> vector<48x256xf32>
      %cst_44 = arith.constant 0.000000e+00 : f32
      %133 = vector.shape_cast %30 : vector<1x256xi1> to vector<1x256xi1>
      %134 = vector.broadcast %133 : vector<1x256xi1> to vector<48x256xi1>
      %135 = vector.broadcast %cst_44 : f32 to vector<48x256xf32>
      %136 = arith.select %134, %132, %135 : vector<48x256xi1>, vector<48x256xf32>
      %137 = arith.addf %136, %131 : vector<48x256xf32>
      %c255_i32_45 = arith.constant 255 : i32
      %138 = tpu.dynamic_rotate %131 by %c255_i32_45 dim 1 : vector<48x256xf32>, i32 -> vector<48x256xf32>
      %cst_46 = arith.constant 0.000000e+00 : f32
      %139 = vector.shape_cast %28 : vector<1x256xi1> to vector<1x256xi1>
      %140 = vector.broadcast %139 : vector<1x256xi1> to vector<48x256xi1>
      %141 = vector.broadcast %cst_46 : f32 to vector<48x256xf32>
      %142 = arith.select %140, %138, %141 : vector<48x256xi1>, vector<48x256xf32>
      %143 = arith.addf %137, %142 : vector<48x256xf32>
      %144 = math.absf %143 : vector<48x256xf32>
      %cst_47 = arith.constant 0.027777778 : f32
      %145 = vector.broadcast %cst_47 : f32 to vector<48x256xf32>
      %146 = arith.mulf %144, %145 : vector<48x256xf32>
      %147 = vector.extract_strided_slice %95 {offsets = [0, 0], sizes = [32, 256], strides = [1, 1]} : vector<48x256xf32> to vector<32x256xf32>
      %c0_48 = arith.constant 0 : index
      %c0_49 = arith.constant 0 : index
      %c0_50 = arith.constant 0 : index
      %c0_51 = arith.constant 0 : index
      %148 = vector.load %arg5[%c0_48, %c0_49, %c0_50, %c0_51] : memref<1x3x32x256xf32, #tpu.memory_space<vmem>>, vector<1x1x32x256xf32>
      %149 = vector.shape_cast %148 : vector<1x1x32x256xf32> to vector<32x256xf32>
      %150 = vector.shape_cast %147 : vector<32x256xf32> to vector<1x1x32x256xf32>
      tpu.vector_store %arg5[%c0_48, %c0_49, %c0_50, %c0_51], %150 {strides = array<i32>} : memref<1x3x32x256xf32, #tpu.memory_space<vmem>>, vector<1x1x32x256xf32>,
      %151 = vector.extract_strided_slice %96 {offsets = [0, 0], sizes = [32, 256], strides = [1, 1]} : vector<48x256xf32> to vector<32x256xf32>
      %c0_52 = arith.constant 0 : index
      %c1 = arith.constant 1 : index
      %c0_53 = arith.constant 0 : index
      %c0_54 = arith.constant 0 : index
      %152 = vector.load %arg5[%c0_52, %c1, %c0_53, %c0_54] : memref<1x3x32x256xf32, #tpu.memory_space<vmem>>, vector<1x1x32x256xf32>
      %153 = vector.shape_cast %152 : vector<1x1x32x256xf32> to vector<32x256xf32>
      %154 = vector.shape_cast %151 : vector<32x256xf32> to vector<1x1x32x256xf32>
      tpu.vector_store %arg5[%c0_52, %c1, %c0_53, %c0_54], %154 {strides = array<i32>} : memref<1x3x32x256xf32, #tpu.memory_space<vmem>>, vector<1x1x32x256xf32>,
      %155 = vector.extract_strided_slice %94 {offsets = [0, 0], sizes = [32, 256], strides = [1, 1]} : vector<48x256xf32> to vector<32x256xf32>
      %c0_55 = arith.constant 0 : index
      %c2 = arith.constant 2 : index
      %c0_56 = arith.constant 0 : index
      %c0_57 = arith.constant 0 : index
      %156 = vector.load %arg5[%c0_55, %c2, %c0_56, %c0_57] : memref<1x3x32x256xf32, #tpu.memory_space<vmem>>, vector<1x1x32x256xf32>
      %157 = vector.shape_cast %156 : vector<1x1x32x256xf32> to vector<32x256xf32>
      %158 = vector.shape_cast %155 : vector<32x256xf32> to vector<1x1x32x256xf32>
      tpu.vector_store %arg5[%c0_55, %c2, %c0_56, %c0_57], %158 {strides = array<i32>} : memref<1x3x32x256xf32, #tpu.memory_space<vmem>>, vector<1x1x32x256xf32>,
      %159 = vector.extract_strided_slice %146 {offsets = [0, 0], sizes = [32, 256], strides = [1, 1]} : vector<48x256xf32> to vector<32x256xf32>
      %c0_58 = arith.constant 0 : index
      %c0_59 = arith.constant 0 : index
      %c0_60 = arith.constant 0 : index
      %160 = vector.load %arg6[%c0_58, %c0_59, %c0_60] : memref<1x32x256xf32, #tpu.memory_space<vmem>>, vector<1x32x256xf32>
      %161 = vector.shape_cast %160 : vector<1x32x256xf32> to vector<32x256xf32>
      %162 = vector.shape_cast %159 : vector<32x256xf32> to vector<1x32x256xf32>
      tpu.vector_store %arg6[%c0_58, %c0_59, %c0_60], %162 {strides = array<i32>} : memref<1x32x256xf32, #tpu.memory_space<vmem>>, vector<1x32x256xf32>,
    } else {
    }
    %c0_i32_12 = arith.constant 0 : i32
    %43 = arith.cmpi sgt, %arg1, %c0_i32_12 : i32
    %c1_i32_13 = arith.constant 1 : i32
    %44 = arith.addi %arg1, %c1_i32_13 : i32
    %c3_i32_14 = arith.constant 3 : i32
    %45 = arith.cmpi slt, %44, %c3_i32_14 : i32
    %46 = arith.andi %43, %45 : i1
    %47 = arith.extui %46 : i1 to i32
    %c0_i32_15 = arith.constant 0 : i32
    %48 = arith.cmpi ne, %47, %c0_i32_15 : i32
    scf.if %48 {
      %55 = vector.broadcast %10 : f32 to vector<48x256xf32>
      %56 = arith.mulf %39, %55 : vector<48x256xf32>
      %cst_20 = arith.constant 2.000000e-06 : f32
      %57 = vector.broadcast %cst_20 : f32 to vector<48x256xf32>
      %58 = arith.addf %56, %57 : vector<48x256xf32>
      %59 = vector.broadcast %13 : f32 to vector<48x256xf32>
      %60 = arith.mulf %39, %59 : vector<48x256xf32>
      %cst_21 = arith.constant 2.000000e-06 : f32
      %61 = vector.broadcast %cst_21 : f32 to vector<48x256xf32>
      %62 = arith.addf %60, %61 : vector<48x256xf32>
      %c1_i32_22 = arith.constant 1 : i32
      %63 = tpu.dynamic_rotate %39 by %c1_i32_22 dim 1 : vector<48x256xf32>, i32 -> vector<48x256xf32>
      %cst_23 = arith.constant 0.000000e+00 : f32
      %64 = vector.shape_cast %30 : vector<1x256xi1> to vector<1x256xi1>
      %65 = vector.broadcast %64 : vector<1x256xi1> to vector<48x256xi1>
      %66 = vector.broadcast %cst_23 : f32 to vector<48x256xf32>
      %67 = arith.select %65, %63, %66 : vector<48x256xi1>, vector<48x256xf32>
      %c255_i32_24 = arith.constant 255 : i32
      %68 = tpu.dynamic_rotate %39 by %c255_i32_24 dim 1 : vector<48x256xf32>, i32 -> vector<48x256xf32>
      %cst_25 = arith.constant 0.000000e+00 : f32
      %69 = vector.shape_cast %28 : vector<1x256xi1> to vector<1x256xi1>
      %70 = vector.broadcast %69 : vector<1x256xi1> to vector<48x256xi1>
      %71 = vector.broadcast %cst_25 : f32 to vector<48x256xf32>
      %72 = arith.select %70, %68, %71 : vector<48x256xi1>, vector<48x256xf32>
      %73 = arith.subf %67, %72 : vector<48x256xf32>
      %74 = arith.divf %73, %58 : vector<48x256xf32>
      %c1_i32_26 = arith.constant 1 : i32
      %75 = tpu.dynamic_rotate %39 by %c1_i32_26 dim 0 : vector<48x256xf32>, i32 -> vector<48x256xf32>
      %c47_i32 = arith.constant 47 : i32
      %76 = tpu.dynamic_rotate %39 by %c47_i32 dim 0 : vector<48x256xf32>, i32 -> vector<48x256xf32>
      %77 = arith.subf %75, %76 : vector<48x256xf32>
      %78 = arith.divf %77, %62 : vector<48x256xf32>
      %79 = arith.mulf %74, %74 : vector<48x256xf32>
      %80 = arith.mulf %78, %78 : vector<48x256xf32>
      %81 = arith.addf %79, %80 : vector<48x256xf32>
      %cst_27 = arith.constant 1.000000e+00 : f32
      %82 = vector.broadcast %cst_27 : f32 to vector<48x256xf32>
      %83 = arith.addf %81, %82 : vector<48x256xf32>
      %84 = math.sqrt %83 : vector<48x256xf32>
      %cst_28 = arith.constant 1.000000e+00 : f32
      %85 = vector.broadcast %cst_28 : f32 to vector<48x256xf32>
      %86 = arith.divf %85, %84 : vector<48x256xf32>
      %87 = arith.mulf %74, %86 : vector<48x256xf32>
      %88 = arith.mulf %78, %86 : vector<48x256xf32>
      %c255_i32_29 = arith.constant 255 : i32
      %89 = tpu.dynamic_rotate %87 by %c255_i32_29 dim 1 : vector<48x256xf32>, i32 -> vector<48x256xf32>
      %cst_30 = arith.constant 0.000000e+00 : f32
      %90 = vector.shape_cast %28 : vector<1x256xi1> to vector<1x256xi1>
      %91 = vector.broadcast %90 : vector<1x256xi1> to vector<48x256xi1>
      %92 = vector.broadcast %cst_30 : f32 to vector<48x256xf32>
      %93 = arith.select %91, %89, %92 : vector<48x256xi1>, vector<48x256xf32>
      %c1_i32_31 = arith.constant 1 : i32
      %94 = tpu.dynamic_rotate %87 by %c1_i32_31 dim 1 : vector<48x256xf32>, i32 -> vector<48x256xf32>
      %cst_32 = arith.constant 0.000000e+00 : f32
      %95 = vector.shape_cast %30 : vector<1x256xi1> to vector<1x256xi1>
      %96 = vector.broadcast %95 : vector<1x256xi1> to vector<48x256xi1>
      %97 = vector.broadcast %cst_32 : f32 to vector<48x256xf32>
      %98 = arith.select %96, %94, %97 : vector<48x256xi1>, vector<48x256xf32>
      %99 = arith.subf %93, %98 : vector<48x256xf32>
      %c47_i32_33 = arith.constant 47 : i32
      %100 = tpu.dynamic_rotate %88 by %c47_i32_33 dim 0 : vector<48x256xf32>, i32 -> vector<48x256xf32>
      %c1_i32_34 = arith.constant 1 : i32
      %101 = tpu.dynamic_rotate %88 by %c1_i32_34 dim 0 : vector<48x256xf32>, i32 -> vector<48x256xf32>
      %102 = arith.subf %100, %101 : vector<48x256xf32>
      %103 = arith.addf %99, %102 : vector<48x256xf32>
      %c1_i32_35 = arith.constant 1 : i32
      %104 = tpu.dynamic_rotate %103 by %c1_i32_35 dim 0 : vector<48x256xf32>, i32 -> vector<48x256xf32>
      %105 = arith.addf %104, %103 : vector<48x256xf32>
      %c47_i32_36 = arith.constant 47 : i32
      %106 = tpu.dynamic_rotate %103 by %c47_i32_36 dim 0 : vector<48x256xf32>, i32 -> vector<48x256xf32>
      %107 = arith.addf %105, %106 : vector<48x256xf32>
      %c1_i32_37 = arith.constant 1 : i32
      %108 = tpu.dynamic_rotate %107 by %c1_i32_37 dim 1 : vector<48x256xf32>, i32 -> vector<48x256xf32>
      %cst_38 = arith.constant 0.000000e+00 : f32
      %109 = vector.shape_cast %30 : vector<1x256xi1> to vector<1x256xi1>
      %110 = vector.broadcast %109 : vector<1x256xi1> to vector<48x256xi1>
      %111 = vector.broadcast %cst_38 : f32 to vector<48x256xf32>
      %112 = arith.select %110, %108, %111 : vector<48x256xi1>, vector<48x256xf32>
      %113 = arith.addf %112, %107 : vector<48x256xf32>
      %c255_i32_39 = arith.constant 255 : i32
      %114 = tpu.dynamic_rotate %107 by %c255_i32_39 dim 1 : vector<48x256xf32>, i32 -> vector<48x256xf32>
      %cst_40 = arith.constant 0.000000e+00 : f32
      %115 = vector.shape_cast %28 : vector<1x256xi1> to vector<1x256xi1>
      %116 = vector.broadcast %115 : vector<1x256xi1> to vector<48x256xi1>
      %117 = vector.broadcast %cst_40 : f32 to vector<48x256xf32>
      %118 = arith.select %116, %114, %117 : vector<48x256xi1>, vector<48x256xf32>
      %119 = arith.addf %113, %118 : vector<48x256xf32>
      %120 = math.absf %119 : vector<48x256xf32>
      %cst_41 = arith.constant 0.027777778 : f32
      %121 = vector.broadcast %cst_41 : f32 to vector<48x256xf32>
      %122 = arith.mulf %120, %121 : vector<48x256xf32>
      %123 = vector.extract_strided_slice %87 {offsets = [8, 0], sizes = [32, 256], strides = [1, 1]} : vector<48x256xf32> to vector<32x256xf32>
      %c0_42 = arith.constant 0 : index
      %c0_43 = arith.constant 0 : index
      %c0_44 = arith.constant 0 : index
      %c0_45 = arith.constant 0 : index
      %124 = vector.load %arg5[%c0_42, %c0_43, %c0_44, %c0_45] : memref<1x3x32x256xf32, #tpu.memory_space<vmem>>, vector<1x1x32x256xf32>
      %125 = vector.shape_cast %124 : vector<1x1x32x256xf32> to vector<32x256xf32>
      %126 = vector.shape_cast %123 : vector<32x256xf32> to vector<1x1x32x256xf32>
      tpu.vector_store %arg5[%c0_42, %c0_43, %c0_44, %c0_45], %126 {strides = array<i32>} : memref<1x3x32x256xf32, #tpu.memory_space<vmem>>, vector<1x1x32x256xf32>,
      %127 = vector.extract_strided_slice %88 {offsets = [8, 0], sizes = [32, 256], strides = [1, 1]} : vector<48x256xf32> to vector<32x256xf32>
      %c0_46 = arith.constant 0 : index
      %c1 = arith.constant 1 : index
      %c0_47 = arith.constant 0 : index
      %c0_48 = arith.constant 0 : index
      %128 = vector.load %arg5[%c0_46, %c1, %c0_47, %c0_48] : memref<1x3x32x256xf32, #tpu.memory_space<vmem>>, vector<1x1x32x256xf32>
      %129 = vector.shape_cast %128 : vector<1x1x32x256xf32> to vector<32x256xf32>
      %130 = vector.shape_cast %127 : vector<32x256xf32> to vector<1x1x32x256xf32>
      tpu.vector_store %arg5[%c0_46, %c1, %c0_47, %c0_48], %130 {strides = array<i32>} : memref<1x3x32x256xf32, #tpu.memory_space<vmem>>, vector<1x1x32x256xf32>,
      %131 = vector.extract_strided_slice %86 {offsets = [8, 0], sizes = [32, 256], strides = [1, 1]} : vector<48x256xf32> to vector<32x256xf32>
      %c0_49 = arith.constant 0 : index
      %c2 = arith.constant 2 : index
      %c0_50 = arith.constant 0 : index
      %c0_51 = arith.constant 0 : index
      %132 = vector.load %arg5[%c0_49, %c2, %c0_50, %c0_51] : memref<1x3x32x256xf32, #tpu.memory_space<vmem>>, vector<1x1x32x256xf32>
      %133 = vector.shape_cast %132 : vector<1x1x32x256xf32> to vector<32x256xf32>
      %134 = vector.shape_cast %131 : vector<32x256xf32> to vector<1x1x32x256xf32>
      tpu.vector_store %arg5[%c0_49, %c2, %c0_50, %c0_51], %134 {strides = array<i32>} : memref<1x3x32x256xf32, #tpu.memory_space<vmem>>, vector<1x1x32x256xf32>,
      %135 = vector.extract_strided_slice %122 {offsets = [8, 0], sizes = [32, 256], strides = [1, 1]} : vector<48x256xf32> to vector<32x256xf32>
      %c0_52 = arith.constant 0 : index
      %c0_53 = arith.constant 0 : index
      %c0_54 = arith.constant 0 : index
      %136 = vector.load %arg6[%c0_52, %c0_53, %c0_54] : memref<1x32x256xf32, #tpu.memory_space<vmem>>, vector<1x32x256xf32>
      %137 = vector.shape_cast %136 : vector<1x32x256xf32> to vector<32x256xf32>
      %138 = vector.shape_cast %135 : vector<32x256xf32> to vector<1x32x256xf32>
      tpu.vector_store %arg6[%c0_52, %c0_53, %c0_54], %138 {strides = array<i32>} : memref<1x32x256xf32, #tpu.memory_space<vmem>>, vector<1x32x256xf32>,
    } else {
    }
    %c0_i32_16 = arith.constant 0 : i32
    %49 = arith.cmpi sgt, %arg1, %c0_i32_16 : i32
    %c1_i32_17 = arith.constant 1 : i32
    %50 = arith.addi %arg1, %c1_i32_17 : i32
    %c3_i32_18 = arith.constant 3 : i32
    %51 = arith.cmpi eq, %50, %c3_i32_18 : i32
    %52 = arith.andi %49, %51 : i1
    %53 = arith.extui %52 : i1 to i32
    %c0_i32_19 = arith.constant 0 : i32
    %54 = arith.cmpi ne, %53, %c0_i32_19 : i32
    scf.if %54 {
      %55 = vector.broadcast %10 : f32 to vector<48x256xf32>
      %56 = arith.mulf %39, %55 : vector<48x256xf32>
      %cst_20 = arith.constant 2.000000e-06 : f32
      %57 = vector.broadcast %cst_20 : f32 to vector<48x256xf32>
      %58 = arith.addf %56, %57 : vector<48x256xf32>
      %59 = vector.broadcast %13 : f32 to vector<48x256xf32>
      %60 = arith.mulf %39, %59 : vector<48x256xf32>
      %cst_21 = arith.constant 2.000000e-06 : f32
      %61 = vector.broadcast %cst_21 : f32 to vector<48x256xf32>
      %62 = arith.addf %60, %61 : vector<48x256xf32>
      %c1_i32_22 = arith.constant 1 : i32
      %63 = tpu.dynamic_rotate %39 by %c1_i32_22 dim 1 : vector<48x256xf32>, i32 -> vector<48x256xf32>
      %cst_23 = arith.constant 0.000000e+00 : f32
      %64 = vector.shape_cast %30 : vector<1x256xi1> to vector<1x256xi1>
      %65 = vector.broadcast %64 : vector<1x256xi1> to vector<48x256xi1>
      %66 = vector.broadcast %cst_23 : f32 to vector<48x256xf32>
      %67 = arith.select %65, %63, %66 : vector<48x256xi1>, vector<48x256xf32>
      %c255_i32_24 = arith.constant 255 : i32
      %68 = tpu.dynamic_rotate %39 by %c255_i32_24 dim 1 : vector<48x256xf32>, i32 -> vector<48x256xf32>
      %cst_25 = arith.constant 0.000000e+00 : f32
      %69 = vector.shape_cast %28 : vector<1x256xi1> to vector<1x256xi1>
      %70 = vector.broadcast %69 : vector<1x256xi1> to vector<48x256xi1>
      %71 = vector.broadcast %cst_25 : f32 to vector<48x256xf32>
      %72 = arith.select %70, %68, %71 : vector<48x256xi1>, vector<48x256xf32>
      %73 = arith.subf %67, %72 : vector<48x256xf32>
      %74 = arith.divf %73, %58 : vector<48x256xf32>
      %c1_i32_26 = arith.constant 1 : i32
      %75 = tpu.dynamic_rotate %39 by %c1_i32_26 dim 0 : vector<48x256xf32>, i32 -> vector<48x256xf32>
      %cst_27 = arith.constant 0.000000e+00 : f32
      %76 = vector.shape_cast %26 : vector<48x1xi1> to vector<48x1xi1>
      %77 = vector.broadcast %76 : vector<48x1xi1> to vector<48x256xi1>
      %78 = vector.broadcast %cst_27 : f32 to vector<48x256xf32>
      %79 = arith.select %77, %75, %78 : vector<48x256xi1>, vector<48x256xf32>
      %c47_i32 = arith.constant 47 : i32
      %80 = tpu.dynamic_rotate %39 by %c47_i32 dim 0 : vector<48x256xf32>, i32 -> vector<48x256xf32>
      %cst_28 = arith.constant 0.000000e+00 : f32
      %81 = vector.shape_cast %24 : vector<48x1xi1> to vector<48x1xi1>
      %82 = vector.broadcast %81 : vector<48x1xi1> to vector<48x256xi1>
      %83 = vector.broadcast %cst_28 : f32 to vector<48x256xf32>
      %84 = arith.select %82, %80, %83 : vector<48x256xi1>, vector<48x256xf32>
      %85 = arith.subf %79, %84 : vector<48x256xf32>
      %86 = arith.divf %85, %62 : vector<48x256xf32>
      %87 = arith.mulf %74, %74 : vector<48x256xf32>
      %88 = arith.mulf %86, %86 : vector<48x256xf32>
      %89 = arith.addf %87, %88 : vector<48x256xf32>
      %cst_29 = arith.constant 1.000000e+00 : f32
      %90 = vector.broadcast %cst_29 : f32 to vector<48x256xf32>
      %91 = arith.addf %89, %90 : vector<48x256xf32>
      %92 = math.sqrt %91 : vector<48x256xf32>
      %cst_30 = arith.constant 1.000000e+00 : f32
      %93 = vector.broadcast %cst_30 : f32 to vector<48x256xf32>
      %94 = arith.divf %93, %92 : vector<48x256xf32>
      %95 = arith.mulf %74, %94 : vector<48x256xf32>
      %96 = arith.mulf %86, %94 : vector<48x256xf32>
      %c255_i32_31 = arith.constant 255 : i32
      %97 = tpu.dynamic_rotate %95 by %c255_i32_31 dim 1 : vector<48x256xf32>, i32 -> vector<48x256xf32>
      %cst_32 = arith.constant 0.000000e+00 : f32
      %98 = vector.shape_cast %28 : vector<1x256xi1> to vector<1x256xi1>
      %99 = vector.broadcast %98 : vector<1x256xi1> to vector<48x256xi1>
      %100 = vector.broadcast %cst_32 : f32 to vector<48x256xf32>
      %101 = arith.select %99, %97, %100 : vector<48x256xi1>, vector<48x256xf32>
      %c1_i32_33 = arith.constant 1 : i32
      %102 = tpu.dynamic_rotate %95 by %c1_i32_33 dim 1 : vector<48x256xf32>, i32 -> vector<48x256xf32>
      %cst_34 = arith.constant 0.000000e+00 : f32
      %103 = vector.shape_cast %30 : vector<1x256xi1> to vector<1x256xi1>
      %104 = vector.broadcast %103 : vector<1x256xi1> to vector<48x256xi1>
      %105 = vector.broadcast %cst_34 : f32 to vector<48x256xf32>
      %106 = arith.select %104, %102, %105 : vector<48x256xi1>, vector<48x256xf32>
      %107 = arith.subf %101, %106 : vector<48x256xf32>
      %c47_i32_35 = arith.constant 47 : i32
      %108 = tpu.dynamic_rotate %96 by %c47_i32_35 dim 0 : vector<48x256xf32>, i32 -> vector<48x256xf32>
      %cst_36 = arith.constant 0.000000e+00 : f32
      %109 = vector.shape_cast %24 : vector<48x1xi1> to vector<48x1xi1>
      %110 = vector.broadcast %109 : vector<48x1xi1> to vector<48x256xi1>
      %111 = vector.broadcast %cst_36 : f32 to vector<48x256xf32>
      %112 = arith.select %110, %108, %111 : vector<48x256xi1>, vector<48x256xf32>
      %c1_i32_37 = arith.constant 1 : i32
      %113 = tpu.dynamic_rotate %96 by %c1_i32_37 dim 0 : vector<48x256xf32>, i32 -> vector<48x256xf32>
      %cst_38 = arith.constant 0.000000e+00 : f32
      %114 = vector.shape_cast %26 : vector<48x1xi1> to vector<48x1xi1>
      %115 = vector.broadcast %114 : vector<48x1xi1> to vector<48x256xi1>
      %116 = vector.broadcast %cst_38 : f32 to vector<48x256xf32>
      %117 = arith.select %115, %113, %116 : vector<48x256xi1>, vector<48x256xf32>
      %118 = arith.subf %112, %117 : vector<48x256xf32>
      %119 = arith.addf %107, %118 : vector<48x256xf32>
      %c1_i32_39 = arith.constant 1 : i32
      %120 = tpu.dynamic_rotate %119 by %c1_i32_39 dim 0 : vector<48x256xf32>, i32 -> vector<48x256xf32>
      %cst_40 = arith.constant 0.000000e+00 : f32
      %121 = vector.shape_cast %26 : vector<48x1xi1> to vector<48x1xi1>
      %122 = vector.broadcast %121 : vector<48x1xi1> to vector<48x256xi1>
      %123 = vector.broadcast %cst_40 : f32 to vector<48x256xf32>
      %124 = arith.select %122, %120, %123 : vector<48x256xi1>, vector<48x256xf32>
      %125 = arith.addf %124, %119 : vector<48x256xf32>
      %c47_i32_41 = arith.constant 47 : i32
      %126 = tpu.dynamic_rotate %119 by %c47_i32_41 dim 0 : vector<48x256xf32>, i32 -> vector<48x256xf32>
      %cst_42 = arith.constant 0.000000e+00 : f32
      %127 = vector.shape_cast %24 : vector<48x1xi1> to vector<48x1xi1>
      %128 = vector.broadcast %127 : vector<48x1xi1> to vector<48x256xi1>
      %129 = vector.broadcast %cst_42 : f32 to vector<48x256xf32>
      %130 = arith.select %128, %126, %129 : vector<48x256xi1>, vector<48x256xf32>
      %131 = arith.addf %125, %130 : vector<48x256xf32>
      %c1_i32_43 = arith.constant 1 : i32
      %132 = tpu.dynamic_rotate %131 by %c1_i32_43 dim 1 : vector<48x256xf32>, i32 -> vector<48x256xf32>
      %cst_44 = arith.constant 0.000000e+00 : f32
      %133 = vector.shape_cast %30 : vector<1x256xi1> to vector<1x256xi1>
      %134 = vector.broadcast %133 : vector<1x256xi1> to vector<48x256xi1>
      %135 = vector.broadcast %cst_44 : f32 to vector<48x256xf32>
      %136 = arith.select %134, %132, %135 : vector<48x256xi1>, vector<48x256xf32>
      %137 = arith.addf %136, %131 : vector<48x256xf32>
      %c255_i32_45 = arith.constant 255 : i32
      %138 = tpu.dynamic_rotate %131 by %c255_i32_45 dim 1 : vector<48x256xf32>, i32 -> vector<48x256xf32>
      %cst_46 = arith.constant 0.000000e+00 : f32
      %139 = vector.shape_cast %28 : vector<1x256xi1> to vector<1x256xi1>
      %140 = vector.broadcast %139 : vector<1x256xi1> to vector<48x256xi1>
      %141 = vector.broadcast %cst_46 : f32 to vector<48x256xf32>
      %142 = arith.select %140, %138, %141 : vector<48x256xi1>, vector<48x256xf32>
      %143 = arith.addf %137, %142 : vector<48x256xf32>
      %144 = math.absf %143 : vector<48x256xf32>
      %cst_47 = arith.constant 0.027777778 : f32
      %145 = vector.broadcast %cst_47 : f32 to vector<48x256xf32>
      %146 = arith.mulf %144, %145 : vector<48x256xf32>
      %147 = vector.extract_strided_slice %95 {offsets = [16, 0], sizes = [32, 256], strides = [1, 1]} : vector<48x256xf32> to vector<32x256xf32>
      %c0_48 = arith.constant 0 : index
      %c0_49 = arith.constant 0 : index
      %c0_50 = arith.constant 0 : index
      %c0_51 = arith.constant 0 : index
      %148 = vector.load %arg5[%c0_48, %c0_49, %c0_50, %c0_51] : memref<1x3x32x256xf32, #tpu.memory_space<vmem>>, vector<1x1x32x256xf32>
      %149 = vector.shape_cast %148 : vector<1x1x32x256xf32> to vector<32x256xf32>
      %150 = vector.shape_cast %147 : vector<32x256xf32> to vector<1x1x32x256xf32>
      tpu.vector_store %arg5[%c0_48, %c0_49, %c0_50, %c0_51], %150 {strides = array<i32>} : memref<1x3x32x256xf32, #tpu.memory_space<vmem>>, vector<1x1x32x256xf32>,
      %151 = vector.extract_strided_slice %96 {offsets = [16, 0], sizes = [32, 256], strides = [1, 1]} : vector<48x256xf32> to vector<32x256xf32>
      %c0_52 = arith.constant 0 : index
      %c1 = arith.constant 1 : index
      %c0_53 = arith.constant 0 : index
      %c0_54 = arith.constant 0 : index
      %152 = vector.load %arg5[%c0_52, %c1, %c0_53, %c0_54] : memref<1x3x32x256xf32, #tpu.memory_space<vmem>>, vector<1x1x32x256xf32>
      %153 = vector.shape_cast %152 : vector<1x1x32x256xf32> to vector<32x256xf32>
      %154 = vector.shape_cast %151 : vector<32x256xf32> to vector<1x1x32x256xf32>
      tpu.vector_store %arg5[%c0_52, %c1, %c0_53, %c0_54], %154 {strides = array<i32>} : memref<1x3x32x256xf32, #tpu.memory_space<vmem>>, vector<1x1x32x256xf32>,
      %155 = vector.extract_strided_slice %94 {offsets = [16, 0], sizes = [32, 256], strides = [1, 1]} : vector<48x256xf32> to vector<32x256xf32>
      %c0_55 = arith.constant 0 : index
      %c2 = arith.constant 2 : index
      %c0_56 = arith.constant 0 : index
      %c0_57 = arith.constant 0 : index
      %156 = vector.load %arg5[%c0_55, %c2, %c0_56, %c0_57] : memref<1x3x32x256xf32, #tpu.memory_space<vmem>>, vector<1x1x32x256xf32>
      %157 = vector.shape_cast %156 : vector<1x1x32x256xf32> to vector<32x256xf32>
      %158 = vector.shape_cast %155 : vector<32x256xf32> to vector<1x1x32x256xf32>
      tpu.vector_store %arg5[%c0_55, %c2, %c0_56, %c0_57], %158 {strides = array<i32>} : memref<1x3x32x256xf32, #tpu.memory_space<vmem>>, vector<1x1x32x256xf32>,
      %159 = vector.extract_strided_slice %146 {offsets = [16, 0], sizes = [32, 256], strides = [1, 1]} : vector<48x256xf32> to vector<32x256xf32>
      %c0_58 = arith.constant 0 : index
      %c0_59 = arith.constant 0 : index
      %c0_60 = arith.constant 0 : index
      %160 = vector.load %arg6[%c0_58, %c0_59, %c0_60] : memref<1x32x256xf32, #tpu.memory_space<vmem>>, vector<1x32x256xf32>
      %161 = vector.shape_cast %160 : vector<1x32x256xf32> to vector<32x256xf32>
      %162 = vector.shape_cast %159 : vector<32x256xf32> to vector<1x32x256xf32>
      tpu.vector_store %arg6[%c0_58, %c0_59, %c0_60], %162 {strides = array<i32>} : memref<1x32x256xf32, #tpu.memory_space<vmem>>, vector<1x32x256xf32>,
    } else {
    }
    return
  }
  func.func @transform_0(%arg0: i32, %arg1: i32) -> i32 {
    %c0_i32 = arith.constant 0 : i32
    %c0_i32_0 = arith.constant 0 : i32
    return %c0_i32 : i32
  }
  func.func @transform_1(%arg0: i32, %arg1: i32) -> i32 {
    %c0_i32 = arith.constant 0 : i32
    %c0_i32_0 = arith.constant 0 : i32
    return %c0_i32 : i32
  }
  func.func @transform_3(%arg0: i32, %arg1: i32) -> (i32, i32, i32, i32) {
    %c0_i32 = arith.constant 0 : i32
    %c0_i32_0 = arith.constant 0 : i32
    %c0_i32_1 = arith.constant 0 : i32
    return %arg0, %c0_i32, %arg1, %c0_i32_0 : i32, i32, i32, i32
  }
  func.func @transform_4(%arg0: i32, %arg1: i32) -> (i32, i32, i32) {
    %c0_i32 = arith.constant 0 : i32
    %c0_i32_0 = arith.constant 0 : i32
    return %arg0, %arg1, %c0_i32 : i32, i32, i32
  }
}

</mosaic_0001>

<llo_original>
// kernel: tpu_custom_call.1
$region0: #{tpu_custom_call.1}
  #allocation0 [shape = 'u32[]', space=smem, size = 0x4, offset = 0x4, fixed_abs, tag = 'smem constant byte address 0x4 - core index']
  #allocation1 [shape = 'u32[72,128]{1,0:T(1,128)}', space=vmem, size = 0x9000, scoped, tag = 'internal scratch']
  #allocation2 [shape = 'f32[2,48,256]{2,1,0:T(8,128)}', space=vmem, size = 0x18000, scoped, tag = 'scratch operand']
  #allocation3 [shape = 's32[2]{0}', space=sflag, size = 0x8, scoped, tag = 'scratch operand']
  #allocation12 [shape = 's32[]', space=sflag, size = 0x4, offset = 0, fixed_abs, tag = 'sflag constant byte address 0x0 - dummy sync flag']
  #allocation13 [shape = 's32[]', space=sflag, size = 0x4, offset = 0, fixed_abs, tag = 'sflag constant byte address 0x0 - dummy sync flag']
  #allocation14 [shape = 'u32[]', space=smem, size = 0x4, offset = 0x44, fixed_abs, tag = 'smem constant byte address 0x44 - assertion arg 0']
  #allocation15 [shape = 'u32[]', space=smem, size = 0x4, offset = 0x48, fixed_abs, tag = 'smem constant byte address 0x48 - assertion arg 1']
  #allocation16 [shape = 's32[]', space=sflag, size = 0x4, offset = 0, fixed_abs, tag = 'sflag constant byte address 0x0 - dummy sync flag']
  #allocation17 [shape = 's32[]', space=sflag, size = 0x4, offset = 0, fixed_abs, tag = 'sflag constant byte address 0x0 - dummy sync flag']
  #allocation18 [shape = 's32[]', space=sflag, size = 0x4, offset = 0, fixed_abs, tag = 'sflag constant byte address 0x0 - dummy sync flag']
  %s0 = inlined_call_operand.hbm [shape: f32[2], index: 0, kind: input, shape index: {}]
  %s1 = inlined_call_operand.hbm [shape: f32[2], index: 1, kind: input, shape index: {}]
  %s2 = inlined_call_operand.hbm [shape: f32[2,96,256], index: 2, kind: input, shape index: {}]
  %s3 = inlined_call_operand.hbm [shape: f32[2,3,96,256], index: 3, kind: output, shape index: {0}]
  %s4 = inlined_call_operand.hbm [shape: f32[2,96,256], index: 4, kind: output, shape index: {1}]
  %5 = xla_tuple %s3, %s4
  %s6 = sld [smem:[#allocation0]]
  $region85: #{tpu_custom_call.1} parent=0
    _
  %s8 = ssub.s32 1, %s6
  %s9 = scalar_select 0, %s8, %s6
  $region1: #{tpu_custom_call.1} parent=0
    #allocation4 [shape = 'u8[512]{0}', space=smem, size = 0x200, scoped, tag = 'input window, operand 0, single buffered']
    #allocation5 [shape = 's32[2]{0}', space=sflag, size = 0x8, scoped, tag = 'scoped memory for tpu_custom_call.1']
    #allocation6 [shape = 's32[2]{0}', space=sflag, size = 0x8, scoped, tag = 'scoped memory for tpu_custom_call.1']
    #allocation7 [shape = 'u8[512]{0}', space=smem, size = 0x200, scoped, tag = 'input window, operand 1, single buffered']
    #allocation8 [shape = 's32[1]{0}', space=sflag, size = 0x4, scoped, tag = 'scoped memory for tpu_custom_call.1']
    #allocation9 [shape = 'u8[196608]{0}', space=vmem, size = 0x30000, scoped, tag = 'output window, operand 0']
    #allocation10 [shape = 'u8[65536]{0}', space=vmem, size = 0x10000, scoped, tag = 'output window, operand 1']
    #allocation11 [shape = 's32[2]{0}', space=sflag, size = 0x8, scoped, tag = 'scoped memory for tpu_custom_call.1']
    %10 = vsyncpa [#allocation6], 0
    %11 = vsyncpa [#allocation8], 0
    %12 = vsyncpa [#allocation5], 0
    %s13 = scalar_lea.sflag [#allocation5], 1
    %14 = vsyncpa %s13, 0
    %15 = vsyncpa [#allocation11], 0
    %s16 = scalar_lea.sflag [#allocation11], 1
    %17 = vsyncpa %s16, 0
    loop: start=0, step=1, limit=8
    $region2: #{tpu_custom_call.1} parent=1 // loop_pre_header
      _
    $region3: #{tpu_custom_call.1} parent=1 // loop_header
      %s19 = sphi 0, %s23
      %p20 = scmp.ge.s32.totalorder %s19, 8
      %s26 = sphi 0, %s38
      %s27 = sphi 0, %s34
      %s28 = sphi 0, %s26
      %s29 = sphi 0, %s27
      %s30 = sphi 0, %s28
      %s31 = sphi 0, %s29
      %s39 = sphi 0, %s39
      %s41 = sphi 0, %s39
      %s42 = sphi 0, %s41
      %s56 = sphi 0, %s42
      %s60 = sphi 0, %s60
      %s62 = sphi 0, %s60
      %s63 = sphi 0, %s62
      %s77 = sphi 0, %s63
      %s85 = sphi 0, %s87
      %s88 = sphi 0, %s85
      %s89 = sphi 0, %s88
      %s105 = sphi 0, %s89
      %s113 = sphi 0, %s115
      %s116 = sphi 0, %s113
      %s117 = sphi 0, %s116
      %s133 = sphi 0, %s117
    $region4: #{tpu_custom_call.1} parent=1 // loop_header_branch
      %22 = sbr.rel (%p20) target = $region8
    $region5: #{tpu_custom_call.1} parent=1 // loop_body
      %s24 = ssub.s32 %s19, 1
      %s25 = ssub.s32 %s19, 2
      %s32 = sadd.s32 1, %s27
      %p33 = scmp.ge.s32.totalorder %s32, 3
      %s34 = scalar_select %p33, 0, %s32
      %s35 = sadd.s32 1, %s26
      %s36 = scalar_select %p33, %s35, %s26
      %p37 = scmp.ge.s32.totalorder %s36, 2
      %s38 = scalar_select %p37, 0, %s36
      %s40 = sadd.s32 %s39, 1
      %p43 = scmp.eq.s32.totalorder %s19, 5
      %p44 = scmp.ne.s32.totalorder %s39, %s41
      %p45 = scmp.eq.s32.totalorder %s19, 0
      %p46 = por %p44, %p45
      %p47 = scmp.ne.s32.totalorder %s39, %s41
      %p48 = scmp.eq.s32.totalorder %s24, 5
      %p49 = por %p47, %p48
      %p50 = scmp.ne.s32.totalorder %s41, %s42
      %p51 = scmp.eq.s32.totalorder %s24, 0
      %p52 = por %p50, %p51
      %p53 = scmp.ne.s32.totalorder %s41, %s42
      %p54 = scmp.eq.s32.totalorder %s25, 5
      %p55 = por %p53, %p54
      %p57 = scmp.ne.s32.totalorder %s42, %s56
      %p58 = scmp.eq.s32.totalorder %s25, 0
      %p59 = por %p57, %p58
      %s61 = sadd.s32 %s60, 1
      %p64 = scmp.eq.s32.totalorder %s19, 5
      %p65 = scmp.ne.s32.totalorder %s60, %s62
      %p66 = scmp.eq.s32.totalorder %s19, 0
      %p67 = por %p65, %p66
      %p68 = scmp.ne.s32.totalorder %s60, %s62
      %p69 = scmp.eq.s32.totalorder %s24, 5
      %p70 = por %p68, %p69
      %p71 = scmp.ne.s32.totalorder %s62, %s63
      %p72 = scmp.eq.s32.totalorder %s24, 0
      %p73 = por %p71, %p72
      %p74 = scmp.ne.s32.totalorder %s62, %s63
      %p75 = scmp.eq.s32.totalorder %s25, 5
      %p76 = por %p74, %p75
      %p78 = scmp.ne.s32.totalorder %s63, %s77
      %p79 = scmp.eq.s32.totalorder %s25, 0
      %p80 = por %p78, %p79
      %s81 = ssub.s32 %s26, %s38
      %s82 = ssub.s32 %s27, %s34
      %s83 = sor.u32 %s81, %s82
      %p84 = scmp.eq.s32.totalorder %s83, 0
      %s86 = sadd.s32 %s85, 1
      %s87 = scalar_select %p84, %s85, %s86
      %p90 = pneg %p84
      %p91 = scmp.eq.s32.totalorder %s19, 5
      %p92 = por %p90, %p91
      %p93 = scmp.ne.s32.totalorder %s85, %s88
      %p94 = scmp.eq.s32.totalorder %s19, 0
      %p95 = por %p93, %p94
      %p96 = scmp.ne.s32.totalorder %s85, %s88
      %p97 = scmp.eq.s32.totalorder %s24, 5
      %p98 = por %p96, %p97
      %p99 = scmp.ne.s32.totalorder %s88, %s89
      %p100 = scmp.eq.s32.totalorder %s24, 0
      %p101 = por %p99, %p100
      %p102 = scmp.ne.s32.totalorder %s88, %s89
      %p103 = scmp.eq.s32.totalorder %s25, 5
      %p104 = por %p102, %p103
      %p106 = scmp.ne.s32.totalorder %s89, %s105
      %p107 = scmp.eq.s32.totalorder %s25, 0
      %p108 = por %p106, %p107
      %s109 = ssub.s32 %s26, %s38
      %s110 = ssub.s32 %s27, %s34
      %s111 = sor.u32 %s109, %s110
      %p112 = scmp.eq.s32.totalorder %s111, 0
      %s114 = sadd.s32 %s113, 1
      %s115 = scalar_select %p112, %s113, %s114
      %p118 = pneg %p112
      %p119 = scmp.eq.s32.totalorder %s19, 5
      %p120 = por %p118, %p119
      %p121 = scmp.ne.s32.totalorder %s113, %s116
      %p122 = scmp.eq.s32.totalorder %s19, 0
      %p123 = por %p121, %p122
      %p124 = scmp.ne.s32.totalorder %s113, %s116
      %p125 = scmp.eq.s32.totalorder %s24, 5
      %p126 = por %p124, %p125
      %p127 = scmp.ne.s32.totalorder %s116, %s117
      %p128 = scmp.eq.s32.totalorder %s24, 0
      %p129 = por %p127, %p128
      %p130 = scmp.ne.s32.totalorder %s116, %s117
      %p131 = scmp.eq.s32.totalorder %s25, 5
      %p132 = por %p130, %p131
      %p134 = scmp.ne.s32.totalorder %s117, %s133
      %p135 = scmp.eq.s32.totalorder %s25, 0
      %p136 = por %p134, %p135
      %p137 = scmp.le.s32.totalorder 1, %s19
      %p138 = scmp.lt.s32.totalorder %s19, 7
      %p139 = pnand %p137, %p138
      %p140 = pneg %p139
      // Predicated region
      $region9: #{tpu_custom_call.1} parent=5 // pred_check
        _
      $region10: #{tpu_custom_call.1} parent=5 // pred_check_branch
        %142 = sbr.rel (%p139) target = $region12
      $region11: #{tpu_custom_call.1} parent=5 // pred_region
        %s143 = ssub.s32 %s19, 1
        // Predicated region
        $region13: #{tpu_custom_call.1} parent=11 // pred_check
          %p144 = pneg %p52
        $region14: #{tpu_custom_call.1} parent=11 // pred_check_branch
          %146 = sbr.rel (%p144) target = $region16
        $region15: #{tpu_custom_call.1} parent=11 // pred_region
          %148 = vsyncadd [#allocation6], 0
          %s150 = sshll.u32 %s0, 4
          %s151 = int_to_ptr.hbm [resolvable:$true] %s150
          %153 = dma.hbm_to_smem %s151, 16, [#allocation4], [#allocation6]
        $region16: #{tpu_custom_call.1} parent=11 // pred_fallthru
          _
        // Predicated region
        $region17: #{tpu_custom_call.1} parent=11 // pred_check
          %p154 = pneg %p73
        $region18: #{tpu_custom_call.1} parent=11 // pred_check_branch
          %156 = sbr.rel (%p154) target = $region20
        $region19: #{tpu_custom_call.1} parent=11 // pred_region
          %158 = vsyncadd [#allocation8], 0
          %s160 = sshll.u32 %s1, 4
          %s161 = int_to_ptr.hbm [resolvable:$true] %s160
          %163 = dma.hbm_to_smem %s161, 16, [#allocation7], [#allocation8]
        $region20: #{tpu_custom_call.1} parent=11 // pred_fallthru
          _
      $region12: #{tpu_custom_call.1} parent=5 // pred_fallthru
        _
      %p164 = scmp.lt.s32.totalorder %s19, 6
      // Predicated region
      $region21: #{tpu_custom_call.1} parent=5 // pred_check
        %p165 = pneg %p164
      $region22: #{tpu_custom_call.1} parent=5 // pred_check_branch
        %167 = sbr.rel (%p165) target = $region24
      $region23: #{tpu_custom_call.1} parent=5 // pred_region
        _
      $region24: #{tpu_custom_call.1} parent=5 // pred_fallthru
        _
      %p168 = scmp.le.s32.totalorder 1, %s19
      %p169 = scmp.lt.s32.totalorder %s19, 7
      %p170 = pnand %p168, %p169
      %p171 = pneg %p170
      // Predicated region
      $region25: #{tpu_custom_call.1} parent=5 // pred_check
        _
      $region26: #{tpu_custom_call.1} parent=5 // pred_check_branch
        %173 = sbr.rel (%p170) target = $region28
      $region27: #{tpu_custom_call.1} parent=5 // pred_region
        %s174 = ssub.s32 %s19, 1
        // Predicated region
        $region29: #{tpu_custom_call.1} parent=27 // pred_check
          %p175 = pneg %p52
        $region30: #{tpu_custom_call.1} parent=27 // pred_check_branch
          %177 = sbr.rel (%p175) target = $region32
        $region31: #{tpu_custom_call.1} parent=27 // pred_region
          %179 = dma.done [#allocation6], 16
        $region32: #{tpu_custom_call.1} parent=27 // pred_fallthru
          _
        // Predicated region
        $region33: #{tpu_custom_call.1} parent=27 // pred_check
          %p180 = pneg %p73
        $region34: #{tpu_custom_call.1} parent=27 // pred_check_branch
          %182 = sbr.rel (%p180) target = $region36
        $region35: #{tpu_custom_call.1} parent=27 // pred_region
          %184 = dma.done [#allocation8], 16
        $region36: #{tpu_custom_call.1} parent=27 // pred_fallthru
          _
        %185 = sfence
        %p186 = pneg %p52
        %p187 = pneg %p49
        %p188 = pneg %p73
        %p189 = pneg %p70
        %p190 = pneg %p101
        %p191 = pneg %p98
        %s192 = sand.u32 %s88, 1
        %s193 = scalar_lea.sflag [#allocation5], %s192
        %s194 = sand.u32 %s88, 1
        %s195 = smul.addr %s194, 192
        %s196 = scalar_lea.vmem [#allocation9], %s195
        %p197 = pneg %p129
        %p198 = pneg %p126
        %s199 = sand.u32 %s116, 1
        %s200 = scalar_lea.sflag [#allocation11], %s199
        %s201 = sand.u32 %s116, 1
        %s202 = smul.addr %s201, 64
        %s203 = scalar_lea.vmem [#allocation10], %s202
        %s204 = smul.u32 4, %s29
        %s205 = smul.u32 4, %s29
        %p206 = scmp.lt.s32.totalorder %s29, 0
        %s207 = ssub.s32 0, %s29
        %s208 = scalar_select %p206, %s207, %s29
        %s209 = sand.u32 %s208, 1
        %s210 = ssub.s32 0, %s209
        %s211 = scalar_select %p206, %s210, %s209
        %p212 = scmp.eq.s32.totalorder %s29, 0
        // Predicated region
        $region37: #{tpu_custom_call.1} parent=27 // pred_check
          %p213 = pneg %p212
        $region38: #{tpu_custom_call.1} parent=27 // pred_check_branch
          %215 = sbr.rel (%p213) target = $region40
        $region39: #{tpu_custom_call.1} parent=27 // pred_region
          %s216 = smul.u32 %s29, 32
          %s217 = ssub.s32 %s216, 8
          %p218 = scmp.gt.s32.totalorder %s217, 0
          %s219 = scalar_select %p218, %s217, 0
          %p220 = scmp.lt.s32.totalorder %s219, 48
          %s221 = scalar_select %p220, %s219, 48
          %s222 = sshra.s32 %s221, 3
          %s223 = sand.u32 %s221, 7
          %s224 = smul.u32 %s222, 2
          %s225 = smul.u32 %s28, 24
          %s226 = sadd.s32 %s224, %s225
          %s227 = smul.addr %s226, 8
          %s228 = scalar_lea.hbm %s2, %s227
          %s229 = smul.u32 %s211, 12
          %s230 = smul.addr %s229, 8
          %s231 = scalar_lea.vmem [#allocation2], %s230
          %s232 = scalar_lea.sflag [#allocation3], %s211
          // Predicated region
          $region41: #{tpu_custom_call.1} parent=39 // pred_check
            _
          $region42: #{tpu_custom_call.1} parent=39 // pred_check_branch
            %234 = sbr.rel target = $region44
          $region43: #{tpu_custom_call.1} parent=39 // pred_region
            %235 = sst [smem:[#allocation14]] [#allocation13]
            %236 = sst [smem:[#allocation15]] [#allocation12]
          $region44: #{tpu_custom_call.1} parent=39 // pred_fallthru
            _
          %238 = shalt.err (0)
          %s240 = sshll.u32 %s228, 4
          %s241 = int_to_ptr.hbm [resolvable:$true] %s240
          %s242 = sshll.u32 %s231, 4
          %s243 = int_to_ptr.vmem [resolvable:$true] %s242
          %245 = dma.hbm_to_vmem [thread:$0]  %s241, 1536, %s243, %s232
        $region40: #{tpu_custom_call.1} parent=27 // pred_fallthru
          _
        %s246 = sadd.s32 %s29, 1
        %p247 = scmp.lt.s32.totalorder %s246, 3
        // Predicated region
        $region45: #{tpu_custom_call.1} parent=27 // pred_check
          %p248 = pneg %p247
        $region46: #{tpu_custom_call.1} parent=27 // pred_check_branch
          %250 = sbr.rel (%p248) target = $region48
        $region47: #{tpu_custom_call.1} parent=27 // pred_region
          %s251 = ssub.s32 1, %s211
          %s252 = smul.u32 %s246, 32
          %s253 = ssub.s32 %s252, 8
          %p254 = scmp.gt.s32.totalorder %s253, 0
          %s255 = scalar_select %p254, %s253, 0
          %p256 = scmp.lt.s32.totalorder %s255, 48
          %s257 = scalar_select %p256, %s255, 48
          %s258 = sshra.s32 %s257, 3
          %s259 = sand.u32 %s257, 7
          %s260 = smul.u32 %s258, 2
          %s261 = smul.u32 %s28, 24
          %s262 = sadd.s32 %s260, %s261
          %s263 = smul.addr %s262, 8
          %s264 = scalar_lea.hbm %s2, %s263
          %s265 = smul.u32 %s251, 12
          %s266 = smul.addr %s265, 8
          %s267 = scalar_lea.vmem [#allocation2], %s266
          %s268 = scalar_lea.sflag [#allocation3], %s251
          // Predicated region
          $region49: #{tpu_custom_call.1} parent=47 // pred_check
            _
          $region50: #{tpu_custom_call.1} parent=47 // pred_check_branch
            %270 = sbr.rel target = $region52
          $region51: #{tpu_custom_call.1} parent=47 // pred_region
            %271 = sst [smem:[#allocation14]] [#allocation17]
            %272 = sst [smem:[#allocation15]] [#allocation16]
          $region52: #{tpu_custom_call.1} parent=47 // pred_fallthru
            _
          %274 = shalt.err (0)
          %s276 = sshll.u32 %s264, 4
          %s277 = int_to_ptr.hbm [resolvable:$true] %s276
          %s278 = sshll.u32 %s267, 4
          %s279 = int_to_ptr.vmem [resolvable:$true] %s278
          %281 = dma.hbm_to_vmem [thread:$0]  %s277, 1536, %s279, %s268
        $region48: #{tpu_custom_call.1} parent=27 // pred_fallthru
          _
        %s282 = sld [smem:[#allocation4 + %s28]]
        %v283 = vstv %s282
        %v284 = vrcp.pop %v283
        %v285 = vmul.f32 %v283, %v284
        %v286 = vsub.f32 1.0, %v285
        %v287 = vmul.f32 %v284, %v286
        %v288 = vadd.f32 %v284, %v287
        %vm289 = vweird.f32 %v283
        %vm290 = vweird.f32 %v284
        %vm291 = vmor %vm289, %vm290
        %v292 = vsel %vm291, %v284, %v288
        %v293 = vand.u32 2147483647, %v283
        %vm294 = vcmp.eq.f32.partialorder %v293, 8.507059e+37
        %v295 = vand.u32 %v283, 2147483648
        %v296 = vor.u32 1.1754944e-38, %v295
        %v297 = vsel %vm294, %v296, %v292
        %s298 = vtos %v297
        %s299 = smul.f32 2.0, %s298
        %s300 = sld [smem:[#allocation7 + %s28]]
        %v301 = vstv %s300
        %v302 = vrcp.pop %v301
        %v303 = vmul.f32 %v301, %v302
        %v304 = vsub.f32 1.0, %v303
        %v305 = vmul.f32 %v302, %v304
        %v306 = vadd.f32 %v302, %v305
        %vm307 = vweird.f32 %v301
        %vm308 = vweird.f32 %v302
        %vm309 = vmor %vm307, %vm308
        %v310 = vsel %vm309, %v302, %v306
        %v311 = vand.u32 2147483647, %v301
        %vm312 = vcmp.eq.f32.partialorder %v311, 8.507059e+37
        %v313 = vand.u32 %v301, 2147483648
        %v314 = vor.u32 1.1754944e-38, %v313
        %v315 = vsel %vm312, %v314, %v310
        %s316 = vtos %v315
        %s317 = smul.f32 2.0, %s316
        %s318 = smul.u32 %s29, 32
        %s319 = ssub.s32 %s318, 8
        %p320 = scmp.gt.s32.totalorder %s319, 0
        %s321 = scalar_select %p320, %s319, 0
        %p322 = scmp.lt.s32.totalorder %s321, 48
        %s323 = scalar_select %p322, %s321, 48
        %v324 = vlaneseq
        %v325 = vshrl.u32 %v324, 7
        %v326 = vadd.s32 %v325, 8
        %v327 = vadd.s32 %v325, 16
        %v328 = vadd.s32 %v325, 24
        %v329 = vadd.s32 %v325, 32
        %v330 = vadd.s32 %v325, 40
        %v331 = vstv %s323
        %v332 = vadd.s32 %v331, %v325
        %v333 = vadd.s32 %v331, %v326
        %v334 = vadd.s32 %v331, %v327
        %v335 = vadd.s32 %v331, %v328
        %v336 = vadd.s32 %v331, %v329
        %v337 = vadd.s32 %v331, %v330
        %v338 = vlaneseq
        %v339 = vand.u32 %v338, 127
        %v340 = vadd.s32 %v339, 128
        %vm341 = vcmp.lt.s32.totalorder %v332, 95
        %vm342 = vcmp.lt.s32.totalorder %v333, 95
        %vm343 = vcmp.lt.s32.totalorder %v334, 95
        %vm344 = vcmp.lt.s32.totalorder %v335, 95
        %vm345 = vcmp.lt.s32.totalorder %v336, 95
        %vm346 = vcmp.lt.s32.totalorder %v337, 95
        %vm347 = vcmp.ge.s32.totalorder %v332, 1
        %vm348 = vcmp.ge.s32.totalorder %v333, 1
        %vm349 = vcmp.ge.s32.totalorder %v334, 1
        %vm350 = vcmp.ge.s32.totalorder %v335, 1
        %vm351 = vcmp.ge.s32.totalorder %v336, 1
        %vm352 = vcmp.ge.s32.totalorder %v337, 1
        %vm353 = vcmp.lt.s32.totalorder %v339, 255
        %vm354 = vcmp.lt.s32.totalorder %v340, 255
        %vm355 = vcmp.ge.s32.totalorder %v339, 1
        %vm356 = vcmp.ge.s32.totalorder %v340, 1
        %s357 = smul.u32 %s211, 12
        %s358 = smul.addr %s357, 8
        %s359 = scalar_lea.vmem [#allocation2], %s358
        %s360 = scalar_lea.sflag [#allocation3], %s211
        %s361 = smul.u32 8, 6
        %s362 = smul.u32 %s361, 2
        %s363 = sshll.u32 %s362, 4
        %364 = dma.done %s360, %s363
        %v365 = vld [vmem:[%s359] sm:$0xff]
        %v366 = vld [vmem:[%s359 + $0x8] sm:$0xff]
        %v367 = vld [vmem:[%s359 + $0x10] sm:$0xff]
        %v368 = vld [vmem:[%s359 + $0x18] sm:$0xff]
        %v369 = vld [vmem:[%s359 + $0x20] sm:$0xff]
        %v370 = vld [vmem:[%s359 + $0x28] sm:$0xff]
        %v371 = vld [vmem:[%s359 + $0x30] sm:$0xff]
        %v372 = vld [vmem:[%s359 + $0x38] sm:$0xff]
        %v373 = vld [vmem:[%s359 + $0x40] sm:$0xff]
        %v374 = vld [vmem:[%s359 + $0x48] sm:$0xff]
        %v375 = vld [vmem:[%s359 + $0x50] sm:$0xff]
        %v376 = vld [vmem:[%s359 + $0x58] sm:$0xff]
        // Predicated region
        $region53: #{tpu_custom_call.1} parent=27 // pred_check
          %p377 = pneg %p212
        $region54: #{tpu_custom_call.1} parent=27 // pred_check_branch
          %379 = sbr.rel (%p377) target = $region56
        $region55: #{tpu_custom_call.1} parent=27 // pred_region
          %v380 = vstv %s299
          %v381 = vmul.f32 %v365, %v380
          %v382 = vmul.f32 %v366, %v380
          %v383 = vmul.f32 %v367, %v380
          %v384 = vmul.f32 %v368, %v380
          %v385 = vmul.f32 %v369, %v380
          %v386 = vmul.f32 %v370, %v380
          %v387 = vmul.f32 %v371, %v380
          %v388 = vmul.f32 %v372, %v380
          %v389 = vmul.f32 %v373, %v380
          %v390 = vmul.f32 %v374, %v380
          %v391 = vmul.f32 %v375, %v380
          %v392 = vmul.f32 %v376, %v380
          %v393 = vadd.f32 %v381, 2e-06
          %v394 = vadd.f32 %v382, 2e-06
          %v395 = vadd.f32 %v383, 2e-06
          %v396 = vadd.f32 %v384, 2e-06
          %v397 = vadd.f32 %v385, 2e-06
          %v398 = vadd.f32 %v386, 2e-06
          %v399 = vadd.f32 %v387, 2e-06
          %v400 = vadd.f32 %v388, 2e-06
          %v401 = vadd.f32 %v389, 2e-06
          %v402 = vadd.f32 %v390, 2e-06
          %v403 = vadd.f32 %v391, 2e-06
          %v404 = vadd.f32 %v392, 2e-06
          %v405 = vstv %s317
          %v406 = vmul.f32 %v365, %v405
          %v407 = vmul.f32 %v366, %v405
          %v408 = vmul.f32 %v367, %v405
          %v409 = vmul.f32 %v368, %v405
          %v410 = vmul.f32 %v369, %v405
          %v411 = vmul.f32 %v370, %v405
          %v412 = vmul.f32 %v371, %v405
          %v413 = vmul.f32 %v372, %v405
          %v414 = vmul.f32 %v373, %v405
          %v415 = vmul.f32 %v374, %v405
          %v416 = vmul.f32 %v375, %v405
          %v417 = vmul.f32 %v376, %v405
          %v418 = vadd.f32 %v406, 2e-06
          %v419 = vadd.f32 %v407, 2e-06
          %v420 = vadd.f32 %v408, 2e-06
          %v421 = vadd.f32 %v409, 2e-06
          %v422 = vadd.f32 %v410, 2e-06
          %v423 = vadd.f32 %v411, 2e-06
          %v424 = vadd.f32 %v412, 2e-06
          %v425 = vadd.f32 %v413, 2e-06
          %v426 = vadd.f32 %v414, 2e-06
          %v427 = vadd.f32 %v415, 2e-06
          %v428 = vadd.f32 %v416, 2e-06
          %v429 = vadd.f32 %v417, 2e-06
          %430 = vrot.lane.b32.xlu0 %v365, 1
          %v431 = vpop.permute.xlu0 %430
          %432 = vrot.lane.b32.xlu0 %v367, 1
          %v433 = vpop.permute.xlu0 %432
          %434 = vrot.lane.b32.xlu0 %v369, 1
          %v435 = vpop.permute.xlu0 %434
          %436 = vrot.lane.b32.xlu0 %v371, 1
          %v437 = vpop.permute.xlu0 %436
          %438 = vrot.lane.b32.xlu0 %v373, 1
          %v439 = vpop.permute.xlu0 %438
          %440 = vrot.lane.b32.xlu0 %v375, 1
          %v441 = vpop.permute.xlu0 %440
          %442 = vrot.lane.b32.xlu0 %v366, 1
          %v443 = vpop.permute.xlu0 %442
          %444 = vrot.lane.b32.xlu0 %v368, 1
          %v445 = vpop.permute.xlu0 %444
          %446 = vrot.lane.b32.xlu0 %v370, 1
          %v447 = vpop.permute.xlu0 %446
          %448 = vrot.lane.b32.xlu0 %v372, 1
          %v449 = vpop.permute.xlu0 %448
          %450 = vrot.lane.b32.xlu0 %v374, 1
          %v451 = vpop.permute.xlu0 %450
          %452 = vrot.lane.b32.xlu0 %v376, 1
          %v453 = vpop.permute.xlu0 %452
          %vm454 = vcmp.lt.s32.totalorder %v339, 1
          %v455 = vsel %vm454, %v431, %v443
          %v456 = vsel %vm454, %v433, %v445
          %v457 = vsel %vm454, %v435, %v447
          %v458 = vsel %vm454, %v437, %v449
          %v459 = vsel %vm454, %v439, %v451
          %v460 = vsel %vm454, %v441, %v453
          %v461 = vsel %vm454, %v443, %v431
          %v462 = vsel %vm454, %v445, %v433
          %v463 = vsel %vm454, %v447, %v435
          %v464 = vsel %vm454, %v449, %v437
          %v465 = vsel %vm454, %v451, %v439
          %v466 = vsel %vm454, %v453, %v441
          %v467 = vsel %vm355, 1, 0
          %v468 = vsel %vm356, 1, 0
          %vm469 = vcmp.eq.s32.totalorder %v467, 1
          %vm470 = vcmp.eq.s32.totalorder %v468, 1
          %v471 = vsel %vm469, %v461, 0.0
          %v472 = vsel %vm470, %v455, 0.0
          %v473 = vsel %vm469, %v462, 0.0
          %v474 = vsel %vm470, %v456, 0.0
          %v475 = vsel %vm469, %v463, 0.0
          %v476 = vsel %vm470, %v457, 0.0
          %v477 = vsel %vm469, %v464, 0.0
          %v478 = vsel %vm470, %v458, 0.0
          %v479 = vsel %vm469, %v465, 0.0
          %v480 = vsel %vm470, %v459, 0.0
          %v481 = vsel %vm469, %v466, 0.0
          %v482 = vsel %vm470, %v460, 0.0
          %483 = vrot.lane.b32.xlu0 %v365, 127
          %v484 = vpop.permute.xlu0 %483
          %485 = vrot.lane.b32.xlu0 %v367, 127
          %v486 = vpop.permute.xlu0 %485
          %487 = vrot.lane.b32.xlu0 %v369, 127
          %v488 = vpop.permute.xlu0 %487
          %489 = vrot.lane.b32.xlu0 %v371, 127
          %v490 = vpop.permute.xlu0 %489
          %491 = vrot.lane.b32.xlu0 %v373, 127
          %v492 = vpop.permute.xlu0 %491
          %493 = vrot.lane.b32.xlu0 %v375, 127
          %v494 = vpop.permute.xlu0 %493
          %495 = vrot.lane.b32.xlu0 %v366, 127
          %v496 = vpop.permute.xlu0 %495
          %497 = vrot.lane.b32.xlu0 %v368, 127
          %v498 = vpop.permute.xlu0 %497
          %499 = vrot.lane.b32.xlu0 %v370, 127
          %v500 = vpop.permute.xlu0 %499
          %501 = vrot.lane.b32.xlu0 %v372, 127
          %v502 = vpop.permute.xlu0 %501
          %503 = vrot.lane.b32.xlu0 %v374, 127
          %v504 = vpop.permute.xlu0 %503
          %505 = vrot.lane.b32.xlu0 %v376, 127
          %v506 = vpop.permute.xlu0 %505
          %vm507 = vcmp.lt.s32.totalorder %v339, 127
          %v508 = vsel %vm507, %v484, %v496
          %v509 = vsel %vm507, %v486, %v498
          %v510 = vsel %vm507, %v488, %v500
          %v511 = vsel %vm507, %v490, %v502
          %v512 = vsel %vm507, %v492, %v504
          %v513 = vsel %vm507, %v494, %v506
          %v514 = vsel %vm507, %v496, %v484
          %v515 = vsel %vm507, %v498, %v486
          %v516 = vsel %vm507, %v500, %v488
          %v517 = vsel %vm507, %v502, %v490
          %v518 = vsel %vm507, %v504, %v492
          %v519 = vsel %vm507, %v506, %v494
          %v520 = vsel %vm353, 1, 0
          %v521 = vsel %vm354, 1, 0
          %vm522 = vcmp.eq.s32.totalorder %v520, 1
          %vm523 = vcmp.eq.s32.totalorder %v521, 1
          %v524 = vsel %vm522, %v508, 0.0
          %v525 = vsel %vm523, %v514, 0.0
          %v526 = vsel %vm522, %v509, 0.0
          %v527 = vsel %vm523, %v515, 0.0
          %v528 = vsel %vm522, %v510, 0.0
          %v529 = vsel %vm523, %v516, 0.0
          %v530 = vsel %vm522, %v511, 0.0
          %v531 = vsel %vm523, %v517, 0.0
          %v532 = vsel %vm522, %v512, 0.0
          %v533 = vsel %vm523, %v518, 0.0
          %v534 = vsel %vm522, %v513, 0.0
          %v535 = vsel %vm523, %v519, 0.0
          %v536 = vsub.f32 %v471, %v524
          %v537 = vsub.f32 %v472, %v525
          %v538 = vsub.f32 %v473, %v526
          %v539 = vsub.f32 %v474, %v527
          %v540 = vsub.f32 %v475, %v528
          %v541 = vsub.f32 %v476, %v529
          %v542 = vsub.f32 %v477, %v530
          %v543 = vsub.f32 %v478, %v531
          %v544 = vsub.f32 %v479, %v532
          %v545 = vsub.f32 %v480, %v533
          %v546 = vsub.f32 %v481, %v534
          %v547 = vsub.f32 %v482, %v535
          %v548 = vrcp.pop %v393
          %v549 = vmul.f32 %v393, %v548
          %v550 = vsub.f32 1.0, %v549
          %v551 = vmul.f32 %v548, %v550
          %v552 = vadd.f32 %v548, %v551
          %vm553 = vweird.f32 %v393
          %vm554 = vweird.f32 %v548
          %vm555 = vmor %vm553, %vm554
          %v556 = vsel %vm555, %v548, %v552
          %v557 = vand.u32 2147483647, %v393
          %vm558 = vcmp.eq.f32.partialorder %v557, 8.507059e+37
          %v559 = vand.u32 %v393, 2147483648
          %v560 = vor.u32 1.1754944e-38, %v559
          %v561 = vsel %vm558, %v560, %v556
          %v562 = vmul.f32 %v536, %v561
          %v563 = vrcp.pop %v394
          %v564 = vmul.f32 %v394, %v563
          %v565 = vsub.f32 1.0, %v564
          %v566 = vmul.f32 %v563, %v565
          %v567 = vadd.f32 %v563, %v566
          %vm568 = vweird.f32 %v394
          %vm569 = vweird.f32 %v563
          %vm570 = vmor %vm568, %vm569
          %v571 = vsel %vm570, %v563, %v567
          %v572 = vand.u32 2147483647, %v394
          %vm573 = vcmp.eq.f32.partialorder %v572, 8.507059e+37
          %v574 = vand.u32 %v394, 2147483648
          %v575 = vor.u32 1.1754944e-38, %v574
          %v576 = vsel %vm573, %v575, %v571
          %v577 = vmul.f32 %v537, %v576
          %v578 = vrcp.pop %v395
          %v579 = vmul.f32 %v395, %v578
          %v580 = vsub.f32 1.0, %v579
          %v581 = vmul.f32 %v578, %v580
          %v582 = vadd.f32 %v578, %v581
          %vm583 = vweird.f32 %v395
          %vm584 = vweird.f32 %v578
          %vm585 = vmor %vm583, %vm584
          %v586 = vsel %vm585, %v578, %v582
          %v587 = vand.u32 2147483647, %v395
          %vm588 = vcmp.eq.f32.partialorder %v587, 8.507059e+37
          %v589 = vand.u32 %v395, 2147483648
          %v590 = vor.u32 1.1754944e-38, %v589
          %v591 = vsel %vm588, %v590, %v586
          %v592 = vmul.f32 %v538, %v591
          %v593 = vrcp.pop %v396
          %v594 = vmul.f32 %v396, %v593
          %v595 = vsub.f32 1.0, %v594
          %v596 = vmul.f32 %v593, %v595
          %v597 = vadd.f32 %v593, %v596
          %vm598 = vweird.f32 %v396
          %vm599 = vweird.f32 %v593
          %vm600 = vmor %vm598, %vm599
          %v601 = vsel %vm600, %v593, %v597
          %v602 = vand.u32 2147483647, %v396
          %vm603 = vcmp.eq.f32.partialorder %v602, 8.507059e+37
          %v604 = vand.u32 %v396, 2147483648
          %v605 = vor.u32 1.1754944e-38, %v604
          %v606 = vsel %vm603, %v605, %v601
          %v607 = vmul.f32 %v539, %v606
          %v608 = vrcp.pop %v397
          %v609 = vmul.f32 %v397, %v608
          %v610 = vsub.f32 1.0, %v609
          %v611 = vmul.f32 %v608, %v610
          %v612 = vadd.f32 %v608, %v611
          %vm613 = vweird.f32 %v397
          %vm614 = vweird.f32 %v608
          %vm615 = vmor %vm613, %vm614
          %v616 = vsel %vm615, %v608, %v612
          %v617 = vand.u32 2147483647, %v397
          %vm618 = vcmp.eq.f32.partialorder %v617, 8.507059e+37
          %v619 = vand.u32 %v397, 2147483648
          %v620 = vor.u32 1.1754944e-38, %v619
          %v621 = vsel %vm618, %v620, %v616
          %v622 = vmul.f32 %v540, %v621
          %v623 = vrcp.pop %v398
          %v624 = vmul.f32 %v398, %v623
          %v625 = vsub.f32 1.0, %v624
          %v626 = vmul.f32 %v623, %v625
          %v627 = vadd.f32 %v623, %v626
          %vm628 = vweird.f32 %v398
          %vm629 = vweird.f32 %v623
          %vm630 = vmor %vm628, %vm629
          %v631 = vsel %vm630, %v623, %v627
          %v632 = vand.u32 2147483647, %v398
          %vm633 = vcmp.eq.f32.partialorder %v632, 8.507059e+37
          %v634 = vand.u32 %v398, 2147483648
          %v635 = vor.u32 1.1754944e-38, %v634
          %v636 = vsel %vm633, %v635, %v631
          %v637 = vmul.f32 %v541, %v636
          %v638 = vrcp.pop %v399
          %v639 = vmul.f32 %v399, %v638
          %v640 = vsub.f32 1.0, %v639
          %v641 = vmul.f32 %v638, %v640
          %v642 = vadd.f32 %v638, %v641
          %vm643 = vweird.f32 %v399
          %vm644 = vweird.f32 %v638
          %vm645 = vmor %vm643, %vm644
          %v646 = vsel %vm645, %v638, %v642
          %v647 = vand.u32 2147483647, %v399
          %vm648 = vcmp.eq.f32.partialorder %v647, 8.507059e+37
          %v649 = vand.u32 %v399, 2147483648
          %v650 = vor.u32 1.1754944e-38, %v649
          %v651 = vsel %vm648, %v650, %v646
          %v652 = vmul.f32 %v542, %v651
          %v653 = vrcp.pop %v400
          %v654 = vmul.f32 %v400, %v653
          %v655 = vsub.f32 1.0, %v654
          %v656 = vmul.f32 %v653, %v655
          %v657 = vadd.f32 %v653, %v656
          %vm658 = vweird.f32 %v400
          %vm659 = vweird.f32 %v653
          %vm660 = vmor %vm658, %vm659
          %v661 = vsel %vm660, %v653, %v657
          %v662 = vand.u32 2147483647, %v400
          %vm663 = vcmp.eq.f32.partialorder %v662, 8.507059e+37
          %v664 = vand.u32 %v400, 2147483648
          %v665 = vor.u32 1.1754944e-38, %v664
          %v666 = vsel %vm663, %v665, %v661
          %v667 = vmul.f32 %v543, %v666
          %v668 = vrcp.pop %v401
          %v669 = vmul.f32 %v401, %v668
          %v670 = vsub.f32 1.0, %v669
          %v671 = vmul.f32 %v668, %v670
          %v672 = vadd.f32 %v668, %v671
          %vm673 = vweird.f32 %v401
          %vm674 = vweird.f32 %v668
          %vm675 = vmor %vm673, %vm674
          %v676 = vsel %vm675, %v668, %v672
          %v677 = vand.u32 2147483647, %v401
          %vm678 = vcmp.eq.f32.partialorder %v677, 8.507059e+37
          %v679 = vand.u32 %v401, 2147483648
          %v680 = vor.u32 1.1754944e-38, %v679
          %v681 = vsel %vm678, %v680, %v676
          %v682 = vmul.f32 %v544, %v681
          %v683 = vrcp.pop %v402
          %v684 = vmul.f32 %v402, %v683
          %v685 = vsub.f32 1.0, %v684
          %v686 = vmul.f32 %v683, %v685
          %v687 = vadd.f32 %v683, %v686
          %vm688 = vweird.f32 %v402
          %vm689 = vweird.f32 %v683
          %vm690 = vmor %vm688, %vm689
          %v691 = vsel %vm690, %v683, %v687
          %v692 = vand.u32 2147483647, %v402
          %vm693 = vcmp.eq.f32.partialorder %v692, 8.507059e+37
          %v694 = vand.u32 %v402, 2147483648
          %v695 = vor.u32 1.1754944e-38, %v694
          %v696 = vsel %vm693, %v695, %v691
          %v697 = vmul.f32 %v545, %v696
          %v698 = vrcp.pop %v403
          %v699 = vmul.f32 %v403, %v698
          %v700 = vsub.f32 1.0, %v699
          %v701 = vmul.f32 %v698, %v700
          %v702 = vadd.f32 %v698, %v701
          %vm703 = vweird.f32 %v403
          %vm704 = vweird.f32 %v698
          %vm705 = vmor %vm703, %vm704
          %v706 = vsel %vm705, %v698, %v702
          %v707 = vand.u32 2147483647, %v403
          %vm708 = vcmp.eq.f32.partialorder %v707, 8.507059e+37
          %v709 = vand.u32 %v403, 2147483648
          %v710 = vor.u32 1.1754944e-38, %v709
          %v711 = vsel %vm708, %v710, %v706
          %v712 = vmul.f32 %v546, %v711
          %v713 = vrcp.pop %v404
          %v714 = vmul.f32 %v404, %v713
          %v715 = vsub.f32 1.0, %v714
          %v716 = vmul.f32 %v713, %v715
          %v717 = vadd.f32 %v713, %v716
          %vm718 = vweird.f32 %v404
          %vm719 = vweird.f32 %v713
          %vm720 = vmor %vm718, %vm719
          %v721 = vsel %vm720, %v713, %v717
          %v722 = vand.u32 2147483647, %v404
          %vm723 = vcmp.eq.f32.partialorder %v722, 8.507059e+37
          %v724 = vand.u32 %v404, 2147483648
          %v725 = vor.u32 1.1754944e-38, %v724
          %v726 = vsel %vm723, %v725, %v721
          %v727 = vmul.f32 %v547, %v726
          %v728 = vrot.slane %v365, 7
          %v729 = vrot.slane %v366, 7
          %v730 = vrot.slane %v367, 7
          %v731 = vrot.slane %v368, 7
          %v732 = vrot.slane %v369, 7
          %v733 = vrot.slane %v370, 7
          %v734 = vrot.slane %v371, 7
          %v735 = vrot.slane %v372, 7
          %v736 = vrot.slane %v373, 7
          %v737 = vrot.slane %v374, 7
          %v738 = vrot.slane %v375, 7
          %v739 = vrot.slane %v376, 7
          %vm740 = vcmp.lt.s32.totalorder %v325, 1
          %v741 = vsel %vm740, %v736, %v738
          %v742 = vsel %vm740, %v737, %v739
          %v743 = vsel %vm740, %v734, %v736
          %v744 = vsel %vm740, %v735, %v737
          %v745 = vsel %vm740, %v732, %v734
          %v746 = vsel %vm740, %v733, %v735
          %v747 = vsel %vm740, %v730, %v732
          %v748 = vsel %vm740, %v731, %v733
          %v749 = vsel %vm740, %v728, %v730
          %v750 = vsel %vm740, %v729, %v731
          %v751 = vsel %vm740, %v738, %v728
          %v752 = vsel %vm740, %v739, %v729
          %v753 = vsel %vm347, 1, 0
          %v754 = vsel %vm348, 1, 0
          %v755 = vsel %vm349, 1, 0
          %v756 = vsel %vm350, 1, 0
          %v757 = vsel %vm351, 1, 0
          %v758 = vsel %vm352, 1, 0
          %vm759 = vcmp.eq.s32.totalorder %v753, 1
          %vm760 = vcmp.eq.s32.totalorder %v754, 1
          %vm761 = vcmp.eq.s32.totalorder %v755, 1
          %vm762 = vcmp.eq.s32.totalorder %v756, 1
          %vm763 = vcmp.eq.s32.totalorder %v757, 1
          %vm764 = vcmp.eq.s32.totalorder %v758, 1
          %v765 = vsel %vm759, %v751, 0.0
          %v766 = vsel %vm759, %v752, 0.0
          %v767 = vsel %vm760, %v749, 0.0
          %v768 = vsel %vm760, %v750, 0.0
          %v769 = vsel %vm761, %v747, 0.0
          %v770 = vsel %vm761, %v748, 0.0
          %v771 = vsel %vm762, %v745, 0.0
          %v772 = vsel %vm762, %v746, 0.0
          %v773 = vsel %vm763, %v743, 0.0
          %v774 = vsel %vm763, %v744, 0.0
          %v775 = vsel %vm764, %v741, 0.0
          %v776 = vsel %vm764, %v742, 0.0
          %v777 = vrot.slane %v365, 1
          %v778 = vrot.slane %v366, 1
          %v779 = vrot.slane %v367, 1
          %v780 = vrot.slane %v368, 1
          %v781 = vrot.slane %v369, 1
          %v782 = vrot.slane %v370, 1
          %v783 = vrot.slane %v371, 1
          %v784 = vrot.slane %v372, 1
          %v785 = vrot.slane %v373, 1
          %v786 = vrot.slane %v374, 1
          %v787 = vrot.slane %v375, 1
          %v788 = vrot.slane %v376, 1
          %vm789 = vcmp.lt.s32.totalorder %v325, 7
          %v790 = vsel %vm789, %v785, %v787
          %v791 = vsel %vm789, %v786, %v788
          %v792 = vsel %vm789, %v783, %v785
          %v793 = vsel %vm789, %v784, %v786
          %v794 = vsel %vm789, %v781, %v783
          %v795 = vsel %vm789, %v782, %v784
          %v796 = vsel %vm789, %v779, %v781
          %v797 = vsel %vm789, %v780, %v782
          %v798 = vsel %vm789, %v777, %v779
          %v799 = vsel %vm789, %v778, %v780
          %v800 = vsel %vm789, %v787, %v777
          %v801 = vsel %vm789, %v788, %v778
          %v802 = vsel %vm341, 1, 0
          %v803 = vsel %vm342, 1, 0
          %v804 = vsel %vm343, 1, 0
          %v805 = vsel %vm344, 1, 0
          %v806 = vsel %vm345, 1, 0
          %v807 = vsel %vm346, 1, 0
          %vm808 = vcmp.eq.s32.totalorder %v802, 1
          %vm809 = vcmp.eq.s32.totalorder %v803, 1
          %vm810 = vcmp.eq.s32.totalorder %v804, 1
          %vm811 = vcmp.eq.s32.totalorder %v805, 1
          %vm812 = vcmp.eq.s32.totalorder %v806, 1
          %vm813 = vcmp.eq.s32.totalorder %v807, 1
          %v814 = vsel %vm808, %v798, 0.0
          %v815 = vsel %vm808, %v799, 0.0
          %v816 = vsel %vm809, %v796, 0.0
          %v817 = vsel %vm809, %v797, 0.0
          %v818 = vsel %vm810, %v794, 0.0
          %v819 = vsel %vm810, %v795, 0.0
          %v820 = vsel %vm811, %v792, 0.0
          %v821 = vsel %vm811, %v793, 0.0
          %v822 = vsel %vm812, %v790, 0.0
          %v823 = vsel %vm812, %v791, 0.0
          %v824 = vsel %vm813, %v800, 0.0
          %v825 = vsel %vm813, %v801, 0.0
          %v826 = vsub.f32 %v765, %v814
          %v827 = vsub.f32 %v766, %v815
          %v828 = vsub.f32 %v767, %v816
          %v829 = vsub.f32 %v768, %v817
          %v830 = vsub.f32 %v769, %v818
          %v831 = vsub.f32 %v770, %v819
          %v832 = vsub.f32 %v771, %v820
          %v833 = vsub.f32 %v772, %v821
          %v834 = vsub.f32 %v773, %v822
          %v835 = vsub.f32 %v774, %v823
          %v836 = vsub.f32 %v775, %v824
          %v837 = vsub.f32 %v776, %v825
          %v838 = vrcp.pop %v418
          %v839 = vmul.f32 %v418, %v838
          %v840 = vsub.f32 1.0, %v839
          %v841 = vmul.f32 %v838, %v840
          %v842 = vadd.f32 %v838, %v841
          %vm843 = vweird.f32 %v418
          %vm844 = vweird.f32 %v838
          %vm845 = vmor %vm843, %vm844
          %v846 = vsel %vm845, %v838, %v842
          %v847 = vand.u32 2147483647, %v418
          %vm848 = vcmp.eq.f32.partialorder %v847, 8.507059e+37
          %v849 = vand.u32 %v418, 2147483648
          %v850 = vor.u32 1.1754944e-38, %v849
          %v851 = vsel %vm848, %v850, %v846
          %v852 = vmul.f32 %v826, %v851
          %v853 = vrcp.pop %v419
          %v854 = vmul.f32 %v419, %v853
          %v855 = vsub.f32 1.0, %v854
          %v856 = vmul.f32 %v853, %v855
          %v857 = vadd.f32 %v853, %v856
          %vm858 = vweird.f32 %v419
          %vm859 = vweird.f32 %v853
          %vm860 = vmor %vm858, %vm859
          %v861 = vsel %vm860, %v853, %v857
          %v862 = vand.u32 2147483647, %v419
          %vm863 = vcmp.eq.f32.partialorder %v862, 8.507059e+37
          %v864 = vand.u32 %v419, 2147483648
          %v865 = vor.u32 1.1754944e-38, %v864
          %v866 = vsel %vm863, %v865, %v861
          %v867 = vmul.f32 %v827, %v866
          %v868 = vrcp.pop %v420
          %v869 = vmul.f32 %v420, %v868
          %v870 = vsub.f32 1.0, %v869
          %v871 = vmul.f32 %v868, %v870
          %v872 = vadd.f32 %v868, %v871
          %vm873 = vweird.f32 %v420
          %vm874 = vweird.f32 %v868
          %vm875 = vmor %vm873, %vm874
          %v876 = vsel %vm875, %v868, %v872
          %v877 = vand.u32 2147483647, %v420
          %vm878 = vcmp.eq.f32.partialorder %v877, 8.507059e+37
          %v879 = vand.u32 %v420, 2147483648
          %v880 = vor.u32 1.1754944e-38, %v879
          %v881 = vsel %vm878, %v880, %v876
          %v882 = vmul.f32 %v828, %v881
          %v883 = vrcp.pop %v421
          %v884 = vmul.f32 %v421, %v883
          %v885 = vsub.f32 1.0, %v884
          %v886 = vmul.f32 %v883, %v885
          %v887 = vadd.f32 %v883, %v886
          %vm888 = vweird.f32 %v421
          %vm889 = vweird.f32 %v883
          %vm890 = vmor %vm888, %vm889
          %v891 = vsel %vm890, %v883, %v887
          %v892 = vand.u32 2147483647, %v421
          %vm893 = vcmp.eq.f32.partialorder %v892, 8.507059e+37
          %v894 = vand.u32 %v421, 2147483648
          %v895 = vor.u32 1.1754944e-38, %v894
          %v896 = vsel %vm893, %v895, %v891
          %v897 = vmul.f32 %v829, %v896
          %v898 = vrcp.pop %v422
          %v899 = vmul.f32 %v422, %v898
          %v900 = vsub.f32 1.0, %v899
          %v901 = vmul.f32 %v898, %v900
          %v902 = vadd.f32 %v898, %v901
          %vm903 = vweird.f32 %v422
          %vm904 = vweird.f32 %v898
          %vm905 = vmor %vm903, %vm904
          %v906 = vsel %vm905, %v898, %v902
          %v907 = vand.u32 2147483647, %v422
          %vm908 = vcmp.eq.f32.partialorder %v907, 8.507059e+37
          %v909 = vand.u32 %v422, 2147483648
          %v910 = vor.u32 1.1754944e-38, %v909
          %v911 = vsel %vm908, %v910, %v906
          %v912 = vmul.f32 %v830, %v911
          %v913 = vrcp.pop %v423
          %v914 = vmul.f32 %v423, %v913
          %v915 = vsub.f32 1.0, %v914
          %v916 = vmul.f32 %v913, %v915
          %v917 = vadd.f32 %v913, %v916
          %vm918 = vweird.f32 %v423
          %vm919 = vweird.f32 %v913
          %vm920 = vmor %vm918, %vm919
          %v921 = vsel %vm920, %v913, %v917
          %v922 = vand.u32 2147483647, %v423
          %vm923 = vcmp.eq.f32.partialorder %v922, 8.507059e+37
          %v924 = vand.u32 %v423, 2147483648
          %v925 = vor.u32 1.1754944e-38, %v924
          %v926 = vsel %vm923, %v925, %v921
          %v927 = vmul.f32 %v831, %v926
          %v928 = vrcp.pop %v424
          %v929 = vmul.f32 %v424, %v928
          %v930 = vsub.f32 1.0, %v929
          %v931 = vmul.f32 %v928, %v930
          %v932 = vadd.f32 %v928, %v931
          %vm933 = vweird.f32 %v424
          %vm934 = vweird.f32 %v928
          %vm935 = vmor %vm933, %vm934
          %v936 = vsel %vm935, %v928, %v932
          %v937 = vand.u32 2147483647, %v424
          %vm938 = vcmp.eq.f32.partialorder %v937, 8.507059e+37
          %v939 = vand.u32 %v424, 2147483648
          %v940 = vor.u32 1.1754944e-38, %v939
          %v941 = vsel %vm938, %v940, %v936
          %v942 = vmul.f32 %v832, %v941
          %v943 = vrcp.pop %v425
          %v944 = vmul.f32 %v425, %v943
          %v945 = vsub.f32 1.0, %v944
          %v946 = vmul.f32 %v943, %v945
          %v947 = vadd.f32 %v943, %v946
          %vm948 = vweird.f32 %v425
          %vm949 = vweird.f32 %v943
          %vm950 = vmor %vm948, %vm949
          %v951 = vsel %vm950, %v943, %v947
          %v952 = vand.u32 2147483647, %v425
          %vm953 = vcmp.eq.f32.partialorder %v952, 8.507059e+37
          %v954 = vand.u32 %v425, 2147483648
          %v955 = vor.u32 1.1754944e-38, %v954
          %v956 = vsel %vm953, %v955, %v951
          %v957 = vmul.f32 %v833, %v956
          %v958 = vrcp.pop %v426
          %v959 = vmul.f32 %v426, %v958
          %v960 = vsub.f32 1.0, %v959
          %v961 = vmul.f32 %v958, %v960
          %v962 = vadd.f32 %v958, %v961
          %vm963 = vweird.f32 %v426
          %vm964 = vweird.f32 %v958
          %vm965 = vmor %vm963, %vm964
          %v966 = vsel %vm965, %v958, %v962
          %v967 = vand.u32 2147483647, %v426
          %vm968 = vcmp.eq.f32.partialorder %v967, 8.507059e+37
          %v969 = vand.u32 %v426, 2147483648
          %v970 = vor.u32 1.1754944e-38, %v969
          %v971 = vsel %vm968, %v970, %v966
          %v972 = vmul.f32 %v834, %v971
          %v973 = vrcp.pop %v427
          %v974 = vmul.f32 %v427, %v973
          %v975 = vsub.f32 1.0, %v974
          %v976 = vmul.f32 %v973, %v975
          %v977 = vadd.f32 %v973, %v976
          %vm978 = vweird.f32 %v427
          %vm979 = vweird.f32 %v973
          %vm980 = vmor %vm978, %vm979
          %v981 = vsel %vm980, %v973, %v977
          %v982 = vand.u32 2147483647, %v427
          %vm983 = vcmp.eq.f32.partialorder %v982, 8.507059e+37
          %v984 = vand.u32 %v427, 2147483648
          %v985 = vor.u32 1.1754944e-38, %v984
          %v986 = vsel %vm983, %v985, %v981
          %v987 = vmul.f32 %v835, %v986
          %v988 = vrcp.pop %v428
          %v989 = vmul.f32 %v428, %v988
          %v990 = vsub.f32 1.0, %v989
          %v991 = vmul.f32 %v988, %v990
          %v992 = vadd.f32 %v988, %v991
          %vm993 = vweird.f32 %v428
          %vm994 = vweird.f32 %v988
          %vm995 = vmor %vm993, %vm994
          %v996 = vsel %vm995, %v988, %v992
          %v997 = vand.u32 2147483647, %v428
          %vm998 = vcmp.eq.f32.partialorder %v997, 8.507059e+37
          %v999 = vand.u32 %v428, 2147483648
          %v1000 = vor.u32 1.1754944e-38, %v999
          %v1001 = vsel %vm998, %v1000, %v996
          %v1002 = vmul.f32 %v836, %v1001
          %v1003 = vrcp.pop %v429
          %v1004 = vmul.f32 %v429, %v1003
          %v1005 = vsub.f32 1.0, %v1004
          %v1006 = vmul.f32 %v1003, %v1005
          %v1007 = vadd.f32 %v1003, %v1006
          %vm1008 = vweird.f32 %v429
          %vm1009 = vweird.f32 %v1003
          %vm1010 = vmor %vm1008, %vm1009
          %v1011 = vsel %vm1010, %v1003, %v1007
          %v1012 = vand.u32 2147483647, %v429
          %vm1013 = vcmp.eq.f32.partialorder %v1012, 8.507059e+37
          %v1014 = vand.u32 %v429, 2147483648
          %v1015 = vor.u32 1.1754944e-38, %v1014
          %v1016 = vsel %vm1013, %v1015, %v1011
          %v1017 = vmul.f32 %v837, %v1016
          %v1018 = vmul.f32 %v562, %v562
          %v1019 = vmul.f32 %v577, %v577
          %v1020 = vmul.f32 %v592, %v592
          %v1021 = vmul.f32 %v607, %v607
          %v1022 = vmul.f32 %v622, %v622
          %v1023 = vmul.f32 %v637, %v637
          %v1024 = vmul.f32 %v652, %v652
          %v1025 = vmul.f32 %v667, %v667
          %v1026 = vmul.f32 %v682, %v682
          %v1027 = vmul.f32 %v697, %v697
          %v1028 = vmul.f32 %v712, %v712
          %v1029 = vmul.f32 %v727, %v727
          %v1030 = vmul.f32 %v852, %v852
          %v1031 = vmul.f32 %v867, %v867
          %v1032 = vmul.f32 %v882, %v882
          %v1033 = vmul.f32 %v897, %v897
          %v1034 = vmul.f32 %v912, %v912
          %v1035 = vmul.f32 %v927, %v927
          %v1036 = vmul.f32 %v942, %v942
          %v1037 = vmul.f32 %v957, %v957
          %v1038 = vmul.f32 %v972, %v972
          %v1039 = vmul.f32 %v987, %v987
          %v1040 = vmul.f32 %v1002, %v1002
          %v1041 = vmul.f32 %v1017, %v1017
          %v1042 = vadd.f32 %v1018, %v1030
          %v1043 = vadd.f32 %v1019, %v1031
          %v1044 = vadd.f32 %v1020, %v1032
          %v1045 = vadd.f32 %v1021, %v1033
          %v1046 = vadd.f32 %v1022, %v1034
          %v1047 = vadd.f32 %v1023, %v1035
          %v1048 = vadd.f32 %v1024, %v1036
          %v1049 = vadd.f32 %v1025, %v1037
          %v1050 = vadd.f32 %v1026, %v1038
          %v1051 = vadd.f32 %v1027, %v1039
          %v1052 = vadd.f32 %v1028, %v1040
          %v1053 = vadd.f32 %v1029, %v1041
          %v1054 = vadd.f32 %v1042, 1.0
          %v1055 = vadd.f32 %v1043, 1.0
          %v1056 = vadd.f32 %v1044, 1.0
          %v1057 = vadd.f32 %v1045, 1.0
          %v1058 = vadd.f32 %v1046, 1.0
          %v1059 = vadd.f32 %v1047, 1.0
          %v1060 = vadd.f32 %v1048, 1.0
          %v1061 = vadd.f32 %v1049, 1.0
          %v1062 = vadd.f32 %v1050, 1.0
          %v1063 = vadd.f32 %v1051, 1.0
          %v1064 = vadd.f32 %v1052, 1.0
          %v1065 = vadd.f32 %v1053, 1.0
          %v1066 = vrsqrt.pop %v1054
          %v1067 = vmul.f32 %v1066, %v1054
          %v1068 = vmul.f32 %v1067, %v1066
          %v1069 = vmul.f32 0.5, %v1068
          %v1070 = vsub.f32 1.5, %v1069
          %v1071 = vmul.f32 %v1066, %v1070
          %v1072 = vmul.f32 %v1054, %v1071
          %vm1073 = vcmp.eq.f32.partialorder %v1054, inf
          %v1074 = vsel %vm1073, %v1054, %v1072
          %vm1075 = vcmp.eq.f32.partialorder %v1054, 0.0
          %v1076 = vand.u32 %v1054, 2147483648
          %v1077 = vsel %vm1075, %v1076, %v1074
          %v1078 = vrsqrt.pop %v1055
          %v1079 = vmul.f32 %v1078, %v1055
          %v1080 = vmul.f32 %v1079, %v1078
          %v1081 = vmul.f32 0.5, %v1080
          %v1082 = vsub.f32 1.5, %v1081
          %v1083 = vmul.f32 %v1078, %v1082
          %v1084 = vmul.f32 %v1055, %v1083
          %vm1085 = vcmp.eq.f32.partialorder %v1055, inf
          %v1086 = vsel %vm1085, %v1055, %v1084
          %vm1087 = vcmp.eq.f32.partialorder %v1055, 0.0
          %v1088 = vand.u32 %v1055, 2147483648
          %v1089 = vsel %vm1087, %v1088, %v1086
          %v1090 = vrsqrt.pop %v1056
          %v1091 = vmul.f32 %v1090, %v1056
          %v1092 = vmul.f32 %v1091, %v1090
          %v1093 = vmul.f32 0.5, %v1092
          %v1094 = vsub.f32 1.5, %v1093
          %v1095 = vmul.f32 %v1090, %v1094
          %v1096 = vmul.f32 %v1056, %v1095
          %vm1097 = vcmp.eq.f32.partialorder %v1056, inf
          %v1098 = vsel %vm1097, %v1056, %v1096
          %vm1099 = vcmp.eq.f32.partialorder %v1056, 0.0
          %v1100 = vand.u32 %v1056, 2147483648
          %v1101 = vsel %vm1099, %v1100, %v1098
          %v1102 = vrsqrt.pop %v1057
          %v1103 = vmul.f32 %v1102, %v1057
          %v1104 = vmul.f32 %v1103, %v1102
          %v1105 = vmul.f32 0.5, %v1104
          %v1106 = vsub.f32 1.5, %v1105
          %v1107 = vmul.f32 %v1102, %v1106
          %v1108 = vmul.f32 %v1057, %v1107
          %vm1109 = vcmp.eq.f32.partialorder %v1057, inf
          %v1110 = vsel %vm1109, %v1057, %v1108
          %vm1111 = vcmp.eq.f32.partialorder %v1057, 0.0
          %v1112 = vand.u32 %v1057, 2147483648
          %v1113 = vsel %vm1111, %v1112, %v1110
          %v1114 = vrsqrt.pop %v1058
          %v1115 = vmul.f32 %v1114, %v1058
          %v1116 = vmul.f32 %v1115, %v1114
          %v1117 = vmul.f32 0.5, %v1116
          %v1118 = vsub.f32 1.5, %v1117
          %v1119 = vmul.f32 %v1114, %v1118
          %v1120 = vmul.f32 %v1058, %v1119
          %vm1121 = vcmp.eq.f32.partialorder %v1058, inf
          %v1122 = vsel %vm1121, %v1058, %v1120
          %vm1123 = vcmp.eq.f32.partialorder %v1058, 0.0
          %v1124 = vand.u32 %v1058, 2147483648
          %v1125 = vsel %vm1123, %v1124, %v1122
          %v1126 = vrsqrt.pop %v1059
          %v1127 = vmul.f32 %v1126, %v1059
          %v1128 = vmul.f32 %v1127, %v1126
          %v1129 = vmul.f32 0.5, %v1128
          %v1130 = vsub.f32 1.5, %v1129
          %v1131 = vmul.f32 %v1126, %v1130
          %v1132 = vmul.f32 %v1059, %v1131
          %vm1133 = vcmp.eq.f32.partialorder %v1059, inf
          %v1134 = vsel %vm1133, %v1059, %v1132
          %vm1135 = vcmp.eq.f32.partialorder %v1059, 0.0
          %v1136 = vand.u32 %v1059, 2147483648
          %v1137 = vsel %vm1135, %v1136, %v1134
          %v1138 = vrsqrt.pop %v1060
          %v1139 = vmul.f32 %v1138, %v1060
          %v1140 = vmul.f32 %v1139, %v1138
          %v1141 = vmul.f32 0.5, %v1140
          %v1142 = vsub.f32 1.5, %v1141
          %v1143 = vmul.f32 %v1138, %v1142
          %v1144 = vmul.f32 %v1060, %v1143
          %vm1145 = vcmp.eq.f32.partialorder %v1060, inf
          %v1146 = vsel %vm1145, %v1060, %v1144
          %vm1147 = vcmp.eq.f32.partialorder %v1060, 0.0
          %v1148 = vand.u32 %v1060, 2147483648
          %v1149 = vsel %vm1147, %v1148, %v1146
          %v1150 = vrsqrt.pop %v1061
          %v1151 = vmul.f32 %v1150, %v1061
          %v1152 = vmul.f32 %v1151, %v1150
          %v1153 = vmul.f32 0.5, %v1152
          %v1154 = vsub.f32 1.5, %v1153
          %v1155 = vmul.f32 %v1150, %v1154
          %v1156 = vmul.f32 %v1061, %v1155
          %vm1157 = vcmp.eq.f32.partialorder %v1061, inf
          %v1158 = vsel %vm1157, %v1061, %v1156
          %vm1159 = vcmp.eq.f32.partialorder %v1061, 0.0
          %v1160 = vand.u32 %v1061, 2147483648
          %v1161 = vsel %vm1159, %v1160, %v1158
          %v1162 = vrsqrt.pop %v1062
          %v1163 = vmul.f32 %v1162, %v1062
          %v1164 = vmul.f32 %v1163, %v1162
          %v1165 = vmul.f32 0.5, %v1164
          %v1166 = vsub.f32 1.5, %v1165
          %v1167 = vmul.f32 %v1162, %v1166
          %v1168 = vmul.f32 %v1062, %v1167
          %vm1169 = vcmp.eq.f32.partialorder %v1062, inf
          %v1170 = vsel %vm1169, %v1062, %v1168
          %vm1171 = vcmp.eq.f32.partialorder %v1062, 0.0
          %v1172 = vand.u32 %v1062, 2147483648
          %v1173 = vsel %vm1171, %v1172, %v1170
          %v1174 = vrsqrt.pop %v1063
          %v1175 = vmul.f32 %v1174, %v1063
          %v1176 = vmul.f32 %v1175, %v1174
          %v1177 = vmul.f32 0.5, %v1176
          %v1178 = vsub.f32 1.5, %v1177
          %v1179 = vmul.f32 %v1174, %v1178
          %v1180 = vmul.f32 %v1063, %v1179
          %vm1181 = vcmp.eq.f32.partialorder %v1063, inf
          %v1182 = vsel %vm1181, %v1063, %v1180
          %vm1183 = vcmp.eq.f32.partialorder %v1063, 0.0
          %v1184 = vand.u32 %v1063, 2147483648
          %v1185 = vsel %vm1183, %v1184, %v1182
          %v1186 = vrsqrt.pop %v1064
          %v1187 = vmul.f32 %v1186, %v1064
          %v1188 = vmul.f32 %v1187, %v1186
          %v1189 = vmul.f32 0.5, %v1188
          %v1190 = vsub.f32 1.5, %v1189
          %v1191 = vmul.f32 %v1186, %v1190
          %v1192 = vmul.f32 %v1064, %v1191
          %vm1193 = vcmp.eq.f32.partialorder %v1064, inf
          %v1194 = vsel %vm1193, %v1064, %v1192
          %vm1195 = vcmp.eq.f32.partialorder %v1064, 0.0
          %v1196 = vand.u32 %v1064, 2147483648
          %v1197 = vsel %vm1195, %v1196, %v1194
          %v1198 = vrsqrt.pop %v1065
          %v1199 = vmul.f32 %v1198, %v1065
          %v1200 = vmul.f32 %v1199, %v1198
          %v1201 = vmul.f32 0.5, %v1200
          %v1202 = vsub.f32 1.5, %v1201
          %v1203 = vmul.f32 %v1198, %v1202
          %v1204 = vmul.f32 %v1065, %v1203
          %vm1205 = vcmp.eq.f32.partialorder %v1065, inf
          %v1206 = vsel %vm1205, %v1065, %v1204
          %vm1207 = vcmp.eq.f32.partialorder %v1065, 0.0
          %v1208 = vand.u32 %v1065, 2147483648
          %v1209 = vsel %vm1207, %v1208, %v1206
          %v1210 = vrcp.pop %v1077
          %v1211 = vmul.f32 %v1077, %v1210
          %v1212 = vsub.f32 1.0, %v1211
          %v1213 = vmul.f32 %v1210, %v1212
          %v1214 = vadd.f32 %v1210, %v1213
          %vm1215 = vweird.f32 %v1077
          %vm1216 = vweird.f32 %v1210
          %vm1217 = vmor %vm1215, %vm1216
          %v1218 = vsel %vm1217, %v1210, %v1214
          %v1219 = vand.u32 2147483647, %v1077
          %vm1220 = vcmp.eq.f32.partialorder %v1219, 8.507059e+37
          %v1221 = vand.u32 %v1077, 2147483648
          %v1222 = vor.u32 1.1754944e-38, %v1221
          %v1223 = vsel %vm1220, %v1222, %v1218
          %v1224 = vmul.f32 1.0, %v1223
          %v1225 = vrcp.pop %v1089
          %v1226 = vmul.f32 %v1089, %v1225
          %v1227 = vsub.f32 1.0, %v1226
          %v1228 = vmul.f32 %v1225, %v1227
          %v1229 = vadd.f32 %v1225, %v1228
          %vm1230 = vweird.f32 %v1089
          %vm1231 = vweird.f32 %v1225
          %vm1232 = vmor %vm1230, %vm1231
          %v1233 = vsel %vm1232, %v1225, %v1229
          %v1234 = vand.u32 2147483647, %v1089
          %vm1235 = vcmp.eq.f32.partialorder %v1234, 8.507059e+37
          %v1236 = vand.u32 %v1089, 2147483648
          %v1237 = vor.u32 1.1754944e-38, %v1236
          %v1238 = vsel %vm1235, %v1237, %v1233
          %v1239 = vmul.f32 1.0, %v1238
          %v1240 = vrcp.pop %v1101
          %v1241 = vmul.f32 %v1101, %v1240
          %v1242 = vsub.f32 1.0, %v1241
          %v1243 = vmul.f32 %v1240, %v1242
          %v1244 = vadd.f32 %v1240, %v1243
          %vm1245 = vweird.f32 %v1101
          %vm1246 = vweird.f32 %v1240
          %vm1247 = vmor %vm1245, %vm1246
          %v1248 = vsel %vm1247, %v1240, %v1244
          %v1249 = vand.u32 2147483647, %v1101
          %vm1250 = vcmp.eq.f32.partialorder %v1249, 8.507059e+37
          %v1251 = vand.u32 %v1101, 2147483648
          %v1252 = vor.u32 1.1754944e-38, %v1251
          %v1253 = vsel %vm1250, %v1252, %v1248
          %v1254 = vmul.f32 1.0, %v1253
          %v1255 = vrcp.pop %v1113
          %v1256 = vmul.f32 %v1113, %v1255
          %v1257 = vsub.f32 1.0, %v1256
          %v1258 = vmul.f32 %v1255, %v1257
          %v1259 = vadd.f32 %v1255, %v1258
          %vm1260 = vweird.f32 %v1113
          %vm1261 = vweird.f32 %v1255
          %vm1262 = vmor %vm1260, %vm1261
          %v1263 = vsel %vm1262, %v1255, %v1259
          %v1264 = vand.u32 2147483647, %v1113
          %vm1265 = vcmp.eq.f32.partialorder %v1264, 8.507059e+37
          %v1266 = vand.u32 %v1113, 2147483648
          %v1267 = vor.u32 1.1754944e-38, %v1266
          %v1268 = vsel %vm1265, %v1267, %v1263
          %v1269 = vmul.f32 1.0, %v1268
          %v1270 = vrcp.pop %v1125
          %v1271 = vmul.f32 %v1125, %v1270
          %v1272 = vsub.f32 1.0, %v1271
          %v1273 = vmul.f32 %v1270, %v1272
          %v1274 = vadd.f32 %v1270, %v1273
          %vm1275 = vweird.f32 %v1125
          %vm1276 = vweird.f32 %v1270
          %vm1277 = vmor %vm1275, %vm1276
          %v1278 = vsel %vm1277, %v1270, %v1274
          %v1279 = vand.u32 2147483647, %v1125
          %vm1280 = vcmp.eq.f32.partialorder %v1279, 8.507059e+37
          %v1281 = vand.u32 %v1125, 2147483648
          %v1282 = vor.u32 1.1754944e-38, %v1281
          %v1283 = vsel %vm1280, %v1282, %v1278
          %v1284 = vmul.f32 1.0, %v1283
          %v1285 = vrcp.pop %v1137
          %v1286 = vmul.f32 %v1137, %v1285
          %v1287 = vsub.f32 1.0, %v1286
          %v1288 = vmul.f32 %v1285, %v1287
          %v1289 = vadd.f32 %v1285, %v1288
          %vm1290 = vweird.f32 %v1137
          %vm1291 = vweird.f32 %v1285
          %vm1292 = vmor %vm1290, %vm1291
          %v1293 = vsel %vm1292, %v1285, %v1289
          %v1294 = vand.u32 2147483647, %v1137
          %vm1295 = vcmp.eq.f32.partialorder %v1294, 8.507059e+37
          %v1296 = vand.u32 %v1137, 2147483648
          %v1297 = vor.u32 1.1754944e-38, %v1296
          %v1298 = vsel %vm1295, %v1297, %v1293
          %v1299 = vmul.f32 1.0, %v1298
          %v1300 = vrcp.pop %v1149
          %v1301 = vmul.f32 %v1149, %v1300
          %v1302 = vsub.f32 1.0, %v1301
          %v1303 = vmul.f32 %v1300, %v1302
          %v1304 = vadd.f32 %v1300, %v1303
          %vm1305 = vweird.f32 %v1149
          %vm1306 = vweird.f32 %v1300
          %vm1307 = vmor %vm1305, %vm1306
          %v1308 = vsel %vm1307, %v1300, %v1304
          %v1309 = vand.u32 2147483647, %v1149
          %vm1310 = vcmp.eq.f32.partialorder %v1309, 8.507059e+37
          %v1311 = vand.u32 %v1149, 2147483648
          %v1312 = vor.u32 1.1754944e-38, %v1311
          %v1313 = vsel %vm1310, %v1312, %v1308
          %v1314 = vmul.f32 1.0, %v1313
          %v1315 = vrcp.pop %v1161
          %v1316 = vmul.f32 %v1161, %v1315
          %v1317 = vsub.f32 1.0, %v1316
          %v1318 = vmul.f32 %v1315, %v1317
          %v1319 = vadd.f32 %v1315, %v1318
          %vm1320 = vweird.f32 %v1161
          %vm1321 = vweird.f32 %v1315
          %vm1322 = vmor %vm1320, %vm1321
          %v1323 = vsel %vm1322, %v1315, %v1319
          %v1324 = vand.u32 2147483647, %v1161
          %vm1325 = vcmp.eq.f32.partialorder %v1324, 8.507059e+37
          %v1326 = vand.u32 %v1161, 2147483648
          %v1327 = vor.u32 1.1754944e-38, %v1326
          %v1328 = vsel %vm1325, %v1327, %v1323
          %v1329 = vmul.f32 1.0, %v1328
          %v1330 = vrcp.pop %v1173
          %v1331 = vmul.f32 %v1173, %v1330
          %v1332 = vsub.f32 1.0, %v1331
          %v1333 = vmul.f32 %v1330, %v1332
          %v1334 = vadd.f32 %v1330, %v1333
          %vm1335 = vweird.f32 %v1173
          %vm1336 = vweird.f32 %v1330
          %vm1337 = vmor %vm1335, %vm1336
          %v1338 = vsel %vm1337, %v1330, %v1334
          %v1339 = vand.u32 2147483647, %v1173
          %vm1340 = vcmp.eq.f32.partialorder %v1339, 8.507059e+37
          %v1341 = vand.u32 %v1173, 2147483648
          %v1342 = vor.u32 1.1754944e-38, %v1341
          %v1343 = vsel %vm1340, %v1342, %v1338
          %v1344 = vmul.f32 1.0, %v1343
          %v1345 = vrcp.pop %v1185
          %v1346 = vmul.f32 %v1185, %v1345
          %v1347 = vsub.f32 1.0, %v1346
          %v1348 = vmul.f32 %v1345, %v1347
          %v1349 = vadd.f32 %v1345, %v1348
          %vm1350 = vweird.f32 %v1185
          %vm1351 = vweird.f32 %v1345
          %vm1352 = vmor %vm1350, %vm1351
          %v1353 = vsel %vm1352, %v1345, %v1349
          %v1354 = vand.u32 2147483647, %v1185
          %vm1355 = vcmp.eq.f32.partialorder %v1354, 8.507059e+37
          %v1356 = vand.u32 %v1185, 2147483648
          %v1357 = vor.u32 1.1754944e-38, %v1356
          %v1358 = vsel %vm1355, %v1357, %v1353
          %v1359 = vmul.f32 1.0, %v1358
          %v1360 = vrcp.pop %v1197
          %v1361 = vmul.f32 %v1197, %v1360
          %v1362 = vsub.f32 1.0, %v1361
          %v1363 = vmul.f32 %v1360, %v1362
          %v1364 = vadd.f32 %v1360, %v1363
          %vm1365 = vweird.f32 %v1197
          %vm1366 = vweird.f32 %v1360
          %vm1367 = vmor %vm1365, %vm1366
          %v1368 = vsel %vm1367, %v1360, %v1364
          %v1369 = vand.u32 2147483647, %v1197
          %vm1370 = vcmp.eq.f32.partialorder %v1369, 8.507059e+37
          %v1371 = vand.u32 %v1197, 2147483648
          %v1372 = vor.u32 1.1754944e-38, %v1371
          %v1373 = vsel %vm1370, %v1372, %v1368
          %v1374 = vmul.f32 1.0, %v1373
          %v1375 = vrcp.pop %v1209
          %v1376 = vmul.f32 %v1209, %v1375
          %v1377 = vsub.f32 1.0, %v1376
          %v1378 = vmul.f32 %v1375, %v1377
          %v1379 = vadd.f32 %v1375, %v1378
          %vm1380 = vweird.f32 %v1209
          %vm1381 = vweird.f32 %v1375
          %vm1382 = vmor %vm1380, %vm1381
          %v1383 = vsel %vm1382, %v1375, %v1379
          %v1384 = vand.u32 2147483647, %v1209
          %vm1385 = vcmp.eq.f32.partialorder %v1384, 8.507059e+37
          %v1386 = vand.u32 %v1209, 2147483648
          %v1387 = vor.u32 1.1754944e-38, %v1386
          %v1388 = vsel %vm1385, %v1387, %v1383
          %v1389 = vmul.f32 1.0, %v1388
          %v1390 = vmul.f32 %v562, %v1224
          %v1391 = vmul.f32 %v577, %v1239
          %v1392 = vmul.f32 %v592, %v1254
          %v1393 = vmul.f32 %v607, %v1269
          %v1394 = vmul.f32 %v622, %v1284
          %v1395 = vmul.f32 %v637, %v1299
          %v1396 = vmul.f32 %v652, %v1314
          %v1397 = vmul.f32 %v667, %v1329
          %v1398 = vmul.f32 %v682, %v1344
          %v1399 = vmul.f32 %v697, %v1359
          %v1400 = vmul.f32 %v712, %v1374
          %v1401 = vmul.f32 %v727, %v1389
          %v1402 = vmul.f32 %v852, %v1224
          %v1403 = vmul.f32 %v867, %v1239
          %v1404 = vmul.f32 %v882, %v1254
          %v1405 = vmul.f32 %v897, %v1269
          %v1406 = vmul.f32 %v912, %v1284
          %v1407 = vmul.f32 %v927, %v1299
          %v1408 = vmul.f32 %v942, %v1314
          %v1409 = vmul.f32 %v957, %v1329
          %v1410 = vmul.f32 %v972, %v1344
          %v1411 = vmul.f32 %v987, %v1359
          %v1412 = vmul.f32 %v1002, %v1374
          %v1413 = vmul.f32 %v1017, %v1389
          %1414 = vrot.lane.b32.xlu0 %v1390, 127
          %v1415 = vpop.permute.xlu0 %1414
          %1416 = vrot.lane.b32.xlu0 %v1392, 127
          %v1417 = vpop.permute.xlu0 %1416
          %1418 = vrot.lane.b32.xlu0 %v1394, 127
          %v1419 = vpop.permute.xlu0 %1418
          %1420 = vrot.lane.b32.xlu0 %v1396, 127
          %v1421 = vpop.permute.xlu0 %1420
          %1422 = vrot.lane.b32.xlu0 %v1398, 127
          %v1423 = vpop.permute.xlu0 %1422
          %1424 = vrot.lane.b32.xlu0 %v1400, 127
          %v1425 = vpop.permute.xlu0 %1424
          %1426 = vrot.lane.b32.xlu0 %v1391, 127
          %v1427 = vpop.permute.xlu0 %1426
          %1428 = vrot.lane.b32.xlu0 %v1393, 127
          %v1429 = vpop.permute.xlu0 %1428
          %1430 = vrot.lane.b32.xlu0 %v1395, 127
          %v1431 = vpop.permute.xlu0 %1430
          %1432 = vrot.lane.b32.xlu0 %v1397, 127
          %v1433 = vpop.permute.xlu0 %1432
          %1434 = vrot.lane.b32.xlu0 %v1399, 127
          %v1435 = vpop.permute.xlu0 %1434
          %1436 = vrot.lane.b32.xlu0 %v1401, 127
          %v1437 = vpop.permute.xlu0 %1436
          %v1438 = vsel %vm507, %v1415, %v1427
          %v1439 = vsel %vm507, %v1417, %v1429
          %v1440 = vsel %vm507, %v1419, %v1431
          %v1441 = vsel %vm507, %v1421, %v1433
          %v1442 = vsel %vm507, %v1423, %v1435
          %v1443 = vsel %vm507, %v1425, %v1437
          %v1444 = vsel %vm507, %v1427, %v1415
          %v1445 = vsel %vm507, %v1429, %v1417
          %v1446 = vsel %vm507, %v1431, %v1419
          %v1447 = vsel %vm507, %v1433, %v1421
          %v1448 = vsel %vm507, %v1435, %v1423
          %v1449 = vsel %vm507, %v1437, %v1425
          %v1450 = vsel %vm522, %v1438, 0.0
          %v1451 = vsel %vm523, %v1444, 0.0
          %v1452 = vsel %vm522, %v1439, 0.0
          %v1453 = vsel %vm523, %v1445, 0.0
          %v1454 = vsel %vm522, %v1440, 0.0
          %v1455 = vsel %vm523, %v1446, 0.0
          %v1456 = vsel %vm522, %v1441, 0.0
          %v1457 = vsel %vm523, %v1447, 0.0
          %v1458 = vsel %vm522, %v1442, 0.0
          %v1459 = vsel %vm523, %v1448, 0.0
          %v1460 = vsel %vm522, %v1443, 0.0
          %v1461 = vsel %vm523, %v1449, 0.0
          %1462 = vrot.lane.b32.xlu0 %v1390, 1
          %v1463 = vpop.permute.xlu0 %1462
          %1464 = vrot.lane.b32.xlu0 %v1392, 1
          %v1465 = vpop.permute.xlu0 %1464
          %1466 = vrot.lane.b32.xlu0 %v1394, 1
          %v1467 = vpop.permute.xlu0 %1466
          %1468 = vrot.lane.b32.xlu0 %v1396, 1
          %v1469 = vpop.permute.xlu0 %1468
          %1470 = vrot.lane.b32.xlu0 %v1398, 1
          %v1471 = vpop.permute.xlu0 %1470
          %1472 = vrot.lane.b32.xlu0 %v1400, 1
          %v1473 = vpop.permute.xlu0 %1472
          %1474 = vrot.lane.b32.xlu0 %v1391, 1
          %v1475 = vpop.permute.xlu0 %1474
          %1476 = vrot.lane.b32.xlu0 %v1393, 1
          %v1477 = vpop.permute.xlu0 %1476
          %1478 = vrot.lane.b32.xlu0 %v1395, 1
          %v1479 = vpop.permute.xlu0 %1478
          %1480 = vrot.lane.b32.xlu0 %v1397, 1
          %v1481 = vpop.permute.xlu0 %1480
          %1482 = vrot.lane.b32.xlu0 %v1399, 1
          %v1483 = vpop.permute.xlu0 %1482
          %1484 = vrot.lane.b32.xlu0 %v1401, 1
          %v1485 = vpop.permute.xlu0 %1484
          %v1486 = vsel %vm454, %v1463, %v1475
          %v1487 = vsel %vm454, %v1465, %v1477
          %v1488 = vsel %vm454, %v1467, %v1479
          %v1489 = vsel %vm454, %v1469, %v1481
          %v1490 = vsel %vm454, %v1471, %v1483
          %v1491 = vsel %vm454, %v1473, %v1485
          %v1492 = vsel %vm454, %v1475, %v1463
          %v1493 = vsel %vm454, %v1477, %v1465
          %v1494 = vsel %vm454, %v1479, %v1467
          %v1495 = vsel %vm454, %v1481, %v1469
          %v1496 = vsel %vm454, %v1483, %v1471
          %v1497 = vsel %vm454, %v1485, %v1473
          %v1498 = vsel %vm469, %v1492, 0.0
          %v1499 = vsel %vm470, %v1486, 0.0
          %v1500 = vsel %vm469, %v1493, 0.0
          %v1501 = vsel %vm470, %v1487, 0.0
          %v1502 = vsel %vm469, %v1494, 0.0
          %v1503 = vsel %vm470, %v1488, 0.0
          %v1504 = vsel %vm469, %v1495, 0.0
          %v1505 = vsel %vm470, %v1489, 0.0
          %v1506 = vsel %vm469, %v1496, 0.0
          %v1507 = vsel %vm470, %v1490, 0.0
          %v1508 = vsel %vm469, %v1497, 0.0
          %v1509 = vsel %vm470, %v1491, 0.0
          %v1510 = vsub.f32 %v1450, %v1498
          %v1511 = vsub.f32 %v1451, %v1499
          %v1512 = vsub.f32 %v1452, %v1500
          %v1513 = vsub.f32 %v1453, %v1501
          %v1514 = vsub.f32 %v1454, %v1502
          %v1515 = vsub.f32 %v1455, %v1503
          %v1516 = vsub.f32 %v1456, %v1504
          %v1517 = vsub.f32 %v1457, %v1505
          %v1518 = vsub.f32 %v1458, %v1506
          %v1519 = vsub.f32 %v1459, %v1507
          %v1520 = vsub.f32 %v1460, %v1508
          %v1521 = vsub.f32 %v1461, %v1509
          %v1522 = vrot.slane %v1402, 1
          %v1523 = vrot.slane %v1403, 1
          %v1524 = vrot.slane %v1404, 1
          %v1525 = vrot.slane %v1405, 1
          %v1526 = vrot.slane %v1406, 1
          %v1527 = vrot.slane %v1407, 1
          %v1528 = vrot.slane %v1408, 1
          %v1529 = vrot.slane %v1409, 1
          %v1530 = vrot.slane %v1410, 1
          %v1531 = vrot.slane %v1411, 1
          %v1532 = vrot.slane %v1412, 1
          %v1533 = vrot.slane %v1413, 1
          %v1534 = vsel %vm789, %v1530, %v1532
          %v1535 = vsel %vm789, %v1531, %v1533
          %v1536 = vsel %vm789, %v1528, %v1530
          %v1537 = vsel %vm789, %v1529, %v1531
          %v1538 = vsel %vm789, %v1526, %v1528
          %v1539 = vsel %vm789, %v1527, %v1529
          %v1540 = vsel %vm789, %v1524, %v1526
          %v1541 = vsel %vm789, %v1525, %v1527
          %v1542 = vsel %vm789, %v1522, %v1524
          %v1543 = vsel %vm789, %v1523, %v1525
          %v1544 = vsel %vm789, %v1532, %v1522
          %v1545 = vsel %vm789, %v1533, %v1523
          %v1546 = vsel %vm808, %v1542, 0.0
          %v1547 = vsel %vm808, %v1543, 0.0
          %v1548 = vsel %vm809, %v1540, 0.0
          %v1549 = vsel %vm809, %v1541, 0.0
          %v1550 = vsel %vm810, %v1538, 0.0
          %v1551 = vsel %vm810, %v1539, 0.0
          %v1552 = vsel %vm811, %v1536, 0.0
          %v1553 = vsel %vm811, %v1537, 0.0
          %v1554 = vsel %vm812, %v1534, 0.0
          %v1555 = vsel %vm812, %v1535, 0.0
          %v1556 = vsel %vm813, %v1544, 0.0
          %v1557 = vsel %vm813, %v1545, 0.0
          %v1558 = vrot.slane %v1402, 7
          %v1559 = vrot.slane %v1403, 7
          %v1560 = vrot.slane %v1404, 7
          %v1561 = vrot.slane %v1405, 7
          %v1562 = vrot.slane %v1406, 7
          %v1563 = vrot.slane %v1407, 7
          %v1564 = vrot.slane %v1408, 7
          %v1565 = vrot.slane %v1409, 7
          %v1566 = vrot.slane %v1410, 7
          %v1567 = vrot.slane %v1411, 7
          %v1568 = vrot.slane %v1412, 7
          %v1569 = vrot.slane %v1413, 7
          %v1570 = vsel %vm740, %v1566, %v1568
          %v1571 = vsel %vm740, %v1567, %v1569
          %v1572 = vsel %vm740, %v1564, %v1566
          %v1573 = vsel %vm740, %v1565, %v1567
          %v1574 = vsel %vm740, %v1562, %v1564
          %v1575 = vsel %vm740, %v1563, %v1565
          %v1576 = vsel %vm740, %v1560, %v1562
          %v1577 = vsel %vm740, %v1561, %v1563
          %v1578 = vsel %vm740, %v1558, %v1560
          %v1579 = vsel %vm740, %v1559, %v1561
          %v1580 = vsel %vm740, %v1568, %v1558
          %v1581 = vsel %vm740, %v1569, %v1559
          %v1582 = vsel %vm759, %v1580, 0.0
          %v1583 = vsel %vm759, %v1581, 0.0
          %v1584 = vsel %vm760, %v1578, 0.0
          %v1585 = vsel %vm760, %v1579, 0.0
          %v1586 = vsel %vm761, %v1576, 0.0
          %v1587 = vsel %vm761, %v1577, 0.0
          %v1588 = vsel %vm762, %v1574, 0.0
          %v1589 = vsel %vm762, %v1575, 0.0
          %v1590 = vsel %vm763, %v1572, 0.0
          %v1591 = vsel %vm763, %v1573, 0.0
          %v1592 = vsel %vm764, %v1570, 0.0
          %v1593 = vsel %vm764, %v1571, 0.0
          %v1594 = vsub.f32 %v1546, %v1582
          %v1595 = vsub.f32 %v1547, %v1583
          %v1596 = vsub.f32 %v1548, %v1584
          %v1597 = vsub.f32 %v1549, %v1585
          %v1598 = vsub.f32 %v1550, %v1586
          %v1599 = vsub.f32 %v1551, %v1587
          %v1600 = vsub.f32 %v1552, %v1588
          %v1601 = vsub.f32 %v1553, %v1589
          %v1602 = vsub.f32 %v1554, %v1590
          %v1603 = vsub.f32 %v1555, %v1591
          %v1604 = vsub.f32 %v1556, %v1592
          %v1605 = vsub.f32 %v1557, %v1593
          %v1606 = vadd.f32 %v1510, %v1594
          %v1607 = vadd.f32 %v1511, %v1595
          %v1608 = vadd.f32 %v1512, %v1596
          %v1609 = vadd.f32 %v1513, %v1597
          %v1610 = vadd.f32 %v1514, %v1598
          %v1611 = vadd.f32 %v1515, %v1599
          %v1612 = vadd.f32 %v1516, %v1600
          %v1613 = vadd.f32 %v1517, %v1601
          %v1614 = vadd.f32 %v1518, %v1602
          %v1615 = vadd.f32 %v1519, %v1603
          %v1616 = vadd.f32 %v1520, %v1604
          %v1617 = vadd.f32 %v1521, %v1605
          %v1618 = vrot.slane %v1606, 7
          %v1619 = vrot.slane %v1607, 7
          %v1620 = vrot.slane %v1608, 7
          %v1621 = vrot.slane %v1609, 7
          %v1622 = vrot.slane %v1610, 7
          %v1623 = vrot.slane %v1611, 7
          %v1624 = vrot.slane %v1612, 7
          %v1625 = vrot.slane %v1613, 7
          %v1626 = vrot.slane %v1616, 7
          %v1627 = vrot.slane %v1617, 7
          %v1628 = vsel %vm740, %v1622, %v1624
          %v1629 = vsel %vm740, %v1623, %v1625
          %v1630 = vsel %vm740, %v1620, %v1622
          %v1631 = vsel %vm740, %v1621, %v1623
          %v1632 = vsel %vm740, %v1618, %v1620
          %v1633 = vsel %vm740, %v1619, %v1621
          %v1634 = vsel %vm740, %v1626, %v1618
          %v1635 = vsel %vm740, %v1627, %v1619
          %v1636 = vsel %vm759, %v1634, 0.0
          %v1637 = vsel %vm759, %v1635, 0.0
          %v1638 = vsel %vm760, %v1632, 0.0
          %v1639 = vsel %vm760, %v1633, 0.0
          %v1640 = vsel %vm761, %v1630, 0.0
          %v1641 = vsel %vm761, %v1631, 0.0
          %v1642 = vsel %vm762, %v1628, 0.0
          %v1643 = vsel %vm762, %v1629, 0.0
          %v1644 = vadd.f32 %v1636, %v1606
          %v1645 = vadd.f32 %v1637, %v1607
          %v1646 = vadd.f32 %v1638, %v1608
          %v1647 = vadd.f32 %v1639, %v1609
          %v1648 = vadd.f32 %v1640, %v1610
          %v1649 = vadd.f32 %v1641, %v1611
          %v1650 = vadd.f32 %v1642, %v1612
          %v1651 = vadd.f32 %v1643, %v1613
          %v1652 = vrot.slane %v1606, 1
          %v1653 = vrot.slane %v1607, 1
          %v1654 = vrot.slane %v1608, 1
          %v1655 = vrot.slane %v1609, 1
          %v1656 = vrot.slane %v1610, 1
          %v1657 = vrot.slane %v1611, 1
          %v1658 = vrot.slane %v1612, 1
          %v1659 = vrot.slane %v1613, 1
          %v1660 = vrot.slane %v1614, 1
          %v1661 = vrot.slane %v1615, 1
          %v1662 = vsel %vm789, %v1658, %v1660
          %v1663 = vsel %vm789, %v1659, %v1661
          %v1664 = vsel %vm789, %v1656, %v1658
          %v1665 = vsel %vm789, %v1657, %v1659
          %v1666 = vsel %vm789, %v1654, %v1656
          %v1667 = vsel %vm789, %v1655, %v1657
          %v1668 = vsel %vm789, %v1652, %v1654
          %v1669 = vsel %vm789, %v1653, %v1655
          %v1670 = vsel %vm808, %v1668, 0.0
          %v1671 = vsel %vm808, %v1669, 0.0
          %v1672 = vsel %vm809, %v1666, 0.0
          %v1673 = vsel %vm809, %v1667, 0.0
          %v1674 = vsel %vm810, %v1664, 0.0
          %v1675 = vsel %vm810, %v1665, 0.0
          %v1676 = vsel %vm811, %v1662, 0.0
          %v1677 = vsel %vm811, %v1663, 0.0
          %v1678 = vadd.f32 %v1644, %v1670
          %v1679 = vadd.f32 %v1645, %v1671
          %v1680 = vadd.f32 %v1646, %v1672
          %v1681 = vadd.f32 %v1647, %v1673
          %v1682 = vadd.f32 %v1648, %v1674
          %v1683 = vadd.f32 %v1649, %v1675
          %v1684 = vadd.f32 %v1650, %v1676
          %v1685 = vadd.f32 %v1651, %v1677
          %1686 = vrot.lane.b32.xlu0 %v1678, 1
          %v1687 = vpop.permute.xlu0 %1686
          %1688 = vrot.lane.b32.xlu0 %v1680, 1
          %v1689 = vpop.permute.xlu0 %1688
          %1690 = vrot.lane.b32.xlu0 %v1682, 1
          %v1691 = vpop.permute.xlu0 %1690
          %1692 = vrot.lane.b32.xlu0 %v1684, 1
          %v1693 = vpop.permute.xlu0 %1692
          %1694 = vrot.lane.b32.xlu0 %v1679, 1
          %v1695 = vpop.permute.xlu0 %1694
          %1696 = vrot.lane.b32.xlu0 %v1681, 1
          %v1697 = vpop.permute.xlu0 %1696
          %1698 = vrot.lane.b32.xlu0 %v1683, 1
          %v1699 = vpop.permute.xlu0 %1698
          %1700 = vrot.lane.b32.xlu0 %v1685, 1
          %v1701 = vpop.permute.xlu0 %1700
          %v1702 = vsel %vm454, %v1687, %v1695
          %v1703 = vsel %vm454, %v1689, %v1697
          %v1704 = vsel %vm454, %v1691, %v1699
          %v1705 = vsel %vm454, %v1693, %v1701
          %v1706 = vsel %vm454, %v1695, %v1687
          %v1707 = vsel %vm454, %v1697, %v1689
          %v1708 = vsel %vm454, %v1699, %v1691
          %v1709 = vsel %vm454, %v1701, %v1693
          %v1710 = vsel %vm469, %v1706, 0.0
          %v1711 = vsel %vm470, %v1702, 0.0
          %v1712 = vsel %vm469, %v1707, 0.0
          %v1713 = vsel %vm470, %v1703, 0.0
          %v1714 = vsel %vm469, %v1708, 0.0
          %v1715 = vsel %vm470, %v1704, 0.0
          %v1716 = vsel %vm469, %v1709, 0.0
          %v1717 = vsel %vm470, %v1705, 0.0
          %v1718 = vadd.f32 %v1710, %v1678
          %v1719 = vadd.f32 %v1711, %v1679
          %v1720 = vadd.f32 %v1712, %v1680
          %v1721 = vadd.f32 %v1713, %v1681
          %v1722 = vadd.f32 %v1714, %v1682
          %v1723 = vadd.f32 %v1715, %v1683
          %v1724 = vadd.f32 %v1716, %v1684
          %v1725 = vadd.f32 %v1717, %v1685
          %1726 = vrot.lane.b32.xlu0 %v1678, 127
          %v1727 = vpop.permute.xlu0 %1726
          %1728 = vrot.lane.b32.xlu0 %v1680, 127
          %v1729 = vpop.permute.xlu0 %1728
          %1730 = vrot.lane.b32.xlu0 %v1682, 127
          %v1731 = vpop.permute.xlu0 %1730
          %1732 = vrot.lane.b32.xlu0 %v1684, 127
          %v1733 = vpop.permute.xlu0 %1732
          %1734 = vrot.lane.b32.xlu0 %v1679, 127
          %v1735 = vpop.permute.xlu0 %1734
          %1736 = vrot.lane.b32.xlu0 %v1681, 127
          %v1737 = vpop.permute.xlu0 %1736
          %1738 = vrot.lane.b32.xlu0 %v1683, 127
          %v1739 = vpop.permute.xlu0 %1738
          %1740 = vrot.lane.b32.xlu0 %v1685, 127
          %v1741 = vpop.permute.xlu0 %1740
          %v1742 = vsel %vm507, %v1727, %v1735
          %v1743 = vsel %vm507, %v1729, %v1737
          %v1744 = vsel %vm507, %v1731, %v1739
          %v1745 = vsel %vm507, %v1733, %v1741
          %v1746 = vsel %vm507, %v1735, %v1727
          %v1747 = vsel %vm507, %v1737, %v1729
          %v1748 = vsel %vm507, %v1739, %v1731
          %v1749 = vsel %vm507, %v1741, %v1733
          %v1750 = vsel %vm522, %v1742, 0.0
          %v1751 = vsel %vm523, %v1746, 0.0
          %v1752 = vsel %vm522, %v1743, 0.0
          %v1753 = vsel %vm523, %v1747, 0.0
          %v1754 = vsel %vm522, %v1744, 0.0
          %v1755 = vsel %vm523, %v1748, 0.0
          %v1756 = vsel %vm522, %v1745, 0.0
          %v1757 = vsel %vm523, %v1749, 0.0
          %v1758 = vadd.f32 %v1718, %v1750
          %v1759 = vadd.f32 %v1719, %v1751
          %v1760 = vadd.f32 %v1720, %v1752
          %v1761 = vadd.f32 %v1721, %v1753
          %v1762 = vadd.f32 %v1722, %v1754
          %v1763 = vadd.f32 %v1723, %v1755
          %v1764 = vadd.f32 %v1724, %v1756
          %v1765 = vadd.f32 %v1725, %v1757
          %v1766 = vand.u32 2147483647, %v1758
          %v1767 = vand.u32 2147483647, %v1759
          %v1768 = vand.u32 2147483647, %v1760
          %v1769 = vand.u32 2147483647, %v1761
          %v1770 = vand.u32 2147483647, %v1762
          %v1771 = vand.u32 2147483647, %v1763
          %v1772 = vand.u32 2147483647, %v1764
          %v1773 = vand.u32 2147483647, %v1765
          %v1774 = vmul.f32 %v1766, 0.027777778
          %v1775 = vmul.f32 %v1767, 0.027777778
          %v1776 = vmul.f32 %v1768, 0.027777778
          %v1777 = vmul.f32 %v1769, 0.027777778
          %v1778 = vmul.f32 %v1770, 0.027777778
          %v1779 = vmul.f32 %v1771, 0.027777778
          %v1780 = vmul.f32 %v1772, 0.027777778
          %v1781 = vmul.f32 %v1773, 0.027777778
          %1782 = vst [vmem:[%s196] sm:$0xff] %v1390
          %1783 = vst [vmem:[%s196 + $0x8] sm:$0xff] %v1391
          %1784 = vst [vmem:[%s196 + $0x10] sm:$0xff] %v1392
          %1785 = vst [vmem:[%s196 + $0x18] sm:$0xff] %v1393
          %1786 = vst [vmem:[%s196 + $0x20] sm:$0xff] %v1394
          %1787 = vst [vmem:[%s196 + $0x28] sm:$0xff] %v1395
          %1788 = vst [vmem:[%s196 + $0x30] sm:$0xff] %v1396
          %1789 = vst [vmem:[%s196 + $0x38] sm:$0xff] %v1397
          %s1790 = scalar_lea.vmem %s196, 64 [#allocation9]
          %1791 = vst [vmem:[%s1790] sm:$0xff] %v1402
          %1792 = vst [vmem:[%s1790 + $0x8] sm:$0xff] %v1403
          %1793 = vst [vmem:[%s1790 + $0x10] sm:$0xff] %v1404
          %1794 = vst [vmem:[%s1790 + $0x18] sm:$0xff] %v1405
          %1795 = vst [vmem:[%s1790 + $0x20] sm:$0xff] %v1406
          %1796 = vst [vmem:[%s1790 + $0x28] sm:$0xff] %v1407
          %1797 = vst [vmem:[%s1790 + $0x30] sm:$0xff] %v1408
          %1798 = vst [vmem:[%s1790 + $0x38] sm:$0xff] %v1409
          %s1799 = scalar_lea.vmem %s196, 128 [#allocation9]
          %1800 = vst [vmem:[%s1799] sm:$0xff] %v1224
          %1801 = vst [vmem:[%s1799 + $0x8] sm:$0xff] %v1239
          %1802 = vst [vmem:[%s1799 + $0x10] sm:$0xff] %v1254
          %1803 = vst [vmem:[%s1799 + $0x18] sm:$0xff] %v1269
          %1804 = vst [vmem:[%s1799 + $0x20] sm:$0xff] %v1284
          %1805 = vst [vmem:[%s1799 + $0x28] sm:$0xff] %v1299
          %1806 = vst [vmem:[%s1799 + $0x30] sm:$0xff] %v1314
          %1807 = vst [vmem:[%s1799 + $0x38] sm:$0xff] %v1329
          %1808 = vst [vmem:[%s203] sm:$0xff] %v1774
          %1809 = vst [vmem:[%s203 + $0x8] sm:$0xff] %v1775
          %1810 = vst [vmem:[%s203 + $0x10] sm:$0xff] %v1776
          %1811 = vst [vmem:[%s203 + $0x18] sm:$0xff] %v1777
          %1812 = vst [vmem:[%s203 + $0x20] sm:$0xff] %v1778
          %1813 = vst [vmem:[%s203 + $0x28] sm:$0xff] %v1779
          %1814 = vst [vmem:[%s203 + $0x30] sm:$0xff] %v1780
          %1815 = vst [vmem:[%s203 + $0x38] sm:$0xff] %v1781
        $region56: #{tpu_custom_call.1} parent=27 // pred_fallthru
          _
        %p1816 = scmp.gt.s32.totalorder %s29, 0
        %p1817 = pnand %p1816, %p247
        %p1818 = pneg %p1817
        // Predicated region
        $region57: #{tpu_custom_call.1} parent=27 // pred_check
          _
        $region58: #{tpu_custom_call.1} parent=27 // pred_check_branch
          %1820 = sbr.rel (%p1817) target = $region60
        $region59: #{tpu_custom_call.1} parent=27 // pred_region
          %v1821 = vstv %s299
          %v1822 = vmul.f32 %v365, %v1821
          %v1823 = vmul.f32 %v366, %v1821
          %v1824 = vmul.f32 %v367, %v1821
          %v1825 = vmul.f32 %v368, %v1821
          %v1826 = vmul.f32 %v369, %v1821
          %v1827 = vmul.f32 %v370, %v1821
          %v1828 = vmul.f32 %v371, %v1821
          %v1829 = vmul.f32 %v372, %v1821
          %v1830 = vmul.f32 %v373, %v1821
          %v1831 = vmul.f32 %v374, %v1821
          %v1832 = vmul.f32 %v375, %v1821
          %v1833 = vmul.f32 %v376, %v1821
          %v1834 = vadd.f32 %v1822, 2e-06
          %v1835 = vadd.f32 %v1823, 2e-06
          %v1836 = vadd.f32 %v1824, 2e-06
          %v1837 = vadd.f32 %v1825, 2e-06
          %v1838 = vadd.f32 %v1826, 2e-06
          %v1839 = vadd.f32 %v1827, 2e-06
          %v1840 = vadd.f32 %v1828, 2e-06
          %v1841 = vadd.f32 %v1829, 2e-06
          %v1842 = vadd.f32 %v1830, 2e-06
          %v1843 = vadd.f32 %v1831, 2e-06
          %v1844 = vadd.f32 %v1832, 2e-06
          %v1845 = vadd.f32 %v1833, 2e-06
          %v1846 = vstv %s317
          %v1847 = vmul.f32 %v365, %v1846
          %v1848 = vmul.f32 %v366, %v1846
          %v1849 = vmul.f32 %v367, %v1846
          %v1850 = vmul.f32 %v368, %v1846
          %v1851 = vmul.f32 %v369, %v1846
          %v1852 = vmul.f32 %v370, %v1846
          %v1853 = vmul.f32 %v371, %v1846
          %v1854 = vmul.f32 %v372, %v1846
          %v1855 = vmul.f32 %v373, %v1846
          %v1856 = vmul.f32 %v374, %v1846
          %v1857 = vmul.f32 %v375, %v1846
          %v1858 = vmul.f32 %v376, %v1846
          %v1859 = vadd.f32 %v1847, 2e-06
          %v1860 = vadd.f32 %v1848, 2e-06
          %v1861 = vadd.f32 %v1849, 2e-06
          %v1862 = vadd.f32 %v1850, 2e-06
          %v1863 = vadd.f32 %v1851, 2e-06
          %v1864 = vadd.f32 %v1852, 2e-06
          %v1865 = vadd.f32 %v1853, 2e-06
          %v1866 = vadd.f32 %v1854, 2e-06
          %v1867 = vadd.f32 %v1855, 2e-06
          %v1868 = vadd.f32 %v1856, 2e-06
          %v1869 = vadd.f32 %v1857, 2e-06
          %v1870 = vadd.f32 %v1858, 2e-06
          %1871 = vrot.lane.b32.xlu0 %v365, 1
          %v1872 = vpop.permute.xlu0 %1871
          %1873 = vrot.lane.b32.xlu0 %v367, 1
          %v1874 = vpop.permute.xlu0 %1873
          %1875 = vrot.lane.b32.xlu0 %v369, 1
          %v1876 = vpop.permute.xlu0 %1875
          %1877 = vrot.lane.b32.xlu0 %v371, 1
          %v1878 = vpop.permute.xlu0 %1877
          %1879 = vrot.lane.b32.xlu0 %v373, 1
          %v1880 = vpop.permute.xlu0 %1879
          %1881 = vrot.lane.b32.xlu0 %v375, 1
          %v1882 = vpop.permute.xlu0 %1881
          %1883 = vrot.lane.b32.xlu0 %v366, 1
          %v1884 = vpop.permute.xlu0 %1883
          %1885 = vrot.lane.b32.xlu0 %v368, 1
          %v1886 = vpop.permute.xlu0 %1885
          %1887 = vrot.lane.b32.xlu0 %v370, 1
          %v1888 = vpop.permute.xlu0 %1887
          %1889 = vrot.lane.b32.xlu0 %v372, 1
          %v1890 = vpop.permute.xlu0 %1889
          %1891 = vrot.lane.b32.xlu0 %v374, 1
          %v1892 = vpop.permute.xlu0 %1891
          %1893 = vrot.lane.b32.xlu0 %v376, 1
          %v1894 = vpop.permute.xlu0 %1893
          %vm1895 = vcmp.lt.s32.totalorder %v339, 1
          %v1896 = vsel %vm1895, %v1872, %v1884
          %v1897 = vsel %vm1895, %v1874, %v1886
          %v1898 = vsel %vm1895, %v1876, %v1888
          %v1899 = vsel %vm1895, %v1878, %v1890
          %v1900 = vsel %vm1895, %v1880, %v1892
          %v1901 = vsel %vm1895, %v1882, %v1894
          %v1902 = vsel %vm1895, %v1884, %v1872
          %v1903 = vsel %vm1895, %v1886, %v1874
          %v1904 = vsel %vm1895, %v1888, %v1876
          %v1905 = vsel %vm1895, %v1890, %v1878
          %v1906 = vsel %vm1895, %v1892, %v1880
          %v1907 = vsel %vm1895, %v1894, %v1882
          %v1908 = vsel %vm355, 1, 0
          %v1909 = vsel %vm356, 1, 0
          %vm1910 = vcmp.eq.s32.totalorder %v1908, 1
          %vm1911 = vcmp.eq.s32.totalorder %v1909, 1
          %v1912 = vsel %vm1910, %v1902, 0.0
          %v1913 = vsel %vm1911, %v1896, 0.0
          %v1914 = vsel %vm1910, %v1903, 0.0
          %v1915 = vsel %vm1911, %v1897, 0.0
          %v1916 = vsel %vm1910, %v1904, 0.0
          %v1917 = vsel %vm1911, %v1898, 0.0
          %v1918 = vsel %vm1910, %v1905, 0.0
          %v1919 = vsel %vm1911, %v1899, 0.0
          %v1920 = vsel %vm1910, %v1906, 0.0
          %v1921 = vsel %vm1911, %v1900, 0.0
          %v1922 = vsel %vm1910, %v1907, 0.0
          %v1923 = vsel %vm1911, %v1901, 0.0
          %1924 = vrot.lane.b32.xlu0 %v365, 127
          %v1925 = vpop.permute.xlu0 %1924
          %1926 = vrot.lane.b32.xlu0 %v367, 127
          %v1927 = vpop.permute.xlu0 %1926
          %1928 = vrot.lane.b32.xlu0 %v369, 127
          %v1929 = vpop.permute.xlu0 %1928
          %1930 = vrot.lane.b32.xlu0 %v371, 127
          %v1931 = vpop.permute.xlu0 %1930
          %1932 = vrot.lane.b32.xlu0 %v373, 127
          %v1933 = vpop.permute.xlu0 %1932
          %1934 = vrot.lane.b32.xlu0 %v375, 127
          %v1935 = vpop.permute.xlu0 %1934
          %1936 = vrot.lane.b32.xlu0 %v366, 127
          %v1937 = vpop.permute.xlu0 %1936
          %1938 = vrot.lane.b32.xlu0 %v368, 127
          %v1939 = vpop.permute.xlu0 %1938
          %1940 = vrot.lane.b32.xlu0 %v370, 127
          %v1941 = vpop.permute.xlu0 %1940
          %1942 = vrot.lane.b32.xlu0 %v372, 127
          %v1943 = vpop.permute.xlu0 %1942
          %1944 = vrot.lane.b32.xlu0 %v374, 127
          %v1945 = vpop.permute.xlu0 %1944
          %1946 = vrot.lane.b32.xlu0 %v376, 127
          %v1947 = vpop.permute.xlu0 %1946
          %vm1948 = vcmp.lt.s32.totalorder %v339, 127
          %v1949 = vsel %vm1948, %v1925, %v1937
          %v1950 = vsel %vm1948, %v1927, %v1939
          %v1951 = vsel %vm1948, %v1929, %v1941
          %v1952 = vsel %vm1948, %v1931, %v1943
          %v1953 = vsel %vm1948, %v1933, %v1945
          %v1954 = vsel %vm1948, %v1935, %v1947
          %v1955 = vsel %vm1948, %v1937, %v1925
          %v1956 = vsel %vm1948, %v1939, %v1927
          %v1957 = vsel %vm1948, %v1941, %v1929
          %v1958 = vsel %vm1948, %v1943, %v1931
          %v1959 = vsel %vm1948, %v1945, %v1933
          %v1960 = vsel %vm1948, %v1947, %v1935
          %v1961 = vsel %vm353, 1, 0
          %v1962 = vsel %vm354, 1, 0
          %vm1963 = vcmp.eq.s32.totalorder %v1961, 1
          %vm1964 = vcmp.eq.s32.totalorder %v1962, 1
          %v1965 = vsel %vm1963, %v1949, 0.0
          %v1966 = vsel %vm1964, %v1955, 0.0
          %v1967 = vsel %vm1963, %v1950, 0.0
          %v1968 = vsel %vm1964, %v1956, 0.0
          %v1969 = vsel %vm1963, %v1951, 0.0
          %v1970 = vsel %vm1964, %v1957, 0.0
          %v1971 = vsel %vm1963, %v1952, 0.0
          %v1972 = vsel %vm1964, %v1958, 0.0
          %v1973 = vsel %vm1963, %v1953, 0.0
          %v1974 = vsel %vm1964, %v1959, 0.0
          %v1975 = vsel %vm1963, %v1954, 0.0
          %v1976 = vsel %vm1964, %v1960, 0.0
          %v1977 = vsub.f32 %v1912, %v1965
          %v1978 = vsub.f32 %v1913, %v1966
          %v1979 = vsub.f32 %v1914, %v1967
          %v1980 = vsub.f32 %v1915, %v1968
          %v1981 = vsub.f32 %v1916, %v1969
          %v1982 = vsub.f32 %v1917, %v1970
          %v1983 = vsub.f32 %v1918, %v1971
          %v1984 = vsub.f32 %v1919, %v1972
          %v1985 = vsub.f32 %v1920, %v1973
          %v1986 = vsub.f32 %v1921, %v1974
          %v1987 = vsub.f32 %v1922, %v1975
          %v1988 = vsub.f32 %v1923, %v1976
          %v1989 = vrcp.pop %v1834
          %v1990 = vmul.f32 %v1834, %v1989
          %v1991 = vsub.f32 1.0, %v1990
          %v1992 = vmul.f32 %v1989, %v1991
          %v1993 = vadd.f32 %v1989, %v1992
          %vm1994 = vweird.f32 %v1834
          %vm1995 = vweird.f32 %v1989
          %vm1996 = vmor %vm1994, %vm1995
          %v1997 = vsel %vm1996, %v1989, %v1993
          %v1998 = vand.u32 2147483647, %v1834
          %vm1999 = vcmp.eq.f32.partialorder %v1998, 8.507059e+37
          %v2000 = vand.u32 %v1834, 2147483648
          %v2001 = vor.u32 1.1754944e-38, %v2000
          %v2002 = vsel %vm1999, %v2001, %v1997
          %v2003 = vmul.f32 %v1977, %v2002
          %v2004 = vrcp.pop %v1835
          %v2005 = vmul.f32 %v1835, %v2004
          %v2006 = vsub.f32 1.0, %v2005
          %v2007 = vmul.f32 %v2004, %v2006
          %v2008 = vadd.f32 %v2004, %v2007
          %vm2009 = vweird.f32 %v1835
          %vm2010 = vweird.f32 %v2004
          %vm2011 = vmor %vm2009, %vm2010
          %v2012 = vsel %vm2011, %v2004, %v2008
          %v2013 = vand.u32 2147483647, %v1835
          %vm2014 = vcmp.eq.f32.partialorder %v2013, 8.507059e+37
          %v2015 = vand.u32 %v1835, 2147483648
          %v2016 = vor.u32 1.1754944e-38, %v2015
          %v2017 = vsel %vm2014, %v2016, %v2012
          %v2018 = vmul.f32 %v1978, %v2017
          %v2019 = vrcp.pop %v1836
          %v2020 = vmul.f32 %v1836, %v2019
          %v2021 = vsub.f32 1.0, %v2020
          %v2022 = vmul.f32 %v2019, %v2021
          %v2023 = vadd.f32 %v2019, %v2022
          %vm2024 = vweird.f32 %v1836
          %vm2025 = vweird.f32 %v2019
          %vm2026 = vmor %vm2024, %vm2025
          %v2027 = vsel %vm2026, %v2019, %v2023
          %v2028 = vand.u32 2147483647, %v1836
          %vm2029 = vcmp.eq.f32.partialorder %v2028, 8.507059e+37
          %v2030 = vand.u32 %v1836, 2147483648
          %v2031 = vor.u32 1.1754944e-38, %v2030
          %v2032 = vsel %vm2029, %v2031, %v2027
          %v2033 = vmul.f32 %v1979, %v2032
          %v2034 = vrcp.pop %v1837
          %v2035 = vmul.f32 %v1837, %v2034
          %v2036 = vsub.f32 1.0, %v2035
          %v2037 = vmul.f32 %v2034, %v2036
          %v2038 = vadd.f32 %v2034, %v2037
          %vm2039 = vweird.f32 %v1837
          %vm2040 = vweird.f32 %v2034
          %vm2041 = vmor %vm2039, %vm2040
          %v2042 = vsel %vm2041, %v2034, %v2038
          %v2043 = vand.u32 2147483647, %v1837
          %vm2044 = vcmp.eq.f32.partialorder %v2043, 8.507059e+37
          %v2045 = vand.u32 %v1837, 2147483648
          %v2046 = vor.u32 1.1754944e-38, %v2045
          %v2047 = vsel %vm2044, %v2046, %v2042
          %v2048 = vmul.f32 %v1980, %v2047
          %v2049 = vrcp.pop %v1838
          %v2050 = vmul.f32 %v1838, %v2049
          %v2051 = vsub.f32 1.0, %v2050
          %v2052 = vmul.f32 %v2049, %v2051
          %v2053 = vadd.f32 %v2049, %v2052
          %vm2054 = vweird.f32 %v1838
          %vm2055 = vweird.f32 %v2049
          %vm2056 = vmor %vm2054, %vm2055
          %v2057 = vsel %vm2056, %v2049, %v2053
          %v2058 = vand.u32 2147483647, %v1838
          %vm2059 = vcmp.eq.f32.partialorder %v2058, 8.507059e+37
          %v2060 = vand.u32 %v1838, 2147483648
          %v2061 = vor.u32 1.1754944e-38, %v2060
          %v2062 = vsel %vm2059, %v2061, %v2057
          %v2063 = vmul.f32 %v1981, %v2062
          %v2064 = vrcp.pop %v1839
          %v2065 = vmul.f32 %v1839, %v2064
          %v2066 = vsub.f32 1.0, %v2065
          %v2067 = vmul.f32 %v2064, %v2066
          %v2068 = vadd.f32 %v2064, %v2067
          %vm2069 = vweird.f32 %v1839
          %vm2070 = vweird.f32 %v2064
          %vm2071 = vmor %vm2069, %vm2070
          %v2072 = vsel %vm2071, %v2064, %v2068
          %v2073 = vand.u32 2147483647, %v1839
          %vm2074 = vcmp.eq.f32.partialorder %v2073, 8.507059e+37
          %v2075 = vand.u32 %v1839, 2147483648
          %v2076 = vor.u32 1.1754944e-38, %v2075
          %v2077 = vsel %vm2074, %v2076, %v2072
          %v2078 = vmul.f32 %v1982, %v2077
          %v2079 = vrcp.pop %v1840
          %v2080 = vmul.f32 %v1840, %v2079
          %v2081 = vsub.f32 1.0, %v2080
          %v2082 = vmul.f32 %v2079, %v2081
          %v2083 = vadd.f32 %v2079, %v2082
          %vm2084 = vweird.f32 %v1840
          %vm2085 = vweird.f32 %v2079
          %vm2086 = vmor %vm2084, %vm2085
          %v2087 = vsel %vm2086, %v2079, %v2083
          %v2088 = vand.u32 2147483647, %v1840
          %vm2089 = vcmp.eq.f32.partialorder %v2088, 8.507059e+37
          %v2090 = vand.u32 %v1840, 2147483648
          %v2091 = vor.u32 1.1754944e-38, %v2090
          %v2092 = vsel %vm2089, %v2091, %v2087
          %v2093 = vmul.f32 %v1983, %v2092
          %v2094 = vrcp.pop %v1841
          %v2095 = vmul.f32 %v1841, %v2094
          %v2096 = vsub.f32 1.0, %v2095
          %v2097 = vmul.f32 %v2094, %v2096
          %v2098 = vadd.f32 %v2094, %v2097
          %vm2099 = vweird.f32 %v1841
          %vm2100 = vweird.f32 %v2094
          %vm2101 = vmor %vm2099, %vm2100
          %v2102 = vsel %vm2101, %v2094, %v2098
          %v2103 = vand.u32 2147483647, %v1841
          %vm2104 = vcmp.eq.f32.partialorder %v2103, 8.507059e+37
          %v2105 = vand.u32 %v1841, 2147483648
          %v2106 = vor.u32 1.1754944e-38, %v2105
          %v2107 = vsel %vm2104, %v2106, %v2102
          %v2108 = vmul.f32 %v1984, %v2107
          %v2109 = vrcp.pop %v1842
          %v2110 = vmul.f32 %v1842, %v2109
          %v2111 = vsub.f32 1.0, %v2110
          %v2112 = vmul.f32 %v2109, %v2111
          %v2113 = vadd.f32 %v2109, %v2112
          %vm2114 = vweird.f32 %v1842
          %vm2115 = vweird.f32 %v2109
          %vm2116 = vmor %vm2114, %vm2115
          %v2117 = vsel %vm2116, %v2109, %v2113
          %v2118 = vand.u32 2147483647, %v1842
          %vm2119 = vcmp.eq.f32.partialorder %v2118, 8.507059e+37
          %v2120 = vand.u32 %v1842, 2147483648
          %v2121 = vor.u32 1.1754944e-38, %v2120
          %v2122 = vsel %vm2119, %v2121, %v2117
          %v2123 = vmul.f32 %v1985, %v2122
          %v2124 = vrcp.pop %v1843
          %v2125 = vmul.f32 %v1843, %v2124
          %v2126 = vsub.f32 1.0, %v2125
          %v2127 = vmul.f32 %v2124, %v2126
          %v2128 = vadd.f32 %v2124, %v2127
          %vm2129 = vweird.f32 %v1843
          %vm2130 = vweird.f32 %v2124
          %vm2131 = vmor %vm2129, %vm2130
          %v2132 = vsel %vm2131, %v2124, %v2128
          %v2133 = vand.u32 2147483647, %v1843
          %vm2134 = vcmp.eq.f32.partialorder %v2133, 8.507059e+37
          %v2135 = vand.u32 %v1843, 2147483648
          %v2136 = vor.u32 1.1754944e-38, %v2135
          %v2137 = vsel %vm2134, %v2136, %v2132
          %v2138 = vmul.f32 %v1986, %v2137
          %v2139 = vrcp.pop %v1844
          %v2140 = vmul.f32 %v1844, %v2139
          %v2141 = vsub.f32 1.0, %v2140
          %v2142 = vmul.f32 %v2139, %v2141
          %v2143 = vadd.f32 %v2139, %v2142
          %vm2144 = vweird.f32 %v1844
          %vm2145 = vweird.f32 %v2139
          %vm2146 = vmor %vm2144, %vm2145
          %v2147 = vsel %vm2146, %v2139, %v2143
          %v2148 = vand.u32 2147483647, %v1844
          %vm2149 = vcmp.eq.f32.partialorder %v2148, 8.507059e+37
          %v2150 = vand.u32 %v1844, 2147483648
          %v2151 = vor.u32 1.1754944e-38, %v2150
          %v2152 = vsel %vm2149, %v2151, %v2147
          %v2153 = vmul.f32 %v1987, %v2152
          %v2154 = vrcp.pop %v1845
          %v2155 = vmul.f32 %v1845, %v2154
          %v2156 = vsub.f32 1.0, %v2155
          %v2157 = vmul.f32 %v2154, %v2156
          %v2158 = vadd.f32 %v2154, %v2157
          %vm2159 = vweird.f32 %v1845
          %vm2160 = vweird.f32 %v2154
          %vm2161 = vmor %vm2159, %vm2160
          %v2162 = vsel %vm2161, %v2154, %v2158
          %v2163 = vand.u32 2147483647, %v1845
          %vm2164 = vcmp.eq.f32.partialorder %v2163, 8.507059e+37
          %v2165 = vand.u32 %v1845, 2147483648
          %v2166 = vor.u32 1.1754944e-38, %v2165
          %v2167 = vsel %vm2164, %v2166, %v2162
          %v2168 = vmul.f32 %v1988, %v2167
          %v2169 = vrot.slane %v365, 7
          %v2170 = vrot.slane %v366, 7
          %v2171 = vrot.slane %v367, 7
          %v2172 = vrot.slane %v368, 7
          %v2173 = vrot.slane %v369, 7
          %v2174 = vrot.slane %v370, 7
          %v2175 = vrot.slane %v371, 7
          %v2176 = vrot.slane %v372, 7
          %v2177 = vrot.slane %v373, 7
          %v2178 = vrot.slane %v374, 7
          %v2179 = vrot.slane %v375, 7
          %v2180 = vrot.slane %v376, 7
          %vm2181 = vcmp.lt.s32.totalorder %v325, 1
          %v2182 = vsel %vm2181, %v2177, %v2179
          %v2183 = vsel %vm2181, %v2178, %v2180
          %v2184 = vsel %vm2181, %v2175, %v2177
          %v2185 = vsel %vm2181, %v2176, %v2178
          %v2186 = vsel %vm2181, %v2173, %v2175
          %v2187 = vsel %vm2181, %v2174, %v2176
          %v2188 = vsel %vm2181, %v2171, %v2173
          %v2189 = vsel %vm2181, %v2172, %v2174
          %v2190 = vsel %vm2181, %v2169, %v2171
          %v2191 = vsel %vm2181, %v2170, %v2172
          %v2192 = vsel %vm2181, %v2179, %v2169
          %v2193 = vsel %vm2181, %v2180, %v2170
          %v2194 = vrot.slane %v365, 1
          %v2195 = vrot.slane %v366, 1
          %v2196 = vrot.slane %v367, 1
          %v2197 = vrot.slane %v368, 1
          %v2198 = vrot.slane %v369, 1
          %v2199 = vrot.slane %v370, 1
          %v2200 = vrot.slane %v371, 1
          %v2201 = vrot.slane %v372, 1
          %v2202 = vrot.slane %v373, 1
          %v2203 = vrot.slane %v374, 1
          %v2204 = vrot.slane %v375, 1
          %v2205 = vrot.slane %v376, 1
          %vm2206 = vcmp.lt.s32.totalorder %v325, 7
          %v2207 = vsel %vm2206, %v2202, %v2204
          %v2208 = vsel %vm2206, %v2203, %v2205
          %v2209 = vsel %vm2206, %v2200, %v2202
          %v2210 = vsel %vm2206, %v2201, %v2203
          %v2211 = vsel %vm2206, %v2198, %v2200
          %v2212 = vsel %vm2206, %v2199, %v2201
          %v2213 = vsel %vm2206, %v2196, %v2198
          %v2214 = vsel %vm2206, %v2197, %v2199
          %v2215 = vsel %vm2206, %v2194, %v2196
          %v2216 = vsel %vm2206, %v2195, %v2197
          %v2217 = vsel %vm2206, %v2204, %v2194
          %v2218 = vsel %vm2206, %v2205, %v2195
          %v2219 = vsub.f32 %v2192, %v2215
          %v2220 = vsub.f32 %v2193, %v2216
          %v2221 = vsub.f32 %v2190, %v2213
          %v2222 = vsub.f32 %v2191, %v2214
          %v2223 = vsub.f32 %v2188, %v2211
          %v2224 = vsub.f32 %v2189, %v2212
          %v2225 = vsub.f32 %v2186, %v2209
          %v2226 = vsub.f32 %v2187, %v2210
          %v2227 = vsub.f32 %v2184, %v2207
          %v2228 = vsub.f32 %v2185, %v2208
          %v2229 = vsub.f32 %v2182, %v2217
          %v2230 = vsub.f32 %v2183, %v2218
          %v2231 = vrcp.pop %v1859
          %v2232 = vmul.f32 %v1859, %v2231
          %v2233 = vsub.f32 1.0, %v2232
          %v2234 = vmul.f32 %v2231, %v2233
          %v2235 = vadd.f32 %v2231, %v2234
          %vm2236 = vweird.f32 %v1859
          %vm2237 = vweird.f32 %v2231
          %vm2238 = vmor %vm2236, %vm2237
          %v2239 = vsel %vm2238, %v2231, %v2235
          %v2240 = vand.u32 2147483647, %v1859
          %vm2241 = vcmp.eq.f32.partialorder %v2240, 8.507059e+37
          %v2242 = vand.u32 %v1859, 2147483648
          %v2243 = vor.u32 1.1754944e-38, %v2242
          %v2244 = vsel %vm2241, %v2243, %v2239
          %v2245 = vmul.f32 %v2219, %v2244
          %v2246 = vrcp.pop %v1860
          %v2247 = vmul.f32 %v1860, %v2246
          %v2248 = vsub.f32 1.0, %v2247
          %v2249 = vmul.f32 %v2246, %v2248
          %v2250 = vadd.f32 %v2246, %v2249
          %vm2251 = vweird.f32 %v1860
          %vm2252 = vweird.f32 %v2246
          %vm2253 = vmor %vm2251, %vm2252
          %v2254 = vsel %vm2253, %v2246, %v2250
          %v2255 = vand.u32 2147483647, %v1860
          %vm2256 = vcmp.eq.f32.partialorder %v2255, 8.507059e+37
          %v2257 = vand.u32 %v1860, 2147483648
          %v2258 = vor.u32 1.1754944e-38, %v2257
          %v2259 = vsel %vm2256, %v2258, %v2254
          %v2260 = vmul.f32 %v2220, %v2259
          %v2261 = vrcp.pop %v1861
          %v2262 = vmul.f32 %v1861, %v2261
          %v2263 = vsub.f32 1.0, %v2262
          %v2264 = vmul.f32 %v2261, %v2263
          %v2265 = vadd.f32 %v2261, %v2264
          %vm2266 = vweird.f32 %v1861
          %vm2267 = vweird.f32 %v2261
          %vm2268 = vmor %vm2266, %vm2267
          %v2269 = vsel %vm2268, %v2261, %v2265
          %v2270 = vand.u32 2147483647, %v1861
          %vm2271 = vcmp.eq.f32.partialorder %v2270, 8.507059e+37
          %v2272 = vand.u32 %v1861, 2147483648
          %v2273 = vor.u32 1.1754944e-38, %v2272
          %v2274 = vsel %vm2271, %v2273, %v2269
          %v2275 = vmul.f32 %v2221, %v2274
          %v2276 = vrcp.pop %v1862
          %v2277 = vmul.f32 %v1862, %v2276
          %v2278 = vsub.f32 1.0, %v2277
          %v2279 = vmul.f32 %v2276, %v2278
          %v2280 = vadd.f32 %v2276, %v2279
          %vm2281 = vweird.f32 %v1862
          %vm2282 = vweird.f32 %v2276
          %vm2283 = vmor %vm2281, %vm2282
          %v2284 = vsel %vm2283, %v2276, %v2280
          %v2285 = vand.u32 2147483647, %v1862
          %vm2286 = vcmp.eq.f32.partialorder %v2285, 8.507059e+37
          %v2287 = vand.u32 %v1862, 2147483648
          %v2288 = vor.u32 1.1754944e-38, %v2287
          %v2289 = vsel %vm2286, %v2288, %v2284
          %v2290 = vmul.f32 %v2222, %v2289
          %v2291 = vrcp.pop %v1863
          %v2292 = vmul.f32 %v1863, %v2291
          %v2293 = vsub.f32 1.0, %v2292
          %v2294 = vmul.f32 %v2291, %v2293
          %v2295 = vadd.f32 %v2291, %v2294
          %vm2296 = vweird.f32 %v1863
          %vm2297 = vweird.f32 %v2291
          %vm2298 = vmor %vm2296, %vm2297
          %v2299 = vsel %vm2298, %v2291, %v2295
          %v2300 = vand.u32 2147483647, %v1863
          %vm2301 = vcmp.eq.f32.partialorder %v2300, 8.507059e+37
          %v2302 = vand.u32 %v1863, 2147483648
          %v2303 = vor.u32 1.1754944e-38, %v2302
          %v2304 = vsel %vm2301, %v2303, %v2299
          %v2305 = vmul.f32 %v2223, %v2304
          %v2306 = vrcp.pop %v1864
          %v2307 = vmul.f32 %v1864, %v2306
          %v2308 = vsub.f32 1.0, %v2307
          %v2309 = vmul.f32 %v2306, %v2308
          %v2310 = vadd.f32 %v2306, %v2309
          %vm2311 = vweird.f32 %v1864
          %vm2312 = vweird.f32 %v2306
          %vm2313 = vmor %vm2311, %vm2312
          %v2314 = vsel %vm2313, %v2306, %v2310
          %v2315 = vand.u32 2147483647, %v1864
          %vm2316 = vcmp.eq.f32.partialorder %v2315, 8.507059e+37
          %v2317 = vand.u32 %v1864, 2147483648
          %v2318 = vor.u32 1.1754944e-38, %v2317
          %v2319 = vsel %vm2316, %v2318, %v2314
          %v2320 = vmul.f32 %v2224, %v2319
          %v2321 = vrcp.pop %v1865
          %v2322 = vmul.f32 %v1865, %v2321
          %v2323 = vsub.f32 1.0, %v2322
          %v2324 = vmul.f32 %v2321, %v2323
          %v2325 = vadd.f32 %v2321, %v2324
          %vm2326 = vweird.f32 %v1865
          %vm2327 = vweird.f32 %v2321
          %vm2328 = vmor %vm2326, %vm2327
          %v2329 = vsel %vm2328, %v2321, %v2325
          %v2330 = vand.u32 2147483647, %v1865
          %vm2331 = vcmp.eq.f32.partialorder %v2330, 8.507059e+37
          %v2332 = vand.u32 %v1865, 2147483648
          %v2333 = vor.u32 1.1754944e-38, %v2332
          %v2334 = vsel %vm2331, %v2333, %v2329
          %v2335 = vmul.f32 %v2225, %v2334
          %v2336 = vrcp.pop %v1866
          %v2337 = vmul.f32 %v1866, %v2336
          %v2338 = vsub.f32 1.0, %v2337
          %v2339 = vmul.f32 %v2336, %v2338
          %v2340 = vadd.f32 %v2336, %v2339
          %vm2341 = vweird.f32 %v1866
          %vm2342 = vweird.f32 %v2336
          %vm2343 = vmor %vm2341, %vm2342
          %v2344 = vsel %vm2343, %v2336, %v2340
          %v2345 = vand.u32 2147483647, %v1866
          %vm2346 = vcmp.eq.f32.partialorder %v2345, 8.507059e+37
          %v2347 = vand.u32 %v1866, 2147483648
          %v2348 = vor.u32 1.1754944e-38, %v2347
          %v2349 = vsel %vm2346, %v2348, %v2344
          %v2350 = vmul.f32 %v2226, %v2349
          %v2351 = vrcp.pop %v1867
          %v2352 = vmul.f32 %v1867, %v2351
          %v2353 = vsub.f32 1.0, %v2352
          %v2354 = vmul.f32 %v2351, %v2353
          %v2355 = vadd.f32 %v2351, %v2354
          %vm2356 = vweird.f32 %v1867
          %vm2357 = vweird.f32 %v2351
          %vm2358 = vmor %vm2356, %vm2357
          %v2359 = vsel %vm2358, %v2351, %v2355
          %v2360 = vand.u32 2147483647, %v1867
          %vm2361 = vcmp.eq.f32.partialorder %v2360, 8.507059e+37
          %v2362 = vand.u32 %v1867, 2147483648
          %v2363 = vor.u32 1.1754944e-38, %v2362
          %v2364 = vsel %vm2361, %v2363, %v2359
          %v2365 = vmul.f32 %v2227, %v2364
          %v2366 = vrcp.pop %v1868
          %v2367 = vmul.f32 %v1868, %v2366
          %v2368 = vsub.f32 1.0, %v2367
          %v2369 = vmul.f32 %v2366, %v2368
          %v2370 = vadd.f32 %v2366, %v2369
          %vm2371 = vweird.f32 %v1868
          %vm2372 = vweird.f32 %v2366
          %vm2373 = vmor %vm2371, %vm2372
          %v2374 = vsel %vm2373, %v2366, %v2370
          %v2375 = vand.u32 2147483647, %v1868
          %vm2376 = vcmp.eq.f32.partialorder %v2375, 8.507059e+37
          %v2377 = vand.u32 %v1868, 2147483648
          %v2378 = vor.u32 1.1754944e-38, %v2377
          %v2379 = vsel %vm2376, %v2378, %v2374
          %v2380 = vmul.f32 %v2228, %v2379
          %v2381 = vrcp.pop %v1869
          %v2382 = vmul.f32 %v1869, %v2381
          %v2383 = vsub.f32 1.0, %v2382
          %v2384 = vmul.f32 %v2381, %v2383
          %v2385 = vadd.f32 %v2381, %v2384
          %vm2386 = vweird.f32 %v1869
          %vm2387 = vweird.f32 %v2381
          %vm2388 = vmor %vm2386, %vm2387
          %v2389 = vsel %vm2388, %v2381, %v2385
          %v2390 = vand.u32 2147483647, %v1869
          %vm2391 = vcmp.eq.f32.partialorder %v2390, 8.507059e+37
          %v2392 = vand.u32 %v1869, 2147483648
          %v2393 = vor.u32 1.1754944e-38, %v2392
          %v2394 = vsel %vm2391, %v2393, %v2389
          %v2395 = vmul.f32 %v2229, %v2394
          %v2396 = vrcp.pop %v1870
          %v2397 = vmul.f32 %v1870, %v2396
          %v2398 = vsub.f32 1.0, %v2397
          %v2399 = vmul.f32 %v2396, %v2398
          %v2400 = vadd.f32 %v2396, %v2399
          %vm2401 = vweird.f32 %v1870
          %vm2402 = vweird.f32 %v2396
          %vm2403 = vmor %vm2401, %vm2402
          %v2404 = vsel %vm2403, %v2396, %v2400
          %v2405 = vand.u32 2147483647, %v1870
          %vm2406 = vcmp.eq.f32.partialorder %v2405, 8.507059e+37
          %v2407 = vand.u32 %v1870, 2147483648
          %v2408 = vor.u32 1.1754944e-38, %v2407
          %v2409 = vsel %vm2406, %v2408, %v2404
          %v2410 = vmul.f32 %v2230, %v2409
          %v2411 = vmul.f32 %v2003, %v2003
          %v2412 = vmul.f32 %v2018, %v2018
          %v2413 = vmul.f32 %v2033, %v2033
          %v2414 = vmul.f32 %v2048, %v2048
          %v2415 = vmul.f32 %v2063, %v2063
          %v2416 = vmul.f32 %v2078, %v2078
          %v2417 = vmul.f32 %v2093, %v2093
          %v2418 = vmul.f32 %v2108, %v2108
          %v2419 = vmul.f32 %v2123, %v2123
          %v2420 = vmul.f32 %v2138, %v2138
          %v2421 = vmul.f32 %v2153, %v2153
          %v2422 = vmul.f32 %v2168, %v2168
          %v2423 = vmul.f32 %v2245, %v2245
          %v2424 = vmul.f32 %v2260, %v2260
          %v2425 = vmul.f32 %v2275, %v2275
          %v2426 = vmul.f32 %v2290, %v2290
          %v2427 = vmul.f32 %v2305, %v2305
          %v2428 = vmul.f32 %v2320, %v2320
          %v2429 = vmul.f32 %v2335, %v2335
          %v2430 = vmul.f32 %v2350, %v2350
          %v2431 = vmul.f32 %v2365, %v2365
          %v2432 = vmul.f32 %v2380, %v2380
          %v2433 = vmul.f32 %v2395, %v2395
          %v2434 = vmul.f32 %v2410, %v2410
          %v2435 = vadd.f32 %v2411, %v2423
          %v2436 = vadd.f32 %v2412, %v2424
          %v2437 = vadd.f32 %v2413, %v2425
          %v2438 = vadd.f32 %v2414, %v2426
          %v2439 = vadd.f32 %v2415, %v2427
          %v2440 = vadd.f32 %v2416, %v2428
          %v2441 = vadd.f32 %v2417, %v2429
          %v2442 = vadd.f32 %v2418, %v2430
          %v2443 = vadd.f32 %v2419, %v2431
          %v2444 = vadd.f32 %v2420, %v2432
          %v2445 = vadd.f32 %v2421, %v2433
          %v2446 = vadd.f32 %v2422, %v2434
          %v2447 = vadd.f32 %v2435, 1.0
          %v2448 = vadd.f32 %v2436, 1.0
          %v2449 = vadd.f32 %v2437, 1.0
          %v2450 = vadd.f32 %v2438, 1.0
          %v2451 = vadd.f32 %v2439, 1.0
          %v2452 = vadd.f32 %v2440, 1.0
          %v2453 = vadd.f32 %v2441, 1.0
          %v2454 = vadd.f32 %v2442, 1.0
          %v2455 = vadd.f32 %v2443, 1.0
          %v2456 = vadd.f32 %v2444, 1.0
          %v2457 = vadd.f32 %v2445, 1.0
          %v2458 = vadd.f32 %v2446, 1.0
          %v2459 = vrsqrt.pop %v2447
          %v2460 = vmul.f32 %v2459, %v2447
          %v2461 = vmul.f32 %v2460, %v2459
          %v2462 = vmul.f32 0.5, %v2461
          %v2463 = vsub.f32 1.5, %v2462
          %v2464 = vmul.f32 %v2459, %v2463
          %v2465 = vmul.f32 %v2447, %v2464
          %vm2466 = vcmp.eq.f32.partialorder %v2447, inf
          %v2467 = vsel %vm2466, %v2447, %v2465
          %vm2468 = vcmp.eq.f32.partialorder %v2447, 0.0
          %v2469 = vand.u32 %v2447, 2147483648
          %v2470 = vsel %vm2468, %v2469, %v2467
          %v2471 = vrsqrt.pop %v2448
          %v2472 = vmul.f32 %v2471, %v2448
          %v2473 = vmul.f32 %v2472, %v2471
          %v2474 = vmul.f32 0.5, %v2473
          %v2475 = vsub.f32 1.5, %v2474
          %v2476 = vmul.f32 %v2471, %v2475
          %v2477 = vmul.f32 %v2448, %v2476
          %vm2478 = vcmp.eq.f32.partialorder %v2448, inf
          %v2479 = vsel %vm2478, %v2448, %v2477
          %vm2480 = vcmp.eq.f32.partialorder %v2448, 0.0
          %v2481 = vand.u32 %v2448, 2147483648
          %v2482 = vsel %vm2480, %v2481, %v2479
          %v2483 = vrsqrt.pop %v2449
          %v2484 = vmul.f32 %v2483, %v2449
          %v2485 = vmul.f32 %v2484, %v2483
          %v2486 = vmul.f32 0.5, %v2485
          %v2487 = vsub.f32 1.5, %v2486
          %v2488 = vmul.f32 %v2483, %v2487
          %v2489 = vmul.f32 %v2449, %v2488
          %vm2490 = vcmp.eq.f32.partialorder %v2449, inf
          %v2491 = vsel %vm2490, %v2449, %v2489
          %vm2492 = vcmp.eq.f32.partialorder %v2449, 0.0
          %v2493 = vand.u32 %v2449, 2147483648
          %v2494 = vsel %vm2492, %v2493, %v2491
          %v2495 = vrsqrt.pop %v2450
          %v2496 = vmul.f32 %v2495, %v2450
          %v2497 = vmul.f32 %v2496, %v2495
          %v2498 = vmul.f32 0.5, %v2497
          %v2499 = vsub.f32 1.5, %v2498
          %v2500 = vmul.f32 %v2495, %v2499
          %v2501 = vmul.f32 %v2450, %v2500
          %vm2502 = vcmp.eq.f32.partialorder %v2450, inf
          %v2503 = vsel %vm2502, %v2450, %v2501
          %vm2504 = vcmp.eq.f32.partialorder %v2450, 0.0
          %v2505 = vand.u32 %v2450, 2147483648
          %v2506 = vsel %vm2504, %v2505, %v2503
          %v2507 = vrsqrt.pop %v2451
          %v2508 = vmul.f32 %v2507, %v2451
          %v2509 = vmul.f32 %v2508, %v2507
          %v2510 = vmul.f32 0.5, %v2509
          %v2511 = vsub.f32 1.5, %v2510
          %v2512 = vmul.f32 %v2507, %v2511
          %v2513 = vmul.f32 %v2451, %v2512
          %vm2514 = vcmp.eq.f32.partialorder %v2451, inf
          %v2515 = vsel %vm2514, %v2451, %v2513
          %vm2516 = vcmp.eq.f32.partialorder %v2451, 0.0
          %v2517 = vand.u32 %v2451, 2147483648
          %v2518 = vsel %vm2516, %v2517, %v2515
          %v2519 = vrsqrt.pop %v2452
          %v2520 = vmul.f32 %v2519, %v2452
          %v2521 = vmul.f32 %v2520, %v2519
          %v2522 = vmul.f32 0.5, %v2521
          %v2523 = vsub.f32 1.5, %v2522
          %v2524 = vmul.f32 %v2519, %v2523
          %v2525 = vmul.f32 %v2452, %v2524
          %vm2526 = vcmp.eq.f32.partialorder %v2452, inf
          %v2527 = vsel %vm2526, %v2452, %v2525
          %vm2528 = vcmp.eq.f32.partialorder %v2452, 0.0
          %v2529 = vand.u32 %v2452, 2147483648
          %v2530 = vsel %vm2528, %v2529, %v2527
          %v2531 = vrsqrt.pop %v2453
          %v2532 = vmul.f32 %v2531, %v2453
          %v2533 = vmul.f32 %v2532, %v2531
          %v2534 = vmul.f32 0.5, %v2533
          %v2535 = vsub.f32 1.5, %v2534
          %v2536 = vmul.f32 %v2531, %v2535
          %v2537 = vmul.f32 %v2453, %v2536
          %vm2538 = vcmp.eq.f32.partialorder %v2453, inf
          %v2539 = vsel %vm2538, %v2453, %v2537
          %vm2540 = vcmp.eq.f32.partialorder %v2453, 0.0
          %v2541 = vand.u32 %v2453, 2147483648
          %v2542 = vsel %vm2540, %v2541, %v2539
          %v2543 = vrsqrt.pop %v2454
          %v2544 = vmul.f32 %v2543, %v2454
          %v2545 = vmul.f32 %v2544, %v2543
          %v2546 = vmul.f32 0.5, %v2545
          %v2547 = vsub.f32 1.5, %v2546
          %v2548 = vmul.f32 %v2543, %v2547
          %v2549 = vmul.f32 %v2454, %v2548
          %vm2550 = vcmp.eq.f32.partialorder %v2454, inf
          %v2551 = vsel %vm2550, %v2454, %v2549
          %vm2552 = vcmp.eq.f32.partialorder %v2454, 0.0
          %v2553 = vand.u32 %v2454, 2147483648
          %v2554 = vsel %vm2552, %v2553, %v2551
          %v2555 = vrsqrt.pop %v2455
          %v2556 = vmul.f32 %v2555, %v2455
          %v2557 = vmul.f32 %v2556, %v2555
          %v2558 = vmul.f32 0.5, %v2557
          %v2559 = vsub.f32 1.5, %v2558
          %v2560 = vmul.f32 %v2555, %v2559
          %v2561 = vmul.f32 %v2455, %v2560
          %vm2562 = vcmp.eq.f32.partialorder %v2455, inf
          %v2563 = vsel %vm2562, %v2455, %v2561
          %vm2564 = vcmp.eq.f32.partialorder %v2455, 0.0
          %v2565 = vand.u32 %v2455, 2147483648
          %v2566 = vsel %vm2564, %v2565, %v2563
          %v2567 = vrsqrt.pop %v2456
          %v2568 = vmul.f32 %v2567, %v2456
          %v2569 = vmul.f32 %v2568, %v2567
          %v2570 = vmul.f32 0.5, %v2569
          %v2571 = vsub.f32 1.5, %v2570
          %v2572 = vmul.f32 %v2567, %v2571
          %v2573 = vmul.f32 %v2456, %v2572
          %vm2574 = vcmp.eq.f32.partialorder %v2456, inf
          %v2575 = vsel %vm2574, %v2456, %v2573
          %vm2576 = vcmp.eq.f32.partialorder %v2456, 0.0
          %v2577 = vand.u32 %v2456, 2147483648
          %v2578 = vsel %vm2576, %v2577, %v2575
          %v2579 = vrsqrt.pop %v2457
          %v2580 = vmul.f32 %v2579, %v2457
          %v2581 = vmul.f32 %v2580, %v2579
          %v2582 = vmul.f32 0.5, %v2581
          %v2583 = vsub.f32 1.5, %v2582
          %v2584 = vmul.f32 %v2579, %v2583
          %v2585 = vmul.f32 %v2457, %v2584
          %vm2586 = vcmp.eq.f32.partialorder %v2457, inf
          %v2587 = vsel %vm2586, %v2457, %v2585
          %vm2588 = vcmp.eq.f32.partialorder %v2457, 0.0
          %v2589 = vand.u32 %v2457, 2147483648
          %v2590 = vsel %vm2588, %v2589, %v2587
          %v2591 = vrsqrt.pop %v2458
          %v2592 = vmul.f32 %v2591, %v2458
          %v2593 = vmul.f32 %v2592, %v2591
          %v2594 = vmul.f32 0.5, %v2593
          %v2595 = vsub.f32 1.5, %v2594
          %v2596 = vmul.f32 %v2591, %v2595
          %v2597 = vmul.f32 %v2458, %v2596
          %vm2598 = vcmp.eq.f32.partialorder %v2458, inf
          %v2599 = vsel %vm2598, %v2458, %v2597
          %vm2600 = vcmp.eq.f32.partialorder %v2458, 0.0
          %v2601 = vand.u32 %v2458, 2147483648
          %v2602 = vsel %vm2600, %v2601, %v2599
          %v2603 = vrcp.pop %v2470
          %v2604 = vmul.f32 %v2470, %v2603
          %v2605 = vsub.f32 1.0, %v2604
          %v2606 = vmul.f32 %v2603, %v2605
          %v2607 = vadd.f32 %v2603, %v2606
          %vm2608 = vweird.f32 %v2470
          %vm2609 = vweird.f32 %v2603
          %vm2610 = vmor %vm2608, %vm2609
          %v2611 = vsel %vm2610, %v2603, %v2607
          %v2612 = vand.u32 2147483647, %v2470
          %vm2613 = vcmp.eq.f32.partialorder %v2612, 8.507059e+37
          %v2614 = vand.u32 %v2470, 2147483648
          %v2615 = vor.u32 1.1754944e-38, %v2614
          %v2616 = vsel %vm2613, %v2615, %v2611
          %v2617 = vmul.f32 1.0, %v2616
          %v2618 = vrcp.pop %v2482
          %v2619 = vmul.f32 %v2482, %v2618
          %v2620 = vsub.f32 1.0, %v2619
          %v2621 = vmul.f32 %v2618, %v2620
          %v2622 = vadd.f32 %v2618, %v2621
          %vm2623 = vweird.f32 %v2482
          %vm2624 = vweird.f32 %v2618
          %vm2625 = vmor %vm2623, %vm2624
          %v2626 = vsel %vm2625, %v2618, %v2622
          %v2627 = vand.u32 2147483647, %v2482
          %vm2628 = vcmp.eq.f32.partialorder %v2627, 8.507059e+37
          %v2629 = vand.u32 %v2482, 2147483648
          %v2630 = vor.u32 1.1754944e-38, %v2629
          %v2631 = vsel %vm2628, %v2630, %v2626
          %v2632 = vmul.f32 1.0, %v2631
          %v2633 = vrcp.pop %v2494
          %v2634 = vmul.f32 %v2494, %v2633
          %v2635 = vsub.f32 1.0, %v2634
          %v2636 = vmul.f32 %v2633, %v2635
          %v2637 = vadd.f32 %v2633, %v2636
          %vm2638 = vweird.f32 %v2494
          %vm2639 = vweird.f32 %v2633
          %vm2640 = vmor %vm2638, %vm2639
          %v2641 = vsel %vm2640, %v2633, %v2637
          %v2642 = vand.u32 2147483647, %v2494
          %vm2643 = vcmp.eq.f32.partialorder %v2642, 8.507059e+37
          %v2644 = vand.u32 %v2494, 2147483648
          %v2645 = vor.u32 1.1754944e-38, %v2644
          %v2646 = vsel %vm2643, %v2645, %v2641
          %v2647 = vmul.f32 1.0, %v2646
          %v2648 = vrcp.pop %v2506
          %v2649 = vmul.f32 %v2506, %v2648
          %v2650 = vsub.f32 1.0, %v2649
          %v2651 = vmul.f32 %v2648, %v2650
          %v2652 = vadd.f32 %v2648, %v2651
          %vm2653 = vweird.f32 %v2506
          %vm2654 = vweird.f32 %v2648
          %vm2655 = vmor %vm2653, %vm2654
          %v2656 = vsel %vm2655, %v2648, %v2652
          %v2657 = vand.u32 2147483647, %v2506
          %vm2658 = vcmp.eq.f32.partialorder %v2657, 8.507059e+37
          %v2659 = vand.u32 %v2506, 2147483648
          %v2660 = vor.u32 1.1754944e-38, %v2659
          %v2661 = vsel %vm2658, %v2660, %v2656
          %v2662 = vmul.f32 1.0, %v2661
          %v2663 = vrcp.pop %v2518
          %v2664 = vmul.f32 %v2518, %v2663
          %v2665 = vsub.f32 1.0, %v2664
          %v2666 = vmul.f32 %v2663, %v2665
          %v2667 = vadd.f32 %v2663, %v2666
          %vm2668 = vweird.f32 %v2518
          %vm2669 = vweird.f32 %v2663
          %vm2670 = vmor %vm2668, %vm2669
          %v2671 = vsel %vm2670, %v2663, %v2667
          %v2672 = vand.u32 2147483647, %v2518
          %vm2673 = vcmp.eq.f32.partialorder %v2672, 8.507059e+37
          %v2674 = vand.u32 %v2518, 2147483648
          %v2675 = vor.u32 1.1754944e-38, %v2674
          %v2676 = vsel %vm2673, %v2675, %v2671
          %v2677 = vmul.f32 1.0, %v2676
          %v2678 = vrcp.pop %v2530
          %v2679 = vmul.f32 %v2530, %v2678
          %v2680 = vsub.f32 1.0, %v2679
          %v2681 = vmul.f32 %v2678, %v2680
          %v2682 = vadd.f32 %v2678, %v2681
          %vm2683 = vweird.f32 %v2530
          %vm2684 = vweird.f32 %v2678
          %vm2685 = vmor %vm2683, %vm2684
          %v2686 = vsel %vm2685, %v2678, %v2682
          %v2687 = vand.u32 2147483647, %v2530
          %vm2688 = vcmp.eq.f32.partialorder %v2687, 8.507059e+37
          %v2689 = vand.u32 %v2530, 2147483648
          %v2690 = vor.u32 1.1754944e-38, %v2689
          %v2691 = vsel %vm2688, %v2690, %v2686
          %v2692 = vmul.f32 1.0, %v2691
          %v2693 = vrcp.pop %v2542
          %v2694 = vmul.f32 %v2542, %v2693
          %v2695 = vsub.f32 1.0, %v2694
          %v2696 = vmul.f32 %v2693, %v2695
          %v2697 = vadd.f32 %v2693, %v2696
          %vm2698 = vweird.f32 %v2542
          %vm2699 = vweird.f32 %v2693
          %vm2700 = vmor %vm2698, %vm2699
          %v2701 = vsel %vm2700, %v2693, %v2697
          %v2702 = vand.u32 2147483647, %v2542
          %vm2703 = vcmp.eq.f32.partialorder %v2702, 8.507059e+37
          %v2704 = vand.u32 %v2542, 2147483648
          %v2705 = vor.u32 1.1754944e-38, %v2704
          %v2706 = vsel %vm2703, %v2705, %v2701
          %v2707 = vmul.f32 1.0, %v2706
          %v2708 = vrcp.pop %v2554
          %v2709 = vmul.f32 %v2554, %v2708
          %v2710 = vsub.f32 1.0, %v2709
          %v2711 = vmul.f32 %v2708, %v2710
          %v2712 = vadd.f32 %v2708, %v2711
          %vm2713 = vweird.f32 %v2554
          %vm2714 = vweird.f32 %v2708
          %vm2715 = vmor %vm2713, %vm2714
          %v2716 = vsel %vm2715, %v2708, %v2712
          %v2717 = vand.u32 2147483647, %v2554
          %vm2718 = vcmp.eq.f32.partialorder %v2717, 8.507059e+37
          %v2719 = vand.u32 %v2554, 2147483648
          %v2720 = vor.u32 1.1754944e-38, %v2719
          %v2721 = vsel %vm2718, %v2720, %v2716
          %v2722 = vmul.f32 1.0, %v2721
          %v2723 = vrcp.pop %v2566
          %v2724 = vmul.f32 %v2566, %v2723
          %v2725 = vsub.f32 1.0, %v2724
          %v2726 = vmul.f32 %v2723, %v2725
          %v2727 = vadd.f32 %v2723, %v2726
          %vm2728 = vweird.f32 %v2566
          %vm2729 = vweird.f32 %v2723
          %vm2730 = vmor %vm2728, %vm2729
          %v2731 = vsel %vm2730, %v2723, %v2727
          %v2732 = vand.u32 2147483647, %v2566
          %vm2733 = vcmp.eq.f32.partialorder %v2732, 8.507059e+37
          %v2734 = vand.u32 %v2566, 2147483648
          %v2735 = vor.u32 1.1754944e-38, %v2734
          %v2736 = vsel %vm2733, %v2735, %v2731
          %v2737 = vmul.f32 1.0, %v2736
          %v2738 = vrcp.pop %v2578
          %v2739 = vmul.f32 %v2578, %v2738
          %v2740 = vsub.f32 1.0, %v2739
          %v2741 = vmul.f32 %v2738, %v2740
          %v2742 = vadd.f32 %v2738, %v2741
          %vm2743 = vweird.f32 %v2578
          %vm2744 = vweird.f32 %v2738
          %vm2745 = vmor %vm2743, %vm2744
          %v2746 = vsel %vm2745, %v2738, %v2742
          %v2747 = vand.u32 2147483647, %v2578
          %vm2748 = vcmp.eq.f32.partialorder %v2747, 8.507059e+37
          %v2749 = vand.u32 %v2578, 2147483648
          %v2750 = vor.u32 1.1754944e-38, %v2749
          %v2751 = vsel %vm2748, %v2750, %v2746
          %v2752 = vmul.f32 1.0, %v2751
          %v2753 = vrcp.pop %v2590
          %v2754 = vmul.f32 %v2590, %v2753
          %v2755 = vsub.f32 1.0, %v2754
          %v2756 = vmul.f32 %v2753, %v2755
          %v2757 = vadd.f32 %v2753, %v2756
          %vm2758 = vweird.f32 %v2590
          %vm2759 = vweird.f32 %v2753
          %vm2760 = vmor %vm2758, %vm2759
          %v2761 = vsel %vm2760, %v2753, %v2757
          %v2762 = vand.u32 2147483647, %v2590
          %vm2763 = vcmp.eq.f32.partialorder %v2762, 8.507059e+37
          %v2764 = vand.u32 %v2590, 2147483648
          %v2765 = vor.u32 1.1754944e-38, %v2764
          %v2766 = vsel %vm2763, %v2765, %v2761
          %v2767 = vmul.f32 1.0, %v2766
          %v2768 = vrcp.pop %v2602
          %v2769 = vmul.f32 %v2602, %v2768
          %v2770 = vsub.f32 1.0, %v2769
          %v2771 = vmul.f32 %v2768, %v2770
          %v2772 = vadd.f32 %v2768, %v2771
          %vm2773 = vweird.f32 %v2602
          %vm2774 = vweird.f32 %v2768
          %vm2775 = vmor %vm2773, %vm2774
          %v2776 = vsel %vm2775, %v2768, %v2772
          %v2777 = vand.u32 2147483647, %v2602
          %vm2778 = vcmp.eq.f32.partialorder %v2777, 8.507059e+37
          %v2779 = vand.u32 %v2602, 2147483648
          %v2780 = vor.u32 1.1754944e-38, %v2779
          %v2781 = vsel %vm2778, %v2780, %v2776
          %v2782 = vmul.f32 1.0, %v2781
          %v2783 = vmul.f32 %v2003, %v2617
          %v2784 = vmul.f32 %v2018, %v2632
          %v2785 = vmul.f32 %v2033, %v2647
          %v2786 = vmul.f32 %v2048, %v2662
          %v2787 = vmul.f32 %v2063, %v2677
          %v2788 = vmul.f32 %v2078, %v2692
          %v2789 = vmul.f32 %v2093, %v2707
          %v2790 = vmul.f32 %v2108, %v2722
          %v2791 = vmul.f32 %v2123, %v2737
          %v2792 = vmul.f32 %v2138, %v2752
          %v2793 = vmul.f32 %v2153, %v2767
          %v2794 = vmul.f32 %v2168, %v2782
          %v2795 = vmul.f32 %v2245, %v2617
          %v2796 = vmul.f32 %v2260, %v2632
          %v2797 = vmul.f32 %v2275, %v2647
          %v2798 = vmul.f32 %v2290, %v2662
          %v2799 = vmul.f32 %v2305, %v2677
          %v2800 = vmul.f32 %v2320, %v2692
          %v2801 = vmul.f32 %v2335, %v2707
          %v2802 = vmul.f32 %v2350, %v2722
          %v2803 = vmul.f32 %v2365, %v2737
          %v2804 = vmul.f32 %v2380, %v2752
          %v2805 = vmul.f32 %v2395, %v2767
          %v2806 = vmul.f32 %v2410, %v2782
          %2807 = vrot.lane.b32.xlu0 %v2783, 127
          %v2808 = vpop.permute.xlu0 %2807
          %2809 = vrot.lane.b32.xlu0 %v2785, 127
          %v2810 = vpop.permute.xlu0 %2809
          %2811 = vrot.lane.b32.xlu0 %v2787, 127
          %v2812 = vpop.permute.xlu0 %2811
          %2813 = vrot.lane.b32.xlu0 %v2789, 127
          %v2814 = vpop.permute.xlu0 %2813
          %2815 = vrot.lane.b32.xlu0 %v2791, 127
          %v2816 = vpop.permute.xlu0 %2815
          %2817 = vrot.lane.b32.xlu0 %v2793, 127
          %v2818 = vpop.permute.xlu0 %2817
          %2819 = vrot.lane.b32.xlu0 %v2784, 127
          %v2820 = vpop.permute.xlu0 %2819
          %2821 = vrot.lane.b32.xlu0 %v2786, 127
          %v2822 = vpop.permute.xlu0 %2821
          %2823 = vrot.lane.b32.xlu0 %v2788, 127
          %v2824 = vpop.permute.xlu0 %2823
          %2825 = vrot.lane.b32.xlu0 %v2790, 127
          %v2826 = vpop.permute.xlu0 %2825
          %2827 = vrot.lane.b32.xlu0 %v2792, 127
          %v2828 = vpop.permute.xlu0 %2827
          %2829 = vrot.lane.b32.xlu0 %v2794, 127
          %v2830 = vpop.permute.xlu0 %2829
          %v2831 = vsel %vm1948, %v2808, %v2820
          %v2832 = vsel %vm1948, %v2810, %v2822
          %v2833 = vsel %vm1948, %v2812, %v2824
          %v2834 = vsel %vm1948, %v2814, %v2826
          %v2835 = vsel %vm1948, %v2816, %v2828
          %v2836 = vsel %vm1948, %v2818, %v2830
          %v2837 = vsel %vm1948, %v2820, %v2808
          %v2838 = vsel %vm1948, %v2822, %v2810
          %v2839 = vsel %vm1948, %v2824, %v2812
          %v2840 = vsel %vm1948, %v2826, %v2814
          %v2841 = vsel %vm1948, %v2828, %v2816
          %v2842 = vsel %vm1948, %v2830, %v2818
          %v2843 = vsel %vm1963, %v2831, 0.0
          %v2844 = vsel %vm1964, %v2837, 0.0
          %v2845 = vsel %vm1963, %v2832, 0.0
          %v2846 = vsel %vm1964, %v2838, 0.0
          %v2847 = vsel %vm1963, %v2833, 0.0
          %v2848 = vsel %vm1964, %v2839, 0.0
          %v2849 = vsel %vm1963, %v2834, 0.0
          %v2850 = vsel %vm1964, %v2840, 0.0
          %v2851 = vsel %vm1963, %v2835, 0.0
          %v2852 = vsel %vm1964, %v2841, 0.0
          %v2853 = vsel %vm1963, %v2836, 0.0
          %v2854 = vsel %vm1964, %v2842, 0.0
          %2855 = vrot.lane.b32.xlu0 %v2783, 1
          %v2856 = vpop.permute.xlu0 %2855
          %2857 = vrot.lane.b32.xlu0 %v2785, 1
          %v2858 = vpop.permute.xlu0 %2857
          %2859 = vrot.lane.b32.xlu0 %v2787, 1
          %v2860 = vpop.permute.xlu0 %2859
          %2861 = vrot.lane.b32.xlu0 %v2789, 1
          %v2862 = vpop.permute.xlu0 %2861
          %2863 = vrot.lane.b32.xlu0 %v2791, 1
          %v2864 = vpop.permute.xlu0 %2863
          %2865 = vrot.lane.b32.xlu0 %v2793, 1
          %v2866 = vpop.permute.xlu0 %2865
          %2867 = vrot.lane.b32.xlu0 %v2784, 1
          %v2868 = vpop.permute.xlu0 %2867
          %2869 = vrot.lane.b32.xlu0 %v2786, 1
          %v2870 = vpop.permute.xlu0 %2869
          %2871 = vrot.lane.b32.xlu0 %v2788, 1
          %v2872 = vpop.permute.xlu0 %2871
          %2873 = vrot.lane.b32.xlu0 %v2790, 1
          %v2874 = vpop.permute.xlu0 %2873
          %2875 = vrot.lane.b32.xlu0 %v2792, 1
          %v2876 = vpop.permute.xlu0 %2875
          %2877 = vrot.lane.b32.xlu0 %v2794, 1
          %v2878 = vpop.permute.xlu0 %2877
          %v2879 = vsel %vm1895, %v2856, %v2868
          %v2880 = vsel %vm1895, %v2858, %v2870
          %v2881 = vsel %vm1895, %v2860, %v2872
          %v2882 = vsel %vm1895, %v2862, %v2874
          %v2883 = vsel %vm1895, %v2864, %v2876
          %v2884 = vsel %vm1895, %v2866, %v2878
          %v2885 = vsel %vm1895, %v2868, %v2856
          %v2886 = vsel %vm1895, %v2870, %v2858
          %v2887 = vsel %vm1895, %v2872, %v2860
          %v2888 = vsel %vm1895, %v2874, %v2862
          %v2889 = vsel %vm1895, %v2876, %v2864
          %v2890 = vsel %vm1895, %v2878, %v2866
          %v2891 = vsel %vm1910, %v2885, 0.0
          %v2892 = vsel %vm1911, %v2879, 0.0
          %v2893 = vsel %vm1910, %v2886, 0.0
          %v2894 = vsel %vm1911, %v2880, 0.0
          %v2895 = vsel %vm1910, %v2887, 0.0
          %v2896 = vsel %vm1911, %v2881, 0.0
          %v2897 = vsel %vm1910, %v2888, 0.0
          %v2898 = vsel %vm1911, %v2882, 0.0
          %v2899 = vsel %vm1910, %v2889, 0.0
          %v2900 = vsel %vm1911, %v2883, 0.0
          %v2901 = vsel %vm1910, %v2890, 0.0
          %v2902 = vsel %vm1911, %v2884, 0.0
          %v2903 = vsub.f32 %v2843, %v2891
          %v2904 = vsub.f32 %v2844, %v2892
          %v2905 = vsub.f32 %v2845, %v2893
          %v2906 = vsub.f32 %v2846, %v2894
          %v2907 = vsub.f32 %v2847, %v2895
          %v2908 = vsub.f32 %v2848, %v2896
          %v2909 = vsub.f32 %v2849, %v2897
          %v2910 = vsub.f32 %v2850, %v2898
          %v2911 = vsub.f32 %v2851, %v2899
          %v2912 = vsub.f32 %v2852, %v2900
          %v2913 = vsub.f32 %v2853, %v2901
          %v2914 = vsub.f32 %v2854, %v2902
          %v2915 = vrot.slane %v2795, 1
          %v2916 = vrot.slane %v2796, 1
          %v2917 = vrot.slane %v2797, 1
          %v2918 = vrot.slane %v2798, 1
          %v2919 = vrot.slane %v2799, 1
          %v2920 = vrot.slane %v2800, 1
          %v2921 = vrot.slane %v2801, 1
          %v2922 = vrot.slane %v2802, 1
          %v2923 = vrot.slane %v2803, 1
          %v2924 = vrot.slane %v2804, 1
          %v2925 = vrot.slane %v2805, 1
          %v2926 = vrot.slane %v2806, 1
          %v2927 = vsel %vm2206, %v2923, %v2925
          %v2928 = vsel %vm2206, %v2924, %v2926
          %v2929 = vsel %vm2206, %v2921, %v2923
          %v2930 = vsel %vm2206, %v2922, %v2924
          %v2931 = vsel %vm2206, %v2919, %v2921
          %v2932 = vsel %vm2206, %v2920, %v2922
          %v2933 = vsel %vm2206, %v2917, %v2919
          %v2934 = vsel %vm2206, %v2918, %v2920
          %v2935 = vsel %vm2206, %v2915, %v2917
          %v2936 = vsel %vm2206, %v2916, %v2918
          %v2937 = vsel %vm2206, %v2925, %v2915
          %v2938 = vsel %vm2206, %v2926, %v2916
          %v2939 = vrot.slane %v2795, 7
          %v2940 = vrot.slane %v2796, 7
          %v2941 = vrot.slane %v2797, 7
          %v2942 = vrot.slane %v2798, 7
          %v2943 = vrot.slane %v2799, 7
          %v2944 = vrot.slane %v2800, 7
          %v2945 = vrot.slane %v2801, 7
          %v2946 = vrot.slane %v2802, 7
          %v2947 = vrot.slane %v2803, 7
          %v2948 = vrot.slane %v2804, 7
          %v2949 = vrot.slane %v2805, 7
          %v2950 = vrot.slane %v2806, 7
          %v2951 = vsel %vm2181, %v2947, %v2949
          %v2952 = vsel %vm2181, %v2948, %v2950
          %v2953 = vsel %vm2181, %v2945, %v2947
          %v2954 = vsel %vm2181, %v2946, %v2948
          %v2955 = vsel %vm2181, %v2943, %v2945
          %v2956 = vsel %vm2181, %v2944, %v2946
          %v2957 = vsel %vm2181, %v2941, %v2943
          %v2958 = vsel %vm2181, %v2942, %v2944
          %v2959 = vsel %vm2181, %v2939, %v2941
          %v2960 = vsel %vm2181, %v2940, %v2942
          %v2961 = vsel %vm2181, %v2949, %v2939
          %v2962 = vsel %vm2181, %v2950, %v2940
          %v2963 = vsub.f32 %v2935, %v2961
          %v2964 = vsub.f32 %v2936, %v2962
          %v2965 = vsub.f32 %v2933, %v2959
          %v2966 = vsub.f32 %v2934, %v2960
          %v2967 = vsub.f32 %v2931, %v2957
          %v2968 = vsub.f32 %v2932, %v2958
          %v2969 = vsub.f32 %v2929, %v2955
          %v2970 = vsub.f32 %v2930, %v2956
          %v2971 = vsub.f32 %v2927, %v2953
          %v2972 = vsub.f32 %v2928, %v2954
          %v2973 = vsub.f32 %v2937, %v2951
          %v2974 = vsub.f32 %v2938, %v2952
          %v2975 = vadd.f32 %v2903, %v2963
          %v2976 = vadd.f32 %v2904, %v2964
          %v2977 = vadd.f32 %v2905, %v2965
          %v2978 = vadd.f32 %v2906, %v2966
          %v2979 = vadd.f32 %v2907, %v2967
          %v2980 = vadd.f32 %v2908, %v2968
          %v2981 = vadd.f32 %v2909, %v2969
          %v2982 = vadd.f32 %v2910, %v2970
          %v2983 = vadd.f32 %v2911, %v2971
          %v2984 = vadd.f32 %v2912, %v2972
          %v2985 = vadd.f32 %v2913, %v2973
          %v2986 = vadd.f32 %v2914, %v2974
          %v2987 = vrot.slane %v2975, 7
          %v2988 = vrot.slane %v2976, 7
          %v2989 = vrot.slane %v2977, 7
          %v2990 = vrot.slane %v2978, 7
          %v2991 = vrot.slane %v2979, 7
          %v2992 = vrot.slane %v2980, 7
          %v2993 = vrot.slane %v2981, 7
          %v2994 = vrot.slane %v2982, 7
          %v2995 = vrot.slane %v2983, 7
          %v2996 = vrot.slane %v2984, 7
          %v2997 = vsel %vm2181, %v2993, %v2995
          %v2998 = vsel %vm2181, %v2994, %v2996
          %v2999 = vsel %vm2181, %v2991, %v2993
          %v3000 = vsel %vm2181, %v2992, %v2994
          %v3001 = vsel %vm2181, %v2989, %v2991
          %v3002 = vsel %vm2181, %v2990, %v2992
          %v3003 = vsel %vm2181, %v2987, %v2989
          %v3004 = vsel %vm2181, %v2988, %v2990
          %v3005 = vadd.f32 %v3003, %v2977
          %v3006 = vadd.f32 %v3004, %v2978
          %v3007 = vadd.f32 %v3001, %v2979
          %v3008 = vadd.f32 %v3002, %v2980
          %v3009 = vadd.f32 %v2999, %v2981
          %v3010 = vadd.f32 %v3000, %v2982
          %v3011 = vadd.f32 %v2997, %v2983
          %v3012 = vadd.f32 %v2998, %v2984
          %v3013 = vrot.slane %v2977, 1
          %v3014 = vrot.slane %v2978, 1
          %v3015 = vrot.slane %v2979, 1
          %v3016 = vrot.slane %v2980, 1
          %v3017 = vrot.slane %v2981, 1
          %v3018 = vrot.slane %v2982, 1
          %v3019 = vrot.slane %v2983, 1
          %v3020 = vrot.slane %v2984, 1
          %v3021 = vrot.slane %v2985, 1
          %v3022 = vrot.slane %v2986, 1
          %v3023 = vsel %vm2206, %v3019, %v3021
          %v3024 = vsel %vm2206, %v3020, %v3022
          %v3025 = vsel %vm2206, %v3017, %v3019
          %v3026 = vsel %vm2206, %v3018, %v3020
          %v3027 = vsel %vm2206, %v3015, %v3017
          %v3028 = vsel %vm2206, %v3016, %v3018
          %v3029 = vsel %vm2206, %v3013, %v3015
          %v3030 = vsel %vm2206, %v3014, %v3016
          %v3031 = vadd.f32 %v3005, %v3029
          %v3032 = vadd.f32 %v3006, %v3030
          %v3033 = vadd.f32 %v3007, %v3027
          %v3034 = vadd.f32 %v3008, %v3028
          %v3035 = vadd.f32 %v3009, %v3025
          %v3036 = vadd.f32 %v3010, %v3026
          %v3037 = vadd.f32 %v3011, %v3023
          %v3038 = vadd.f32 %v3012, %v3024
          %3039 = vrot.lane.b32.xlu0 %v3031, 1
          %v3040 = vpop.permute.xlu0 %3039
          %3041 = vrot.lane.b32.xlu0 %v3033, 1
          %v3042 = vpop.permute.xlu0 %3041
          %3043 = vrot.lane.b32.xlu0 %v3035, 1
          %v3044 = vpop.permute.xlu0 %3043
          %3045 = vrot.lane.b32.xlu0 %v3037, 1
          %v3046 = vpop.permute.xlu0 %3045
          %3047 = vrot.lane.b32.xlu0 %v3032, 1
          %v3048 = vpop.permute.xlu0 %3047
          %3049 = vrot.lane.b32.xlu0 %v3034, 1
          %v3050 = vpop.permute.xlu0 %3049
          %3051 = vrot.lane.b32.xlu0 %v3036, 1
          %v3052 = vpop.permute.xlu0 %3051
          %3053 = vrot.lane.b32.xlu0 %v3038, 1
          %v3054 = vpop.permute.xlu0 %3053
          %v3055 = vsel %vm1895, %v3040, %v3048
          %v3056 = vsel %vm1895, %v3042, %v3050
          %v3057 = vsel %vm1895, %v3044, %v3052
          %v3058 = vsel %vm1895, %v3046, %v3054
          %v3059 = vsel %vm1895, %v3048, %v3040
          %v3060 = vsel %vm1895, %v3050, %v3042
          %v3061 = vsel %vm1895, %v3052, %v3044
          %v3062 = vsel %vm1895, %v3054, %v3046
          %v3063 = vsel %vm1910, %v3059, 0.0
          %v3064 = vsel %vm1911, %v3055, 0.0
          %v3065 = vsel %vm1910, %v3060, 0.0
          %v3066 = vsel %vm1911, %v3056, 0.0
          %v3067 = vsel %vm1910, %v3061, 0.0
          %v3068 = vsel %vm1911, %v3057, 0.0
          %v3069 = vsel %vm1910, %v3062, 0.0
          %v3070 = vsel %vm1911, %v3058, 0.0
          %v3071 = vadd.f32 %v3063, %v3031
          %v3072 = vadd.f32 %v3064, %v3032
          %v3073 = vadd.f32 %v3065, %v3033
          %v3074 = vadd.f32 %v3066, %v3034
          %v3075 = vadd.f32 %v3067, %v3035
          %v3076 = vadd.f32 %v3068, %v3036
          %v3077 = vadd.f32 %v3069, %v3037
          %v3078 = vadd.f32 %v3070, %v3038
          %3079 = vrot.lane.b32.xlu0 %v3031, 127
          %v3080 = vpop.permute.xlu0 %3079
          %3081 = vrot.lane.b32.xlu0 %v3033, 127
          %v3082 = vpop.permute.xlu0 %3081
          %3083 = vrot.lane.b32.xlu0 %v3035, 127
          %v3084 = vpop.permute.xlu0 %3083
          %3085 = vrot.lane.b32.xlu0 %v3037, 127
          %v3086 = vpop.permute.xlu0 %3085
          %3087 = vrot.lane.b32.xlu0 %v3032, 127
          %v3088 = vpop.permute.xlu0 %3087
          %3089 = vrot.lane.b32.xlu0 %v3034, 127
          %v3090 = vpop.permute.xlu0 %3089
          %3091 = vrot.lane.b32.xlu0 %v3036, 127
          %v3092 = vpop.permute.xlu0 %3091
          %3093 = vrot.lane.b32.xlu0 %v3038, 127
          %v3094 = vpop.permute.xlu0 %3093
          %v3095 = vsel %vm1948, %v3080, %v3088
          %v3096 = vsel %vm1948, %v3082, %v3090
          %v3097 = vsel %vm1948, %v3084, %v3092
          %v3098 = vsel %vm1948, %v3086, %v3094
          %v3099 = vsel %vm1948, %v3088, %v3080
          %v3100 = vsel %vm1948, %v3090, %v3082
          %v3101 = vsel %vm1948, %v3092, %v3084
          %v3102 = vsel %vm1948, %v3094, %v3086
          %v3103 = vsel %vm1963, %v3095, 0.0
          %v3104 = vsel %vm1964, %v3099, 0.0
          %v3105 = vsel %vm1963, %v3096, 0.0
          %v3106 = vsel %vm1964, %v3100, 0.0
          %v3107 = vsel %vm1963, %v3097, 0.0
          %v3108 = vsel %vm1964, %v3101, 0.0
          %v3109 = vsel %vm1963, %v3098, 0.0
          %v3110 = vsel %vm1964, %v3102, 0.0
          %v3111 = vadd.f32 %v3071, %v3103
          %v3112 = vadd.f32 %v3072, %v3104
          %v3113 = vadd.f32 %v3073, %v3105
          %v3114 = vadd.f32 %v3074, %v3106
          %v3115 = vadd.f32 %v3075, %v3107
          %v3116 = vadd.f32 %v3076, %v3108
          %v3117 = vadd.f32 %v3077, %v3109
          %v3118 = vadd.f32 %v3078, %v3110
          %v3119 = vand.u32 2147483647, %v3111
          %v3120 = vand.u32 2147483647, %v3112
          %v3121 = vand.u32 2147483647, %v3113
          %v3122 = vand.u32 2147483647, %v3114
          %v3123 = vand.u32 2147483647, %v3115
          %v3124 = vand.u32 2147483647, %v3116
          %v3125 = vand.u32 2147483647, %v3117
          %v3126 = vand.u32 2147483647, %v3118
          %v3127 = vmul.f32 %v3119, 0.027777778
          %v3128 = vmul.f32 %v3120, 0.027777778
          %v3129 = vmul.f32 %v3121, 0.027777778
          %v3130 = vmul.f32 %v3122, 0.027777778
          %v3131 = vmul.f32 %v3123, 0.027777778
          %v3132 = vmul.f32 %v3124, 0.027777778
          %v3133 = vmul.f32 %v3125, 0.027777778
          %v3134 = vmul.f32 %v3126, 0.027777778
          %3135 = vst [vmem:[%s196] sm:$0xff] %v2785
          %3136 = vst [vmem:[%s196 + $0x8] sm:$0xff] %v2786
          %3137 = vst [vmem:[%s196 + $0x10] sm:$0xff] %v2787
          %3138 = vst [vmem:[%s196 + $0x18] sm:$0xff] %v2788
          %3139 = vst [vmem:[%s196 + $0x20] sm:$0xff] %v2789
          %3140 = vst [vmem:[%s196 + $0x28] sm:$0xff] %v2790
          %3141 = vst [vmem:[%s196 + $0x30] sm:$0xff] %v2791
          %3142 = vst [vmem:[%s196 + $0x38] sm:$0xff] %v2792
          %s3143 = scalar_lea.vmem %s196, 64 [#allocation9]
          %3144 = vst [vmem:[%s3143] sm:$0xff] %v2797
          %3145 = vst [vmem:[%s3143 + $0x8] sm:$0xff] %v2798
          %3146 = vst [vmem:[%s3143 + $0x10] sm:$0xff] %v2799
          %3147 = vst [vmem:[%s3143 + $0x18] sm:$0xff] %v2800
          %3148 = vst [vmem:[%s3143 + $0x20] sm:$0xff] %v2801
          %3149 = vst [vmem:[%s3143 + $0x28] sm:$0xff] %v2802
          %3150 = vst [vmem:[%s3143 + $0x30] sm:$0xff] %v2803
          %3151 = vst [vmem:[%s3143 + $0x38] sm:$0xff] %v2804
          %s3152 = scalar_lea.vmem %s196, 128 [#allocation9]
          %3153 = vst [vmem:[%s3152] sm:$0xff] %v2647
          %3154 = vst [vmem:[%s3152 + $0x8] sm:$0xff] %v2662
          %3155 = vst [vmem:[%s3152 + $0x10] sm:$0xff] %v2677
          %3156 = vst [vmem:[%s3152 + $0x18] sm:$0xff] %v2692
          %3157 = vst [vmem:[%s3152 + $0x20] sm:$0xff] %v2707
          %3158 = vst [vmem:[%s3152 + $0x28] sm:$0xff] %v2722
          %3159 = vst [vmem:[%s3152 + $0x30] sm:$0xff] %v2737
          %3160 = vst [vmem:[%s3152 + $0x38] sm:$0xff] %v2752
          %3161 = vst [vmem:[%s203] sm:$0xff] %v3127
          %3162 = vst [vmem:[%s203 + $0x8] sm:$0xff] %v3128
          %3163 = vst [vmem:[%s203 + $0x10] sm:$0xff] %v3129
          %3164 = vst [vmem:[%s203 + $0x18] sm:$0xff] %v3130
          %3165 = vst [vmem:[%s203 + $0x20] sm:$0xff] %v3131
          %3166 = vst [vmem:[%s203 + $0x28] sm:$0xff] %v3132
          %3167 = vst [vmem:[%s203 + $0x30] sm:$0xff] %v3133
          %3168 = vst [vmem:[%s203 + $0x38] sm:$0xff] %v3134
        $region60: #{tpu_custom_call.1} parent=27 // pred_fallthru
          _
        %p3169 = scmp.eq.s32.totalorder %s246, 3
        %p3170 = pnand %p1816, %p3169
        %p3171 = pneg %p3170
        // Predicated region
        $region61: #{tpu_custom_call.1} parent=27 // pred_check
          _
        $region62: #{tpu_custom_call.1} parent=27 // pred_check_branch
          %3173 = sbr.rel (%p3170) target = $region64
        $region63: #{tpu_custom_call.1} parent=27 // pred_region
          %v3174 = vstv %s299
          %v3175 = vmul.f32 %v365, %v3174
          %v3176 = vmul.f32 %v366, %v3174
          %v3177 = vmul.f32 %v367, %v3174
          %v3178 = vmul.f32 %v368, %v3174
          %v3179 = vmul.f32 %v369, %v3174
          %v3180 = vmul.f32 %v370, %v3174
          %v3181 = vmul.f32 %v371, %v3174
          %v3182 = vmul.f32 %v372, %v3174
          %v3183 = vmul.f32 %v373, %v3174
          %v3184 = vmul.f32 %v374, %v3174
          %v3185 = vmul.f32 %v375, %v3174
          %v3186 = vmul.f32 %v376, %v3174
          %v3187 = vadd.f32 %v3175, 2e-06
          %v3188 = vadd.f32 %v3176, 2e-06
          %v3189 = vadd.f32 %v3177, 2e-06
          %v3190 = vadd.f32 %v3178, 2e-06
          %v3191 = vadd.f32 %v3179, 2e-06
          %v3192 = vadd.f32 %v3180, 2e-06
          %v3193 = vadd.f32 %v3181, 2e-06
          %v3194 = vadd.f32 %v3182, 2e-06
          %v3195 = vadd.f32 %v3183, 2e-06
          %v3196 = vadd.f32 %v3184, 2e-06
          %v3197 = vadd.f32 %v3185, 2e-06
          %v3198 = vadd.f32 %v3186, 2e-06
          %v3199 = vstv %s317
          %v3200 = vmul.f32 %v365, %v3199
          %v3201 = vmul.f32 %v366, %v3199
          %v3202 = vmul.f32 %v367, %v3199
          %v3203 = vmul.f32 %v368, %v3199
          %v3204 = vmul.f32 %v369, %v3199
          %v3205 = vmul.f32 %v370, %v3199
          %v3206 = vmul.f32 %v371, %v3199
          %v3207 = vmul.f32 %v372, %v3199
          %v3208 = vmul.f32 %v373, %v3199
          %v3209 = vmul.f32 %v374, %v3199
          %v3210 = vmul.f32 %v375, %v3199
          %v3211 = vmul.f32 %v376, %v3199
          %v3212 = vadd.f32 %v3200, 2e-06
          %v3213 = vadd.f32 %v3201, 2e-06
          %v3214 = vadd.f32 %v3202, 2e-06
          %v3215 = vadd.f32 %v3203, 2e-06
          %v3216 = vadd.f32 %v3204, 2e-06
          %v3217 = vadd.f32 %v3205, 2e-06
          %v3218 = vadd.f32 %v3206, 2e-06
          %v3219 = vadd.f32 %v3207, 2e-06
          %v3220 = vadd.f32 %v3208, 2e-06
          %v3221 = vadd.f32 %v3209, 2e-06
          %v3222 = vadd.f32 %v3210, 2e-06
          %v3223 = vadd.f32 %v3211, 2e-06
          %3224 = vrot.lane.b32.xlu0 %v365, 1
          %v3225 = vpop.permute.xlu0 %3224
          %3226 = vrot.lane.b32.xlu0 %v367, 1
          %v3227 = vpop.permute.xlu0 %3226
          %3228 = vrot.lane.b32.xlu0 %v369, 1
          %v3229 = vpop.permute.xlu0 %3228
          %3230 = vrot.lane.b32.xlu0 %v371, 1
          %v3231 = vpop.permute.xlu0 %3230
          %3232 = vrot.lane.b32.xlu0 %v373, 1
          %v3233 = vpop.permute.xlu0 %3232
          %3234 = vrot.lane.b32.xlu0 %v375, 1
          %v3235 = vpop.permute.xlu0 %3234
          %3236 = vrot.lane.b32.xlu0 %v366, 1
          %v3237 = vpop.permute.xlu0 %3236
          %3238 = vrot.lane.b32.xlu0 %v368, 1
          %v3239 = vpop.permute.xlu0 %3238
          %3240 = vrot.lane.b32.xlu0 %v370, 1
          %v3241 = vpop.permute.xlu0 %3240
          %3242 = vrot.lane.b32.xlu0 %v372, 1
          %v3243 = vpop.permute.xlu0 %3242
          %3244 = vrot.lane.b32.xlu0 %v374, 1
          %v3245 = vpop.permute.xlu0 %3244
          %3246 = vrot.lane.b32.xlu0 %v376, 1
          %v3247 = vpop.permute.xlu0 %3246
          %vm3248 = vcmp.lt.s32.totalorder %v339, 1
          %v3249 = vsel %vm3248, %v3225, %v3237
          %v3250 = vsel %vm3248, %v3227, %v3239
          %v3251 = vsel %vm3248, %v3229, %v3241
          %v3252 = vsel %vm3248, %v3231, %v3243
          %v3253 = vsel %vm3248, %v3233, %v3245
          %v3254 = vsel %vm3248, %v3235, %v3247
          %v3255 = vsel %vm3248, %v3237, %v3225
          %v3256 = vsel %vm3248, %v3239, %v3227
          %v3257 = vsel %vm3248, %v3241, %v3229
          %v3258 = vsel %vm3248, %v3243, %v3231
          %v3259 = vsel %vm3248, %v3245, %v3233
          %v3260 = vsel %vm3248, %v3247, %v3235
          %v3261 = vsel %vm355, 1, 0
          %v3262 = vsel %vm356, 1, 0
          %vm3263 = vcmp.eq.s32.totalorder %v3261, 1
          %vm3264 = vcmp.eq.s32.totalorder %v3262, 1
          %v3265 = vsel %vm3263, %v3255, 0.0
          %v3266 = vsel %vm3264, %v3249, 0.0
          %v3267 = vsel %vm3263, %v3256, 0.0
          %v3268 = vsel %vm3264, %v3250, 0.0
          %v3269 = vsel %vm3263, %v3257, 0.0
          %v3270 = vsel %vm3264, %v3251, 0.0
          %v3271 = vsel %vm3263, %v3258, 0.0
          %v3272 = vsel %vm3264, %v3252, 0.0
          %v3273 = vsel %vm3263, %v3259, 0.0
          %v3274 = vsel %vm3264, %v3253, 0.0
          %v3275 = vsel %vm3263, %v3260, 0.0
          %v3276 = vsel %vm3264, %v3254, 0.0
          %3277 = vrot.lane.b32.xlu0 %v365, 127
          %v3278 = vpop.permute.xlu0 %3277
          %3279 = vrot.lane.b32.xlu0 %v367, 127
          %v3280 = vpop.permute.xlu0 %3279
          %3281 = vrot.lane.b32.xlu0 %v369, 127
          %v3282 = vpop.permute.xlu0 %3281
          %3283 = vrot.lane.b32.xlu0 %v371, 127
          %v3284 = vpop.permute.xlu0 %3283
          %3285 = vrot.lane.b32.xlu0 %v373, 127
          %v3286 = vpop.permute.xlu0 %3285
          %3287 = vrot.lane.b32.xlu0 %v375, 127
          %v3288 = vpop.permute.xlu0 %3287
          %3289 = vrot.lane.b32.xlu0 %v366, 127
          %v3290 = vpop.permute.xlu0 %3289
          %3291 = vrot.lane.b32.xlu0 %v368, 127
          %v3292 = vpop.permute.xlu0 %3291
          %3293 = vrot.lane.b32.xlu0 %v370, 127
          %v3294 = vpop.permute.xlu0 %3293
          %3295 = vrot.lane.b32.xlu0 %v372, 127
          %v3296 = vpop.permute.xlu0 %3295
          %3297 = vrot.lane.b32.xlu0 %v374, 127
          %v3298 = vpop.permute.xlu0 %3297
          %3299 = vrot.lane.b32.xlu0 %v376, 127
          %v3300 = vpop.permute.xlu0 %3299
          %vm3301 = vcmp.lt.s32.totalorder %v339, 127
          %v3302 = vsel %vm3301, %v3278, %v3290
          %v3303 = vsel %vm3301, %v3280, %v3292
          %v3304 = vsel %vm3301, %v3282, %v3294
          %v3305 = vsel %vm3301, %v3284, %v3296
          %v3306 = vsel %vm3301, %v3286, %v3298
          %v3307 = vsel %vm3301, %v3288, %v3300
          %v3308 = vsel %vm3301, %v3290, %v3278
          %v3309 = vsel %vm3301, %v3292, %v3280
          %v3310 = vsel %vm3301, %v3294, %v3282
          %v3311 = vsel %vm3301, %v3296, %v3284
          %v3312 = vsel %vm3301, %v3298, %v3286
          %v3313 = vsel %vm3301, %v3300, %v3288
          %v3314 = vsel %vm353, 1, 0
          %v3315 = vsel %vm354, 1, 0
          %vm3316 = vcmp.eq.s32.totalorder %v3314, 1
          %vm3317 = vcmp.eq.s32.totalorder %v3315, 1
          %v3318 = vsel %vm3316, %v3302, 0.0
          %v3319 = vsel %vm3317, %v3308, 0.0
          %v3320 = vsel %vm3316, %v3303, 0.0
          %v3321 = vsel %vm3317, %v3309, 0.0
          %v3322 = vsel %vm3316, %v3304, 0.0
          %v3323 = vsel %vm3317, %v3310, 0.0
          %v3324 = vsel %vm3316, %v3305, 0.0
          %v3325 = vsel %vm3317, %v3311, 0.0
          %v3326 = vsel %vm3316, %v3306, 0.0
          %v3327 = vsel %vm3317, %v3312, 0.0
          %v3328 = vsel %vm3316, %v3307, 0.0
          %v3329 = vsel %vm3317, %v3313, 0.0
          %v3330 = vsub.f32 %v3265, %v3318
          %v3331 = vsub.f32 %v3266, %v3319
          %v3332 = vsub.f32 %v3267, %v3320
          %v3333 = vsub.f32 %v3268, %v3321
          %v3334 = vsub.f32 %v3269, %v3322
          %v3335 = vsub.f32 %v3270, %v3323
          %v3336 = vsub.f32 %v3271, %v3324
          %v3337 = vsub.f32 %v3272, %v3325
          %v3338 = vsub.f32 %v3273, %v3326
          %v3339 = vsub.f32 %v3274, %v3327
          %v3340 = vsub.f32 %v3275, %v3328
          %v3341 = vsub.f32 %v3276, %v3329
          %v3342 = vrcp.pop %v3187
          %v3343 = vmul.f32 %v3187, %v3342
          %v3344 = vsub.f32 1.0, %v3343
          %v3345 = vmul.f32 %v3342, %v3344
          %v3346 = vadd.f32 %v3342, %v3345
          %vm3347 = vweird.f32 %v3187
          %vm3348 = vweird.f32 %v3342
          %vm3349 = vmor %vm3347, %vm3348
          %v3350 = vsel %vm3349, %v3342, %v3346
          %v3351 = vand.u32 2147483647, %v3187
          %vm3352 = vcmp.eq.f32.partialorder %v3351, 8.507059e+37
          %v3353 = vand.u32 %v3187, 2147483648
          %v3354 = vor.u32 1.1754944e-38, %v3353
          %v3355 = vsel %vm3352, %v3354, %v3350
          %v3356 = vmul.f32 %v3330, %v3355
          %v3357 = vrcp.pop %v3188
          %v3358 = vmul.f32 %v3188, %v3357
          %v3359 = vsub.f32 1.0, %v3358
          %v3360 = vmul.f32 %v3357, %v3359
          %v3361 = vadd.f32 %v3357, %v3360
          %vm3362 = vweird.f32 %v3188
          %vm3363 = vweird.f32 %v3357
          %vm3364 = vmor %vm3362, %vm3363
          %v3365 = vsel %vm3364, %v3357, %v3361
          %v3366 = vand.u32 2147483647, %v3188
          %vm3367 = vcmp.eq.f32.partialorder %v3366, 8.507059e+37
          %v3368 = vand.u32 %v3188, 2147483648
          %v3369 = vor.u32 1.1754944e-38, %v3368
          %v3370 = vsel %vm3367, %v3369, %v3365
          %v3371 = vmul.f32 %v3331, %v3370
          %v3372 = vrcp.pop %v3189
          %v3373 = vmul.f32 %v3189, %v3372
          %v3374 = vsub.f32 1.0, %v3373
          %v3375 = vmul.f32 %v3372, %v3374
          %v3376 = vadd.f32 %v3372, %v3375
          %vm3377 = vweird.f32 %v3189
          %vm3378 = vweird.f32 %v3372
          %vm3379 = vmor %vm3377, %vm3378
          %v3380 = vsel %vm3379, %v3372, %v3376
          %v3381 = vand.u32 2147483647, %v3189
          %vm3382 = vcmp.eq.f32.partialorder %v3381, 8.507059e+37
          %v3383 = vand.u32 %v3189, 2147483648
          %v3384 = vor.u32 1.1754944e-38, %v3383
          %v3385 = vsel %vm3382, %v3384, %v3380
          %v3386 = vmul.f32 %v3332, %v3385
          %v3387 = vrcp.pop %v3190
          %v3388 = vmul.f32 %v3190, %v3387
          %v3389 = vsub.f32 1.0, %v3388
          %v3390 = vmul.f32 %v3387, %v3389
          %v3391 = vadd.f32 %v3387, %v3390
          %vm3392 = vweird.f32 %v3190
          %vm3393 = vweird.f32 %v3387
          %vm3394 = vmor %vm3392, %vm3393
          %v3395 = vsel %vm3394, %v3387, %v3391
          %v3396 = vand.u32 2147483647, %v3190
          %vm3397 = vcmp.eq.f32.partialorder %v3396, 8.507059e+37
          %v3398 = vand.u32 %v3190, 2147483648
          %v3399 = vor.u32 1.1754944e-38, %v3398
          %v3400 = vsel %vm3397, %v3399, %v3395
          %v3401 = vmul.f32 %v3333, %v3400
          %v3402 = vrcp.pop %v3191
          %v3403 = vmul.f32 %v3191, %v3402
          %v3404 = vsub.f32 1.0, %v3403
          %v3405 = vmul.f32 %v3402, %v3404
          %v3406 = vadd.f32 %v3402, %v3405
          %vm3407 = vweird.f32 %v3191
          %vm3408 = vweird.f32 %v3402
          %vm3409 = vmor %vm3407, %vm3408
          %v3410 = vsel %vm3409, %v3402, %v3406
          %v3411 = vand.u32 2147483647, %v3191
          %vm3412 = vcmp.eq.f32.partialorder %v3411, 8.507059e+37
          %v3413 = vand.u32 %v3191, 2147483648
          %v3414 = vor.u32 1.1754944e-38, %v3413
          %v3415 = vsel %vm3412, %v3414, %v3410
          %v3416 = vmul.f32 %v3334, %v3415
          %v3417 = vrcp.pop %v3192
          %v3418 = vmul.f32 %v3192, %v3417
          %v3419 = vsub.f32 1.0, %v3418
          %v3420 = vmul.f32 %v3417, %v3419
          %v3421 = vadd.f32 %v3417, %v3420
          %vm3422 = vweird.f32 %v3192
          %vm3423 = vweird.f32 %v3417
          %vm3424 = vmor %vm3422, %vm3423
          %v3425 = vsel %vm3424, %v3417, %v3421
          %v3426 = vand.u32 2147483647, %v3192
          %vm3427 = vcmp.eq.f32.partialorder %v3426, 8.507059e+37
          %v3428 = vand.u32 %v3192, 2147483648
          %v3429 = vor.u32 1.1754944e-38, %v3428
          %v3430 = vsel %vm3427, %v3429, %v3425
          %v3431 = vmul.f32 %v3335, %v3430
          %v3432 = vrcp.pop %v3193
          %v3433 = vmul.f32 %v3193, %v3432
          %v3434 = vsub.f32 1.0, %v3433
          %v3435 = vmul.f32 %v3432, %v3434
          %v3436 = vadd.f32 %v3432, %v3435
          %vm3437 = vweird.f32 %v3193
          %vm3438 = vweird.f32 %v3432
          %vm3439 = vmor %vm3437, %vm3438
          %v3440 = vsel %vm3439, %v3432, %v3436
          %v3441 = vand.u32 2147483647, %v3193
          %vm3442 = vcmp.eq.f32.partialorder %v3441, 8.507059e+37
          %v3443 = vand.u32 %v3193, 2147483648
          %v3444 = vor.u32 1.1754944e-38, %v3443
          %v3445 = vsel %vm3442, %v3444, %v3440
          %v3446 = vmul.f32 %v3336, %v3445
          %v3447 = vrcp.pop %v3194
          %v3448 = vmul.f32 %v3194, %v3447
          %v3449 = vsub.f32 1.0, %v3448
          %v3450 = vmul.f32 %v3447, %v3449
          %v3451 = vadd.f32 %v3447, %v3450
          %vm3452 = vweird.f32 %v3194
          %vm3453 = vweird.f32 %v3447
          %vm3454 = vmor %vm3452, %vm3453
          %v3455 = vsel %vm3454, %v3447, %v3451
          %v3456 = vand.u32 2147483647, %v3194
          %vm3457 = vcmp.eq.f32.partialorder %v3456, 8.507059e+37
          %v3458 = vand.u32 %v3194, 2147483648
          %v3459 = vor.u32 1.1754944e-38, %v3458
          %v3460 = vsel %vm3457, %v3459, %v3455
          %v3461 = vmul.f32 %v3337, %v3460
          %v3462 = vrcp.pop %v3195
          %v3463 = vmul.f32 %v3195, %v3462
          %v3464 = vsub.f32 1.0, %v3463
          %v3465 = vmul.f32 %v3462, %v3464
          %v3466 = vadd.f32 %v3462, %v3465
          %vm3467 = vweird.f32 %v3195
          %vm3468 = vweird.f32 %v3462
          %vm3469 = vmor %vm3467, %vm3468
          %v3470 = vsel %vm3469, %v3462, %v3466
          %v3471 = vand.u32 2147483647, %v3195
          %vm3472 = vcmp.eq.f32.partialorder %v3471, 8.507059e+37
          %v3473 = vand.u32 %v3195, 2147483648
          %v3474 = vor.u32 1.1754944e-38, %v3473
          %v3475 = vsel %vm3472, %v3474, %v3470
          %v3476 = vmul.f32 %v3338, %v3475
          %v3477 = vrcp.pop %v3196
          %v3478 = vmul.f32 %v3196, %v3477
          %v3479 = vsub.f32 1.0, %v3478
          %v3480 = vmul.f32 %v3477, %v3479
          %v3481 = vadd.f32 %v3477, %v3480
          %vm3482 = vweird.f32 %v3196
          %vm3483 = vweird.f32 %v3477
          %vm3484 = vmor %vm3482, %vm3483
          %v3485 = vsel %vm3484, %v3477, %v3481
          %v3486 = vand.u32 2147483647, %v3196
          %vm3487 = vcmp.eq.f32.partialorder %v3486, 8.507059e+37
          %v3488 = vand.u32 %v3196, 2147483648
          %v3489 = vor.u32 1.1754944e-38, %v3488
          %v3490 = vsel %vm3487, %v3489, %v3485
          %v3491 = vmul.f32 %v3339, %v3490
          %v3492 = vrcp.pop %v3197
          %v3493 = vmul.f32 %v3197, %v3492
          %v3494 = vsub.f32 1.0, %v3493
          %v3495 = vmul.f32 %v3492, %v3494
          %v3496 = vadd.f32 %v3492, %v3495
          %vm3497 = vweird.f32 %v3197
          %vm3498 = vweird.f32 %v3492
          %vm3499 = vmor %vm3497, %vm3498
          %v3500 = vsel %vm3499, %v3492, %v3496
          %v3501 = vand.u32 2147483647, %v3197
          %vm3502 = vcmp.eq.f32.partialorder %v3501, 8.507059e+37
          %v3503 = vand.u32 %v3197, 2147483648
          %v3504 = vor.u32 1.1754944e-38, %v3503
          %v3505 = vsel %vm3502, %v3504, %v3500
          %v3506 = vmul.f32 %v3340, %v3505
          %v3507 = vrcp.pop %v3198
          %v3508 = vmul.f32 %v3198, %v3507
          %v3509 = vsub.f32 1.0, %v3508
          %v3510 = vmul.f32 %v3507, %v3509
          %v3511 = vadd.f32 %v3507, %v3510
          %vm3512 = vweird.f32 %v3198
          %vm3513 = vweird.f32 %v3507
          %vm3514 = vmor %vm3512, %vm3513
          %v3515 = vsel %vm3514, %v3507, %v3511
          %v3516 = vand.u32 2147483647, %v3198
          %vm3517 = vcmp.eq.f32.partialorder %v3516, 8.507059e+37
          %v3518 = vand.u32 %v3198, 2147483648
          %v3519 = vor.u32 1.1754944e-38, %v3518
          %v3520 = vsel %vm3517, %v3519, %v3515
          %v3521 = vmul.f32 %v3341, %v3520
          %v3522 = vrot.slane %v365, 7
          %v3523 = vrot.slane %v366, 7
          %v3524 = vrot.slane %v367, 7
          %v3525 = vrot.slane %v368, 7
          %v3526 = vrot.slane %v369, 7
          %v3527 = vrot.slane %v370, 7
          %v3528 = vrot.slane %v371, 7
          %v3529 = vrot.slane %v372, 7
          %v3530 = vrot.slane %v373, 7
          %v3531 = vrot.slane %v374, 7
          %v3532 = vrot.slane %v375, 7
          %v3533 = vrot.slane %v376, 7
          %vm3534 = vcmp.lt.s32.totalorder %v325, 1
          %v3535 = vsel %vm3534, %v3530, %v3532
          %v3536 = vsel %vm3534, %v3531, %v3533
          %v3537 = vsel %vm3534, %v3528, %v3530
          %v3538 = vsel %vm3534, %v3529, %v3531
          %v3539 = vsel %vm3534, %v3526, %v3528
          %v3540 = vsel %vm3534, %v3527, %v3529
          %v3541 = vsel %vm3534, %v3524, %v3526
          %v3542 = vsel %vm3534, %v3525, %v3527
          %v3543 = vsel %vm3534, %v3522, %v3524
          %v3544 = vsel %vm3534, %v3523, %v3525
          %v3545 = vsel %vm3534, %v3532, %v3522
          %v3546 = vsel %vm3534, %v3533, %v3523
          %v3547 = vsel %vm347, 1, 0
          %v3548 = vsel %vm348, 1, 0
          %v3549 = vsel %vm349, 1, 0
          %v3550 = vsel %vm350, 1, 0
          %v3551 = vsel %vm351, 1, 0
          %v3552 = vsel %vm352, 1, 0
          %vm3553 = vcmp.eq.s32.totalorder %v3547, 1
          %vm3554 = vcmp.eq.s32.totalorder %v3548, 1
          %vm3555 = vcmp.eq.s32.totalorder %v3549, 1
          %vm3556 = vcmp.eq.s32.totalorder %v3550, 1
          %vm3557 = vcmp.eq.s32.totalorder %v3551, 1
          %vm3558 = vcmp.eq.s32.totalorder %v3552, 1
          %v3559 = vsel %vm3553, %v3545, 0.0
          %v3560 = vsel %vm3553, %v3546, 0.0
          %v3561 = vsel %vm3554, %v3543, 0.0
          %v3562 = vsel %vm3554, %v3544, 0.0
          %v3563 = vsel %vm3555, %v3541, 0.0
          %v3564 = vsel %vm3555, %v3542, 0.0
          %v3565 = vsel %vm3556, %v3539, 0.0
          %v3566 = vsel %vm3556, %v3540, 0.0
          %v3567 = vsel %vm3557, %v3537, 0.0
          %v3568 = vsel %vm3557, %v3538, 0.0
          %v3569 = vsel %vm3558, %v3535, 0.0
          %v3570 = vsel %vm3558, %v3536, 0.0
          %v3571 = vrot.slane %v365, 1
          %v3572 = vrot.slane %v366, 1
          %v3573 = vrot.slane %v367, 1
          %v3574 = vrot.slane %v368, 1
          %v3575 = vrot.slane %v369, 1
          %v3576 = vrot.slane %v370, 1
          %v3577 = vrot.slane %v371, 1
          %v3578 = vrot.slane %v372, 1
          %v3579 = vrot.slane %v373, 1
          %v3580 = vrot.slane %v374, 1
          %v3581 = vrot.slane %v375, 1
          %v3582 = vrot.slane %v376, 1
          %vm3583 = vcmp.lt.s32.totalorder %v325, 7
          %v3584 = vsel %vm3583, %v3579, %v3581
          %v3585 = vsel %vm3583, %v3580, %v3582
          %v3586 = vsel %vm3583, %v3577, %v3579
          %v3587 = vsel %vm3583, %v3578, %v3580
          %v3588 = vsel %vm3583, %v3575, %v3577
          %v3589 = vsel %vm3583, %v3576, %v3578
          %v3590 = vsel %vm3583, %v3573, %v3575
          %v3591 = vsel %vm3583, %v3574, %v3576
          %v3592 = vsel %vm3583, %v3571, %v3573
          %v3593 = vsel %vm3583, %v3572, %v3574
          %v3594 = vsel %vm3583, %v3581, %v3571
          %v3595 = vsel %vm3583, %v3582, %v3572
          %v3596 = vsel %vm341, 1, 0
          %v3597 = vsel %vm342, 1, 0
          %v3598 = vsel %vm343, 1, 0
          %v3599 = vsel %vm344, 1, 0
          %v3600 = vsel %vm345, 1, 0
          %v3601 = vsel %vm346, 1, 0
          %vm3602 = vcmp.eq.s32.totalorder %v3596, 1
          %vm3603 = vcmp.eq.s32.totalorder %v3597, 1
          %vm3604 = vcmp.eq.s32.totalorder %v3598, 1
          %vm3605 = vcmp.eq.s32.totalorder %v3599, 1
          %vm3606 = vcmp.eq.s32.totalorder %v3600, 1
          %vm3607 = vcmp.eq.s32.totalorder %v3601, 1
          %v3608 = vsel %vm3602, %v3592, 0.0
          %v3609 = vsel %vm3602, %v3593, 0.0
          %v3610 = vsel %vm3603, %v3590, 0.0
          %v3611 = vsel %vm3603, %v3591, 0.0
          %v3612 = vsel %vm3604, %v3588, 0.0
          %v3613 = vsel %vm3604, %v3589, 0.0
          %v3614 = vsel %vm3605, %v3586, 0.0
          %v3615 = vsel %vm3605, %v3587, 0.0
          %v3616 = vsel %vm3606, %v3584, 0.0
          %v3617 = vsel %vm3606, %v3585, 0.0
          %v3618 = vsel %vm3607, %v3594, 0.0
          %v3619 = vsel %vm3607, %v3595, 0.0
          %v3620 = vsub.f32 %v3559, %v3608
          %v3621 = vsub.f32 %v3560, %v3609
          %v3622 = vsub.f32 %v3561, %v3610
          %v3623 = vsub.f32 %v3562, %v3611
          %v3624 = vsub.f32 %v3563, %v3612
          %v3625 = vsub.f32 %v3564, %v3613
          %v3626 = vsub.f32 %v3565, %v3614
          %v3627 = vsub.f32 %v3566, %v3615
          %v3628 = vsub.f32 %v3567, %v3616
          %v3629 = vsub.f32 %v3568, %v3617
          %v3630 = vsub.f32 %v3569, %v3618
          %v3631 = vsub.f32 %v3570, %v3619
          %v3632 = vrcp.pop %v3212
          %v3633 = vmul.f32 %v3212, %v3632
          %v3634 = vsub.f32 1.0, %v3633
          %v3635 = vmul.f32 %v3632, %v3634
          %v3636 = vadd.f32 %v3632, %v3635
          %vm3637 = vweird.f32 %v3212
          %vm3638 = vweird.f32 %v3632
          %vm3639 = vmor %vm3637, %vm3638
          %v3640 = vsel %vm3639, %v3632, %v3636
          %v3641 = vand.u32 2147483647, %v3212
          %vm3642 = vcmp.eq.f32.partialorder %v3641, 8.507059e+37
          %v3643 = vand.u32 %v3212, 2147483648
          %v3644 = vor.u32 1.1754944e-38, %v3643
          %v3645 = vsel %vm3642, %v3644, %v3640
          %v3646 = vmul.f32 %v3620, %v3645
          %v3647 = vrcp.pop %v3213
          %v3648 = vmul.f32 %v3213, %v3647
          %v3649 = vsub.f32 1.0, %v3648
          %v3650 = vmul.f32 %v3647, %v3649
          %v3651 = vadd.f32 %v3647, %v3650
          %vm3652 = vweird.f32 %v3213
          %vm3653 = vweird.f32 %v3647
          %vm3654 = vmor %vm3652, %vm3653
          %v3655 = vsel %vm3654, %v3647, %v3651
          %v3656 = vand.u32 2147483647, %v3213
          %vm3657 = vcmp.eq.f32.partialorder %v3656, 8.507059e+37
          %v3658 = vand.u32 %v3213, 2147483648
          %v3659 = vor.u32 1.1754944e-38, %v3658
          %v3660 = vsel %vm3657, %v3659, %v3655
          %v3661 = vmul.f32 %v3621, %v3660
          %v3662 = vrcp.pop %v3214
          %v3663 = vmul.f32 %v3214, %v3662
          %v3664 = vsub.f32 1.0, %v3663
          %v3665 = vmul.f32 %v3662, %v3664
          %v3666 = vadd.f32 %v3662, %v3665
          %vm3667 = vweird.f32 %v3214
          %vm3668 = vweird.f32 %v3662
          %vm3669 = vmor %vm3667, %vm3668
          %v3670 = vsel %vm3669, %v3662, %v3666
          %v3671 = vand.u32 2147483647, %v3214
          %vm3672 = vcmp.eq.f32.partialorder %v3671, 8.507059e+37
          %v3673 = vand.u32 %v3214, 2147483648
          %v3674 = vor.u32 1.1754944e-38, %v3673
          %v3675 = vsel %vm3672, %v3674, %v3670
          %v3676 = vmul.f32 %v3622, %v3675
          %v3677 = vrcp.pop %v3215
          %v3678 = vmul.f32 %v3215, %v3677
          %v3679 = vsub.f32 1.0, %v3678
          %v3680 = vmul.f32 %v3677, %v3679
          %v3681 = vadd.f32 %v3677, %v3680
          %vm3682 = vweird.f32 %v3215
          %vm3683 = vweird.f32 %v3677
          %vm3684 = vmor %vm3682, %vm3683
          %v3685 = vsel %vm3684, %v3677, %v3681
          %v3686 = vand.u32 2147483647, %v3215
          %vm3687 = vcmp.eq.f32.partialorder %v3686, 8.507059e+37
          %v3688 = vand.u32 %v3215, 2147483648
          %v3689 = vor.u32 1.1754944e-38, %v3688
          %v3690 = vsel %vm3687, %v3689, %v3685
          %v3691 = vmul.f32 %v3623, %v3690
          %v3692 = vrcp.pop %v3216
          %v3693 = vmul.f32 %v3216, %v3692
          %v3694 = vsub.f32 1.0, %v3693
          %v3695 = vmul.f32 %v3692, %v3694
          %v3696 = vadd.f32 %v3692, %v3695
          %vm3697 = vweird.f32 %v3216
          %vm3698 = vweird.f32 %v3692
          %vm3699 = vmor %vm3697, %vm3698
          %v3700 = vsel %vm3699, %v3692, %v3696
          %v3701 = vand.u32 2147483647, %v3216
          %vm3702 = vcmp.eq.f32.partialorder %v3701, 8.507059e+37
          %v3703 = vand.u32 %v3216, 2147483648
          %v3704 = vor.u32 1.1754944e-38, %v3703
          %v3705 = vsel %vm3702, %v3704, %v3700
          %v3706 = vmul.f32 %v3624, %v3705
          %v3707 = vrcp.pop %v3217
          %v3708 = vmul.f32 %v3217, %v3707
          %v3709 = vsub.f32 1.0, %v3708
          %v3710 = vmul.f32 %v3707, %v3709
          %v3711 = vadd.f32 %v3707, %v3710
          %vm3712 = vweird.f32 %v3217
          %vm3713 = vweird.f32 %v3707
          %vm3714 = vmor %vm3712, %vm3713
          %v3715 = vsel %vm3714, %v3707, %v3711
          %v3716 = vand.u32 2147483647, %v3217
          %vm3717 = vcmp.eq.f32.partialorder %v3716, 8.507059e+37
          %v3718 = vand.u32 %v3217, 2147483648
          %v3719 = vor.u32 1.1754944e-38, %v3718
          %v3720 = vsel %vm3717, %v3719, %v3715
          %v3721 = vmul.f32 %v3625, %v3720
          %v3722 = vrcp.pop %v3218
          %v3723 = vmul.f32 %v3218, %v3722
          %v3724 = vsub.f32 1.0, %v3723
          %v3725 = vmul.f32 %v3722, %v3724
          %v3726 = vadd.f32 %v3722, %v3725
          %vm3727 = vweird.f32 %v3218
          %vm3728 = vweird.f32 %v3722
          %vm3729 = vmor %vm3727, %vm3728
          %v3730 = vsel %vm3729, %v3722, %v3726
          %v3731 = vand.u32 2147483647, %v3218
          %vm3732 = vcmp.eq.f32.partialorder %v3731, 8.507059e+37
          %v3733 = vand.u32 %v3218, 2147483648
          %v3734 = vor.u32 1.1754944e-38, %v3733
          %v3735 = vsel %vm3732, %v3734, %v3730
          %v3736 = vmul.f32 %v3626, %v3735
          %v3737 = vrcp.pop %v3219
          %v3738 = vmul.f32 %v3219, %v3737
          %v3739 = vsub.f32 1.0, %v3738
          %v3740 = vmul.f32 %v3737, %v3739
          %v3741 = vadd.f32 %v3737, %v3740
          %vm3742 = vweird.f32 %v3219
          %vm3743 = vweird.f32 %v3737
          %vm3744 = vmor %vm3742, %vm3743
          %v3745 = vsel %vm3744, %v3737, %v3741
          %v3746 = vand.u32 2147483647, %v3219
          %vm3747 = vcmp.eq.f32.partialorder %v3746, 8.507059e+37
          %v3748 = vand.u32 %v3219, 2147483648
          %v3749 = vor.u32 1.1754944e-38, %v3748
          %v3750 = vsel %vm3747, %v3749, %v3745
          %v3751 = vmul.f32 %v3627, %v3750
          %v3752 = vrcp.pop %v3220
          %v3753 = vmul.f32 %v3220, %v3752
          %v3754 = vsub.f32 1.0, %v3753
          %v3755 = vmul.f32 %v3752, %v3754
          %v3756 = vadd.f32 %v3752, %v3755
          %vm3757 = vweird.f32 %v3220
          %vm3758 = vweird.f32 %v3752
          %vm3759 = vmor %vm3757, %vm3758
          %v3760 = vsel %vm3759, %v3752, %v3756
          %v3761 = vand.u32 2147483647, %v3220
          %vm3762 = vcmp.eq.f32.partialorder %v3761, 8.507059e+37
          %v3763 = vand.u32 %v3220, 2147483648
          %v3764 = vor.u32 1.1754944e-38, %v3763
          %v3765 = vsel %vm3762, %v3764, %v3760
          %v3766 = vmul.f32 %v3628, %v3765
          %v3767 = vrcp.pop %v3221
          %v3768 = vmul.f32 %v3221, %v3767
          %v3769 = vsub.f32 1.0, %v3768
          %v3770 = vmul.f32 %v3767, %v3769
          %v3771 = vadd.f32 %v3767, %v3770
          %vm3772 = vweird.f32 %v3221
          %vm3773 = vweird.f32 %v3767
          %vm3774 = vmor %vm3772, %vm3773
          %v3775 = vsel %vm3774, %v3767, %v3771
          %v3776 = vand.u32 2147483647, %v3221
          %vm3777 = vcmp.eq.f32.partialorder %v3776, 8.507059e+37
          %v3778 = vand.u32 %v3221, 2147483648
          %v3779 = vor.u32 1.1754944e-38, %v3778
          %v3780 = vsel %vm3777, %v3779, %v3775
          %v3781 = vmul.f32 %v3629, %v3780
          %v3782 = vrcp.pop %v3222
          %v3783 = vmul.f32 %v3222, %v3782
          %v3784 = vsub.f32 1.0, %v3783
          %v3785 = vmul.f32 %v3782, %v3784
          %v3786 = vadd.f32 %v3782, %v3785
          %vm3787 = vweird.f32 %v3222
          %vm3788 = vweird.f32 %v3782
          %vm3789 = vmor %vm3787, %vm3788
          %v3790 = vsel %vm3789, %v3782, %v3786
          %v3791 = vand.u32 2147483647, %v3222
          %vm3792 = vcmp.eq.f32.partialorder %v3791, 8.507059e+37
          %v3793 = vand.u32 %v3222, 2147483648
          %v3794 = vor.u32 1.1754944e-38, %v3793
          %v3795 = vsel %vm3792, %v3794, %v3790
          %v3796 = vmul.f32 %v3630, %v3795
          %v3797 = vrcp.pop %v3223
          %v3798 = vmul.f32 %v3223, %v3797
          %v3799 = vsub.f32 1.0, %v3798
          %v3800 = vmul.f32 %v3797, %v3799
          %v3801 = vadd.f32 %v3797, %v3800
          %vm3802 = vweird.f32 %v3223
          %vm3803 = vweird.f32 %v3797
          %vm3804 = vmor %vm3802, %vm3803
          %v3805 = vsel %vm3804, %v3797, %v3801
          %v3806 = vand.u32 2147483647, %v3223
          %vm3807 = vcmp.eq.f32.partialorder %v3806, 8.507059e+37
          %v3808 = vand.u32 %v3223, 2147483648
          %v3809 = vor.u32 1.1754944e-38, %v3808
          %v3810 = vsel %vm3807, %v3809, %v3805
          %v3811 = vmul.f32 %v3631, %v3810
          %v3812 = vmul.f32 %v3356, %v3356
          %v3813 = vmul.f32 %v3371, %v3371
          %v3814 = vmul.f32 %v3386, %v3386
          %v3815 = vmul.f32 %v3401, %v3401
          %v3816 = vmul.f32 %v3416, %v3416
          %v3817 = vmul.f32 %v3431, %v3431
          %v3818 = vmul.f32 %v3446, %v3446
          %v3819 = vmul.f32 %v3461, %v3461
          %v3820 = vmul.f32 %v3476, %v3476
          %v3821 = vmul.f32 %v3491, %v3491
          %v3822 = vmul.f32 %v3506, %v3506
          %v3823 = vmul.f32 %v3521, %v3521
          %v3824 = vmul.f32 %v3646, %v3646
          %v3825 = vmul.f32 %v3661, %v3661
          %v3826 = vmul.f32 %v3676, %v3676
          %v3827 = vmul.f32 %v3691, %v3691
          %v3828 = vmul.f32 %v3706, %v3706
          %v3829 = vmul.f32 %v3721, %v3721
          %v3830 = vmul.f32 %v3736, %v3736
          %v3831 = vmul.f32 %v3751, %v3751
          %v3832 = vmul.f32 %v3766, %v3766
          %v3833 = vmul.f32 %v3781, %v3781
          %v3834 = vmul.f32 %v3796, %v3796
          %v3835 = vmul.f32 %v3811, %v3811
          %v3836 = vadd.f32 %v3812, %v3824
          %v3837 = vadd.f32 %v3813, %v3825
          %v3838 = vadd.f32 %v3814, %v3826
          %v3839 = vadd.f32 %v3815, %v3827
          %v3840 = vadd.f32 %v3816, %v3828
          %v3841 = vadd.f32 %v3817, %v3829
          %v3842 = vadd.f32 %v3818, %v3830
          %v3843 = vadd.f32 %v3819, %v3831
          %v3844 = vadd.f32 %v3820, %v3832
          %v3845 = vadd.f32 %v3821, %v3833
          %v3846 = vadd.f32 %v3822, %v3834
          %v3847 = vadd.f32 %v3823, %v3835
          %v3848 = vadd.f32 %v3836, 1.0
          %v3849 = vadd.f32 %v3837, 1.0
          %v3850 = vadd.f32 %v3838, 1.0
          %v3851 = vadd.f32 %v3839, 1.0
          %v3852 = vadd.f32 %v3840, 1.0
          %v3853 = vadd.f32 %v3841, 1.0
          %v3854 = vadd.f32 %v3842, 1.0
          %v3855 = vadd.f32 %v3843, 1.0
          %v3856 = vadd.f32 %v3844, 1.0
          %v3857 = vadd.f32 %v3845, 1.0
          %v3858 = vadd.f32 %v3846, 1.0
          %v3859 = vadd.f32 %v3847, 1.0
          %v3860 = vrsqrt.pop %v3848
          %v3861 = vmul.f32 %v3860, %v3848
          %v3862 = vmul.f32 %v3861, %v3860
          %v3863 = vmul.f32 0.5, %v3862
          %v3864 = vsub.f32 1.5, %v3863
          %v3865 = vmul.f32 %v3860, %v3864
          %v3866 = vmul.f32 %v3848, %v3865
          %vm3867 = vcmp.eq.f32.partialorder %v3848, inf
          %v3868 = vsel %vm3867, %v3848, %v3866
          %vm3869 = vcmp.eq.f32.partialorder %v3848, 0.0
          %v3870 = vand.u32 %v3848, 2147483648
          %v3871 = vsel %vm3869, %v3870, %v3868
          %v3872 = vrsqrt.pop %v3849
          %v3873 = vmul.f32 %v3872, %v3849
          %v3874 = vmul.f32 %v3873, %v3872
          %v3875 = vmul.f32 0.5, %v3874
          %v3876 = vsub.f32 1.5, %v3875
          %v3877 = vmul.f32 %v3872, %v3876
          %v3878 = vmul.f32 %v3849, %v3877
          %vm3879 = vcmp.eq.f32.partialorder %v3849, inf
          %v3880 = vsel %vm3879, %v3849, %v3878
          %vm3881 = vcmp.eq.f32.partialorder %v3849, 0.0
          %v3882 = vand.u32 %v3849, 2147483648
          %v3883 = vsel %vm3881, %v3882, %v3880
          %v3884 = vrsqrt.pop %v3850
          %v3885 = vmul.f32 %v3884, %v3850
          %v3886 = vmul.f32 %v3885, %v3884
          %v3887 = vmul.f32 0.5, %v3886
          %v3888 = vsub.f32 1.5, %v3887
          %v3889 = vmul.f32 %v3884, %v3888
          %v3890 = vmul.f32 %v3850, %v3889
          %vm3891 = vcmp.eq.f32.partialorder %v3850, inf
          %v3892 = vsel %vm3891, %v3850, %v3890
          %vm3893 = vcmp.eq.f32.partialorder %v3850, 0.0
          %v3894 = vand.u32 %v3850, 2147483648
          %v3895 = vsel %vm3893, %v3894, %v3892
          %v3896 = vrsqrt.pop %v3851
          %v3897 = vmul.f32 %v3896, %v3851
          %v3898 = vmul.f32 %v3897, %v3896
          %v3899 = vmul.f32 0.5, %v3898
          %v3900 = vsub.f32 1.5, %v3899
          %v3901 = vmul.f32 %v3896, %v3900
          %v3902 = vmul.f32 %v3851, %v3901
          %vm3903 = vcmp.eq.f32.partialorder %v3851, inf
          %v3904 = vsel %vm3903, %v3851, %v3902
          %vm3905 = vcmp.eq.f32.partialorder %v3851, 0.0
          %v3906 = vand.u32 %v3851, 2147483648
          %v3907 = vsel %vm3905, %v3906, %v3904
          %v3908 = vrsqrt.pop %v3852
          %v3909 = vmul.f32 %v3908, %v3852
          %v3910 = vmul.f32 %v3909, %v3908
          %v3911 = vmul.f32 0.5, %v3910
          %v3912 = vsub.f32 1.5, %v3911
          %v3913 = vmul.f32 %v3908, %v3912
          %v3914 = vmul.f32 %v3852, %v3913
          %vm3915 = vcmp.eq.f32.partialorder %v3852, inf
          %v3916 = vsel %vm3915, %v3852, %v3914
          %vm3917 = vcmp.eq.f32.partialorder %v3852, 0.0
          %v3918 = vand.u32 %v3852, 2147483648
          %v3919 = vsel %vm3917, %v3918, %v3916
          %v3920 = vrsqrt.pop %v3853
          %v3921 = vmul.f32 %v3920, %v3853
          %v3922 = vmul.f32 %v3921, %v3920
          %v3923 = vmul.f32 0.5, %v3922
          %v3924 = vsub.f32 1.5, %v3923
          %v3925 = vmul.f32 %v3920, %v3924
          %v3926 = vmul.f32 %v3853, %v3925
          %vm3927 = vcmp.eq.f32.partialorder %v3853, inf
          %v3928 = vsel %vm3927, %v3853, %v3926
          %vm3929 = vcmp.eq.f32.partialorder %v3853, 0.0
          %v3930 = vand.u32 %v3853, 2147483648
          %v3931 = vsel %vm3929, %v3930, %v3928
          %v3932 = vrsqrt.pop %v3854
          %v3933 = vmul.f32 %v3932, %v3854
          %v3934 = vmul.f32 %v3933, %v3932
          %v3935 = vmul.f32 0.5, %v3934
          %v3936 = vsub.f32 1.5, %v3935
          %v3937 = vmul.f32 %v3932, %v3936
          %v3938 = vmul.f32 %v3854, %v3937
          %vm3939 = vcmp.eq.f32.partialorder %v3854, inf
          %v3940 = vsel %vm3939, %v3854, %v3938
          %vm3941 = vcmp.eq.f32.partialorder %v3854, 0.0
          %v3942 = vand.u32 %v3854, 2147483648
          %v3943 = vsel %vm3941, %v3942, %v3940
          %v3944 = vrsqrt.pop %v3855
          %v3945 = vmul.f32 %v3944, %v3855
          %v3946 = vmul.f32 %v3945, %v3944
          %v3947 = vmul.f32 0.5, %v3946
          %v3948 = vsub.f32 1.5, %v3947
          %v3949 = vmul.f32 %v3944, %v3948
          %v3950 = vmul.f32 %v3855, %v3949
          %vm3951 = vcmp.eq.f32.partialorder %v3855, inf
          %v3952 = vsel %vm3951, %v3855, %v3950
          %vm3953 = vcmp.eq.f32.partialorder %v3855, 0.0
          %v3954 = vand.u32 %v3855, 2147483648
          %v3955 = vsel %vm3953, %v3954, %v3952
          %v3956 = vrsqrt.pop %v3856
          %v3957 = vmul.f32 %v3956, %v3856
          %v3958 = vmul.f32 %v3957, %v3956
          %v3959 = vmul.f32 0.5, %v3958
          %v3960 = vsub.f32 1.5, %v3959
          %v3961 = vmul.f32 %v3956, %v3960
          %v3962 = vmul.f32 %v3856, %v3961
          %vm3963 = vcmp.eq.f32.partialorder %v3856, inf
          %v3964 = vsel %vm3963, %v3856, %v3962
          %vm3965 = vcmp.eq.f32.partialorder %v3856, 0.0
          %v3966 = vand.u32 %v3856, 2147483648
          %v3967 = vsel %vm3965, %v3966, %v3964
          %v3968 = vrsqrt.pop %v3857
          %v3969 = vmul.f32 %v3968, %v3857
          %v3970 = vmul.f32 %v3969, %v3968
          %v3971 = vmul.f32 0.5, %v3970
          %v3972 = vsub.f32 1.5, %v3971
          %v3973 = vmul.f32 %v3968, %v3972
          %v3974 = vmul.f32 %v3857, %v3973
          %vm3975 = vcmp.eq.f32.partialorder %v3857, inf
          %v3976 = vsel %vm3975, %v3857, %v3974
          %vm3977 = vcmp.eq.f32.partialorder %v3857, 0.0
          %v3978 = vand.u32 %v3857, 2147483648
          %v3979 = vsel %vm3977, %v3978, %v3976
          %v3980 = vrsqrt.pop %v3858
          %v3981 = vmul.f32 %v3980, %v3858
          %v3982 = vmul.f32 %v3981, %v3980
          %v3983 = vmul.f32 0.5, %v3982
          %v3984 = vsub.f32 1.5, %v3983
          %v3985 = vmul.f32 %v3980, %v3984
          %v3986 = vmul.f32 %v3858, %v3985
          %vm3987 = vcmp.eq.f32.partialorder %v3858, inf
          %v3988 = vsel %vm3987, %v3858, %v3986
          %vm3989 = vcmp.eq.f32.partialorder %v3858, 0.0
          %v3990 = vand.u32 %v3858, 2147483648
          %v3991 = vsel %vm3989, %v3990, %v3988
          %v3992 = vrsqrt.pop %v3859
          %v3993 = vmul.f32 %v3992, %v3859
          %v3994 = vmul.f32 %v3993, %v3992
          %v3995 = vmul.f32 0.5, %v3994
          %v3996 = vsub.f32 1.5, %v3995
          %v3997 = vmul.f32 %v3992, %v3996
          %v3998 = vmul.f32 %v3859, %v3997
          %vm3999 = vcmp.eq.f32.partialorder %v3859, inf
          %v4000 = vsel %vm3999, %v3859, %v3998
          %vm4001 = vcmp.eq.f32.partialorder %v3859, 0.0
          %v4002 = vand.u32 %v3859, 2147483648
          %v4003 = vsel %vm4001, %v4002, %v4000
          %v4004 = vrcp.pop %v3871
          %v4005 = vmul.f32 %v3871, %v4004
          %v4006 = vsub.f32 1.0, %v4005
          %v4007 = vmul.f32 %v4004, %v4006
          %v4008 = vadd.f32 %v4004, %v4007
          %vm4009 = vweird.f32 %v3871
          %vm4010 = vweird.f32 %v4004
          %vm4011 = vmor %vm4009, %vm4010
          %v4012 = vsel %vm4011, %v4004, %v4008
          %v4013 = vand.u32 2147483647, %v3871
          %vm4014 = vcmp.eq.f32.partialorder %v4013, 8.507059e+37
          %v4015 = vand.u32 %v3871, 2147483648
          %v4016 = vor.u32 1.1754944e-38, %v4015
          %v4017 = vsel %vm4014, %v4016, %v4012
          %v4018 = vmul.f32 1.0, %v4017
          %v4019 = vrcp.pop %v3883
          %v4020 = vmul.f32 %v3883, %v4019
          %v4021 = vsub.f32 1.0, %v4020
          %v4022 = vmul.f32 %v4019, %v4021
          %v4023 = vadd.f32 %v4019, %v4022
          %vm4024 = vweird.f32 %v3883
          %vm4025 = vweird.f32 %v4019
          %vm4026 = vmor %vm4024, %vm4025
          %v4027 = vsel %vm4026, %v4019, %v4023
          %v4028 = vand.u32 2147483647, %v3883
          %vm4029 = vcmp.eq.f32.partialorder %v4028, 8.507059e+37
          %v4030 = vand.u32 %v3883, 2147483648
          %v4031 = vor.u32 1.1754944e-38, %v4030
          %v4032 = vsel %vm4029, %v4031, %v4027
          %v4033 = vmul.f32 1.0, %v4032
          %v4034 = vrcp.pop %v3895
          %v4035 = vmul.f32 %v3895, %v4034
          %v4036 = vsub.f32 1.0, %v4035
          %v4037 = vmul.f32 %v4034, %v4036
          %v4038 = vadd.f32 %v4034, %v4037
          %vm4039 = vweird.f32 %v3895
          %vm4040 = vweird.f32 %v4034
          %vm4041 = vmor %vm4039, %vm4040
          %v4042 = vsel %vm4041, %v4034, %v4038
          %v4043 = vand.u32 2147483647, %v3895
          %vm4044 = vcmp.eq.f32.partialorder %v4043, 8.507059e+37
          %v4045 = vand.u32 %v3895, 2147483648
          %v4046 = vor.u32 1.1754944e-38, %v4045
          %v4047 = vsel %vm4044, %v4046, %v4042
          %v4048 = vmul.f32 1.0, %v4047
          %v4049 = vrcp.pop %v3907
          %v4050 = vmul.f32 %v3907, %v4049
          %v4051 = vsub.f32 1.0, %v4050
          %v4052 = vmul.f32 %v4049, %v4051
          %v4053 = vadd.f32 %v4049, %v4052
          %vm4054 = vweird.f32 %v3907
          %vm4055 = vweird.f32 %v4049
          %vm4056 = vmor %vm4054, %vm4055
          %v4057 = vsel %vm4056, %v4049, %v4053
          %v4058 = vand.u32 2147483647, %v3907
          %vm4059 = vcmp.eq.f32.partialorder %v4058, 8.507059e+37
          %v4060 = vand.u32 %v3907, 2147483648
          %v4061 = vor.u32 1.1754944e-38, %v4060
          %v4062 = vsel %vm4059, %v4061, %v4057
          %v4063 = vmul.f32 1.0, %v4062
          %v4064 = vrcp.pop %v3919
          %v4065 = vmul.f32 %v3919, %v4064
          %v4066 = vsub.f32 1.0, %v4065
          %v4067 = vmul.f32 %v4064, %v4066
          %v4068 = vadd.f32 %v4064, %v4067
          %vm4069 = vweird.f32 %v3919
          %vm4070 = vweird.f32 %v4064
          %vm4071 = vmor %vm4069, %vm4070
          %v4072 = vsel %vm4071, %v4064, %v4068
          %v4073 = vand.u32 2147483647, %v3919
          %vm4074 = vcmp.eq.f32.partialorder %v4073, 8.507059e+37
          %v4075 = vand.u32 %v3919, 2147483648
          %v4076 = vor.u32 1.1754944e-38, %v4075
          %v4077 = vsel %vm4074, %v4076, %v4072
          %v4078 = vmul.f32 1.0, %v4077
          %v4079 = vrcp.pop %v3931
          %v4080 = vmul.f32 %v3931, %v4079
          %v4081 = vsub.f32 1.0, %v4080
          %v4082 = vmul.f32 %v4079, %v4081
          %v4083 = vadd.f32 %v4079, %v4082
          %vm4084 = vweird.f32 %v3931
          %vm4085 = vweird.f32 %v4079
          %vm4086 = vmor %vm4084, %vm4085
          %v4087 = vsel %vm4086, %v4079, %v4083
          %v4088 = vand.u32 2147483647, %v3931
          %vm4089 = vcmp.eq.f32.partialorder %v4088, 8.507059e+37
          %v4090 = vand.u32 %v3931, 2147483648
          %v4091 = vor.u32 1.1754944e-38, %v4090
          %v4092 = vsel %vm4089, %v4091, %v4087
          %v4093 = vmul.f32 1.0, %v4092
          %v4094 = vrcp.pop %v3943
          %v4095 = vmul.f32 %v3943, %v4094
          %v4096 = vsub.f32 1.0, %v4095
          %v4097 = vmul.f32 %v4094, %v4096
          %v4098 = vadd.f32 %v4094, %v4097
          %vm4099 = vweird.f32 %v3943
          %vm4100 = vweird.f32 %v4094
          %vm4101 = vmor %vm4099, %vm4100
          %v4102 = vsel %vm4101, %v4094, %v4098
          %v4103 = vand.u32 2147483647, %v3943
          %vm4104 = vcmp.eq.f32.partialorder %v4103, 8.507059e+37
          %v4105 = vand.u32 %v3943, 2147483648
          %v4106 = vor.u32 1.1754944e-38, %v4105
          %v4107 = vsel %vm4104, %v4106, %v4102
          %v4108 = vmul.f32 1.0, %v4107
          %v4109 = vrcp.pop %v3955
          %v4110 = vmul.f32 %v3955, %v4109
          %v4111 = vsub.f32 1.0, %v4110
          %v4112 = vmul.f32 %v4109, %v4111
          %v4113 = vadd.f32 %v4109, %v4112
          %vm4114 = vweird.f32 %v3955
          %vm4115 = vweird.f32 %v4109
          %vm4116 = vmor %vm4114, %vm4115
          %v4117 = vsel %vm4116, %v4109, %v4113
          %v4118 = vand.u32 2147483647, %v3955
          %vm4119 = vcmp.eq.f32.partialorder %v4118, 8.507059e+37
          %v4120 = vand.u32 %v3955, 2147483648
          %v4121 = vor.u32 1.1754944e-38, %v4120
          %v4122 = vsel %vm4119, %v4121, %v4117
          %v4123 = vmul.f32 1.0, %v4122
          %v4124 = vrcp.pop %v3967
          %v4125 = vmul.f32 %v3967, %v4124
          %v4126 = vsub.f32 1.0, %v4125
          %v4127 = vmul.f32 %v4124, %v4126
          %v4128 = vadd.f32 %v4124, %v4127
          %vm4129 = vweird.f32 %v3967
          %vm4130 = vweird.f32 %v4124
          %vm4131 = vmor %vm4129, %vm4130
          %v4132 = vsel %vm4131, %v4124, %v4128
          %v4133 = vand.u32 2147483647, %v3967
          %vm4134 = vcmp.eq.f32.partialorder %v4133, 8.507059e+37
          %v4135 = vand.u32 %v3967, 2147483648
          %v4136 = vor.u32 1.1754944e-38, %v4135
          %v4137 = vsel %vm4134, %v4136, %v4132
          %v4138 = vmul.f32 1.0, %v4137
          %v4139 = vrcp.pop %v3979
          %v4140 = vmul.f32 %v3979, %v4139
          %v4141 = vsub.f32 1.0, %v4140
          %v4142 = vmul.f32 %v4139, %v4141
          %v4143 = vadd.f32 %v4139, %v4142
          %vm4144 = vweird.f32 %v3979
          %vm4145 = vweird.f32 %v4139
          %vm4146 = vmor %vm4144, %vm4145
          %v4147 = vsel %vm4146, %v4139, %v4143
          %v4148 = vand.u32 2147483647, %v3979
          %vm4149 = vcmp.eq.f32.partialorder %v4148, 8.507059e+37
          %v4150 = vand.u32 %v3979, 2147483648
          %v4151 = vor.u32 1.1754944e-38, %v4150
          %v4152 = vsel %vm4149, %v4151, %v4147
          %v4153 = vmul.f32 1.0, %v4152
          %v4154 = vrcp.pop %v3991
          %v4155 = vmul.f32 %v3991, %v4154
          %v4156 = vsub.f32 1.0, %v4155
          %v4157 = vmul.f32 %v4154, %v4156
          %v4158 = vadd.f32 %v4154, %v4157
          %vm4159 = vweird.f32 %v3991
          %vm4160 = vweird.f32 %v4154
          %vm4161 = vmor %vm4159, %vm4160
          %v4162 = vsel %vm4161, %v4154, %v4158
          %v4163 = vand.u32 2147483647, %v3991
          %vm4164 = vcmp.eq.f32.partialorder %v4163, 8.507059e+37
          %v4165 = vand.u32 %v3991, 2147483648
          %v4166 = vor.u32 1.1754944e-38, %v4165
          %v4167 = vsel %vm4164, %v4166, %v4162
          %v4168 = vmul.f32 1.0, %v4167
          %v4169 = vrcp.pop %v4003
          %v4170 = vmul.f32 %v4003, %v4169
          %v4171 = vsub.f32 1.0, %v4170
          %v4172 = vmul.f32 %v4169, %v4171
          %v4173 = vadd.f32 %v4169, %v4172
          %vm4174 = vweird.f32 %v4003
          %vm4175 = vweird.f32 %v4169
          %vm4176 = vmor %vm4174, %vm4175
          %v4177 = vsel %vm4176, %v4169, %v4173
          %v4178 = vand.u32 2147483647, %v4003
          %vm4179 = vcmp.eq.f32.partialorder %v4178, 8.507059e+37
          %v4180 = vand.u32 %v4003, 2147483648
          %v4181 = vor.u32 1.1754944e-38, %v4180
          %v4182 = vsel %vm4179, %v4181, %v4177
          %v4183 = vmul.f32 1.0, %v4182
          %v4184 = vmul.f32 %v3356, %v4018
          %v4185 = vmul.f32 %v3371, %v4033
          %v4186 = vmul.f32 %v3386, %v4048
          %v4187 = vmul.f32 %v3401, %v4063
          %v4188 = vmul.f32 %v3416, %v4078
          %v4189 = vmul.f32 %v3431, %v4093
          %v4190 = vmul.f32 %v3446, %v4108
          %v4191 = vmul.f32 %v3461, %v4123
          %v4192 = vmul.f32 %v3476, %v4138
          %v4193 = vmul.f32 %v3491, %v4153
          %v4194 = vmul.f32 %v3506, %v4168
          %v4195 = vmul.f32 %v3521, %v4183
          %v4196 = vmul.f32 %v3646, %v4018
          %v4197 = vmul.f32 %v3661, %v4033
          %v4198 = vmul.f32 %v3676, %v4048
          %v4199 = vmul.f32 %v3691, %v4063
          %v4200 = vmul.f32 %v3706, %v4078
          %v4201 = vmul.f32 %v3721, %v4093
          %v4202 = vmul.f32 %v3736, %v4108
          %v4203 = vmul.f32 %v3751, %v4123
          %v4204 = vmul.f32 %v3766, %v4138
          %v4205 = vmul.f32 %v3781, %v4153
          %v4206 = vmul.f32 %v3796, %v4168
          %v4207 = vmul.f32 %v3811, %v4183
          %4208 = vrot.lane.b32.xlu0 %v4184, 127
          %v4209 = vpop.permute.xlu0 %4208
          %4210 = vrot.lane.b32.xlu0 %v4186, 127
          %v4211 = vpop.permute.xlu0 %4210
          %4212 = vrot.lane.b32.xlu0 %v4188, 127
          %v4213 = vpop.permute.xlu0 %4212
          %4214 = vrot.lane.b32.xlu0 %v4190, 127
          %v4215 = vpop.permute.xlu0 %4214
          %4216 = vrot.lane.b32.xlu0 %v4192, 127
          %v4217 = vpop.permute.xlu0 %4216
          %4218 = vrot.lane.b32.xlu0 %v4194, 127
          %v4219 = vpop.permute.xlu0 %4218
          %4220 = vrot.lane.b32.xlu0 %v4185, 127
          %v4221 = vpop.permute.xlu0 %4220
          %4222 = vrot.lane.b32.xlu0 %v4187, 127
          %v4223 = vpop.permute.xlu0 %4222
          %4224 = vrot.lane.b32.xlu0 %v4189, 127
          %v4225 = vpop.permute.xlu0 %4224
          %4226 = vrot.lane.b32.xlu0 %v4191, 127
          %v4227 = vpop.permute.xlu0 %4226
          %4228 = vrot.lane.b32.xlu0 %v4193, 127
          %v4229 = vpop.permute.xlu0 %4228
          %4230 = vrot.lane.b32.xlu0 %v4195, 127
          %v4231 = vpop.permute.xlu0 %4230
          %v4232 = vsel %vm3301, %v4209, %v4221
          %v4233 = vsel %vm3301, %v4211, %v4223
          %v4234 = vsel %vm3301, %v4213, %v4225
          %v4235 = vsel %vm3301, %v4215, %v4227
          %v4236 = vsel %vm3301, %v4217, %v4229
          %v4237 = vsel %vm3301, %v4219, %v4231
          %v4238 = vsel %vm3301, %v4221, %v4209
          %v4239 = vsel %vm3301, %v4223, %v4211
          %v4240 = vsel %vm3301, %v4225, %v4213
          %v4241 = vsel %vm3301, %v4227, %v4215
          %v4242 = vsel %vm3301, %v4229, %v4217
          %v4243 = vsel %vm3301, %v4231, %v4219
          %v4244 = vsel %vm3316, %v4232, 0.0
          %v4245 = vsel %vm3317, %v4238, 0.0
          %v4246 = vsel %vm3316, %v4233, 0.0
          %v4247 = vsel %vm3317, %v4239, 0.0
          %v4248 = vsel %vm3316, %v4234, 0.0
          %v4249 = vsel %vm3317, %v4240, 0.0
          %v4250 = vsel %vm3316, %v4235, 0.0
          %v4251 = vsel %vm3317, %v4241, 0.0
          %v4252 = vsel %vm3316, %v4236, 0.0
          %v4253 = vsel %vm3317, %v4242, 0.0
          %v4254 = vsel %vm3316, %v4237, 0.0
          %v4255 = vsel %vm3317, %v4243, 0.0
          %4256 = vrot.lane.b32.xlu0 %v4184, 1
          %v4257 = vpop.permute.xlu0 %4256
          %4258 = vrot.lane.b32.xlu0 %v4186, 1
          %v4259 = vpop.permute.xlu0 %4258
          %4260 = vrot.lane.b32.xlu0 %v4188, 1
          %v4261 = vpop.permute.xlu0 %4260
          %4262 = vrot.lane.b32.xlu0 %v4190, 1
          %v4263 = vpop.permute.xlu0 %4262
          %4264 = vrot.lane.b32.xlu0 %v4192, 1
          %v4265 = vpop.permute.xlu0 %4264
          %4266 = vrot.lane.b32.xlu0 %v4194, 1
          %v4267 = vpop.permute.xlu0 %4266
          %4268 = vrot.lane.b32.xlu0 %v4185, 1
          %v4269 = vpop.permute.xlu0 %4268
          %4270 = vrot.lane.b32.xlu0 %v4187, 1
          %v4271 = vpop.permute.xlu0 %4270
          %4272 = vrot.lane.b32.xlu0 %v4189, 1
          %v4273 = vpop.permute.xlu0 %4272
          %4274 = vrot.lane.b32.xlu0 %v4191, 1
          %v4275 = vpop.permute.xlu0 %4274
          %4276 = vrot.lane.b32.xlu0 %v4193, 1
          %v4277 = vpop.permute.xlu0 %4276
          %4278 = vrot.lane.b32.xlu0 %v4195, 1
          %v4279 = vpop.permute.xlu0 %4278
          %v4280 = vsel %vm3248, %v4257, %v4269
          %v4281 = vsel %vm3248, %v4259, %v4271
          %v4282 = vsel %vm3248, %v4261, %v4273
          %v4283 = vsel %vm3248, %v4263, %v4275
          %v4284 = vsel %vm3248, %v4265, %v4277
          %v4285 = vsel %vm3248, %v4267, %v4279
          %v4286 = vsel %vm3248, %v4269, %v4257
          %v4287 = vsel %vm3248, %v4271, %v4259
          %v4288 = vsel %vm3248, %v4273, %v4261
          %v4289 = vsel %vm3248, %v4275, %v4263
          %v4290 = vsel %vm3248, %v4277, %v4265
          %v4291 = vsel %vm3248, %v4279, %v4267
          %v4292 = vsel %vm3263, %v4286, 0.0
          %v4293 = vsel %vm3264, %v4280, 0.0
          %v4294 = vsel %vm3263, %v4287, 0.0
          %v4295 = vsel %vm3264, %v4281, 0.0
          %v4296 = vsel %vm3263, %v4288, 0.0
          %v4297 = vsel %vm3264, %v4282, 0.0
          %v4298 = vsel %vm3263, %v4289, 0.0
          %v4299 = vsel %vm3264, %v4283, 0.0
          %v4300 = vsel %vm3263, %v4290, 0.0
          %v4301 = vsel %vm3264, %v4284, 0.0
          %v4302 = vsel %vm3263, %v4291, 0.0
          %v4303 = vsel %vm3264, %v4285, 0.0
          %v4304 = vsub.f32 %v4244, %v4292
          %v4305 = vsub.f32 %v4245, %v4293
          %v4306 = vsub.f32 %v4246, %v4294
          %v4307 = vsub.f32 %v4247, %v4295
          %v4308 = vsub.f32 %v4248, %v4296
          %v4309 = vsub.f32 %v4249, %v4297
          %v4310 = vsub.f32 %v4250, %v4298
          %v4311 = vsub.f32 %v4251, %v4299
          %v4312 = vsub.f32 %v4252, %v4300
          %v4313 = vsub.f32 %v4253, %v4301
          %v4314 = vsub.f32 %v4254, %v4302
          %v4315 = vsub.f32 %v4255, %v4303
          %v4316 = vrot.slane %v4196, 1
          %v4317 = vrot.slane %v4197, 1
          %v4318 = vrot.slane %v4198, 1
          %v4319 = vrot.slane %v4199, 1
          %v4320 = vrot.slane %v4200, 1
          %v4321 = vrot.slane %v4201, 1
          %v4322 = vrot.slane %v4202, 1
          %v4323 = vrot.slane %v4203, 1
          %v4324 = vrot.slane %v4204, 1
          %v4325 = vrot.slane %v4205, 1
          %v4326 = vrot.slane %v4206, 1
          %v4327 = vrot.slane %v4207, 1
          %v4328 = vsel %vm3583, %v4324, %v4326
          %v4329 = vsel %vm3583, %v4325, %v4327
          %v4330 = vsel %vm3583, %v4322, %v4324
          %v4331 = vsel %vm3583, %v4323, %v4325
          %v4332 = vsel %vm3583, %v4320, %v4322
          %v4333 = vsel %vm3583, %v4321, %v4323
          %v4334 = vsel %vm3583, %v4318, %v4320
          %v4335 = vsel %vm3583, %v4319, %v4321
          %v4336 = vsel %vm3583, %v4316, %v4318
          %v4337 = vsel %vm3583, %v4317, %v4319
          %v4338 = vsel %vm3583, %v4326, %v4316
          %v4339 = vsel %vm3583, %v4327, %v4317
          %v4340 = vsel %vm3602, %v4336, 0.0
          %v4341 = vsel %vm3602, %v4337, 0.0
          %v4342 = vsel %vm3603, %v4334, 0.0
          %v4343 = vsel %vm3603, %v4335, 0.0
          %v4344 = vsel %vm3604, %v4332, 0.0
          %v4345 = vsel %vm3604, %v4333, 0.0
          %v4346 = vsel %vm3605, %v4330, 0.0
          %v4347 = vsel %vm3605, %v4331, 0.0
          %v4348 = vsel %vm3606, %v4328, 0.0
          %v4349 = vsel %vm3606, %v4329, 0.0
          %v4350 = vsel %vm3607, %v4338, 0.0
          %v4351 = vsel %vm3607, %v4339, 0.0
          %v4352 = vrot.slane %v4196, 7
          %v4353 = vrot.slane %v4197, 7
          %v4354 = vrot.slane %v4198, 7
          %v4355 = vrot.slane %v4199, 7
          %v4356 = vrot.slane %v4200, 7
          %v4357 = vrot.slane %v4201, 7
          %v4358 = vrot.slane %v4202, 7
          %v4359 = vrot.slane %v4203, 7
          %v4360 = vrot.slane %v4204, 7
          %v4361 = vrot.slane %v4205, 7
          %v4362 = vrot.slane %v4206, 7
          %v4363 = vrot.slane %v4207, 7
          %v4364 = vsel %vm3534, %v4360, %v4362
          %v4365 = vsel %vm3534, %v4361, %v4363
          %v4366 = vsel %vm3534, %v4358, %v4360
          %v4367 = vsel %vm3534, %v4359, %v4361
          %v4368 = vsel %vm3534, %v4356, %v4358
          %v4369 = vsel %vm3534, %v4357, %v4359
          %v4370 = vsel %vm3534, %v4354, %v4356
          %v4371 = vsel %vm3534, %v4355, %v4357
          %v4372 = vsel %vm3534, %v4352, %v4354
          %v4373 = vsel %vm3534, %v4353, %v4355
          %v4374 = vsel %vm3534, %v4362, %v4352
          %v4375 = vsel %vm3534, %v4363, %v4353
          %v4376 = vsel %vm3553, %v4374, 0.0
          %v4377 = vsel %vm3553, %v4375, 0.0
          %v4378 = vsel %vm3554, %v4372, 0.0
          %v4379 = vsel %vm3554, %v4373, 0.0
          %v4380 = vsel %vm3555, %v4370, 0.0
          %v4381 = vsel %vm3555, %v4371, 0.0
          %v4382 = vsel %vm3556, %v4368, 0.0
          %v4383 = vsel %vm3556, %v4369, 0.0
          %v4384 = vsel %vm3557, %v4366, 0.0
          %v4385 = vsel %vm3557, %v4367, 0.0
          %v4386 = vsel %vm3558, %v4364, 0.0
          %v4387 = vsel %vm3558, %v4365, 0.0
          %v4388 = vsub.f32 %v4340, %v4376
          %v4389 = vsub.f32 %v4341, %v4377
          %v4390 = vsub.f32 %v4342, %v4378
          %v4391 = vsub.f32 %v4343, %v4379
          %v4392 = vsub.f32 %v4344, %v4380
          %v4393 = vsub.f32 %v4345, %v4381
          %v4394 = vsub.f32 %v4346, %v4382
          %v4395 = vsub.f32 %v4347, %v4383
          %v4396 = vsub.f32 %v4348, %v4384
          %v4397 = vsub.f32 %v4349, %v4385
          %v4398 = vsub.f32 %v4350, %v4386
          %v4399 = vsub.f32 %v4351, %v4387
          %v4400 = vadd.f32 %v4304, %v4388
          %v4401 = vadd.f32 %v4305, %v4389
          %v4402 = vadd.f32 %v4306, %v4390
          %v4403 = vadd.f32 %v4307, %v4391
          %v4404 = vadd.f32 %v4308, %v4392
          %v4405 = vadd.f32 %v4309, %v4393
          %v4406 = vadd.f32 %v4310, %v4394
          %v4407 = vadd.f32 %v4311, %v4395
          %v4408 = vadd.f32 %v4312, %v4396
          %v4409 = vadd.f32 %v4313, %v4397
          %v4410 = vadd.f32 %v4314, %v4398
          %v4411 = vadd.f32 %v4315, %v4399
          %v4412 = vrot.slane %v4402, 7
          %v4413 = vrot.slane %v4403, 7
          %v4414 = vrot.slane %v4404, 7
          %v4415 = vrot.slane %v4405, 7
          %v4416 = vrot.slane %v4406, 7
          %v4417 = vrot.slane %v4407, 7
          %v4418 = vrot.slane %v4408, 7
          %v4419 = vrot.slane %v4409, 7
          %v4420 = vrot.slane %v4410, 7
          %v4421 = vrot.slane %v4411, 7
          %v4422 = vsel %vm3534, %v4418, %v4420
          %v4423 = vsel %vm3534, %v4419, %v4421
          %v4424 = vsel %vm3534, %v4416, %v4418
          %v4425 = vsel %vm3534, %v4417, %v4419
          %v4426 = vsel %vm3534, %v4414, %v4416
          %v4427 = vsel %vm3534, %v4415, %v4417
          %v4428 = vsel %vm3534, %v4412, %v4414
          %v4429 = vsel %vm3534, %v4413, %v4415
          %v4430 = vsel %vm3555, %v4428, 0.0
          %v4431 = vsel %vm3555, %v4429, 0.0
          %v4432 = vsel %vm3556, %v4426, 0.0
          %v4433 = vsel %vm3556, %v4427, 0.0
          %v4434 = vsel %vm3557, %v4424, 0.0
          %v4435 = vsel %vm3557, %v4425, 0.0
          %v4436 = vsel %vm3558, %v4422, 0.0
          %v4437 = vsel %vm3558, %v4423, 0.0
          %v4438 = vadd.f32 %v4430, %v4404
          %v4439 = vadd.f32 %v4431, %v4405
          %v4440 = vadd.f32 %v4432, %v4406
          %v4441 = vadd.f32 %v4433, %v4407
          %v4442 = vadd.f32 %v4434, %v4408
          %v4443 = vadd.f32 %v4435, %v4409
          %v4444 = vadd.f32 %v4436, %v4410
          %v4445 = vadd.f32 %v4437, %v4411
          %v4446 = vrot.slane %v4400, 1
          %v4447 = vrot.slane %v4401, 1
          %v4448 = vrot.slane %v4404, 1
          %v4449 = vrot.slane %v4405, 1
          %v4450 = vrot.slane %v4406, 1
          %v4451 = vrot.slane %v4407, 1
          %v4452 = vrot.slane %v4408, 1
          %v4453 = vrot.slane %v4409, 1
          %v4454 = vrot.slane %v4410, 1
          %v4455 = vrot.slane %v4411, 1
          %v4456 = vsel %vm3583, %v4452, %v4454
          %v4457 = vsel %vm3583, %v4453, %v4455
          %v4458 = vsel %vm3583, %v4450, %v4452
          %v4459 = vsel %vm3583, %v4451, %v4453
          %v4460 = vsel %vm3583, %v4448, %v4450
          %v4461 = vsel %vm3583, %v4449, %v4451
          %v4462 = vsel %vm3583, %v4454, %v4446
          %v4463 = vsel %vm3583, %v4455, %v4447
          %v4464 = vsel %vm3604, %v4460, 0.0
          %v4465 = vsel %vm3604, %v4461, 0.0
          %v4466 = vsel %vm3605, %v4458, 0.0
          %v4467 = vsel %vm3605, %v4459, 0.0
          %v4468 = vsel %vm3606, %v4456, 0.0
          %v4469 = vsel %vm3606, %v4457, 0.0
          %v4470 = vsel %vm3607, %v4462, 0.0
          %v4471 = vsel %vm3607, %v4463, 0.0
          %v4472 = vadd.f32 %v4438, %v4464
          %v4473 = vadd.f32 %v4439, %v4465
          %v4474 = vadd.f32 %v4440, %v4466
          %v4475 = vadd.f32 %v4441, %v4467
          %v4476 = vadd.f32 %v4442, %v4468
          %v4477 = vadd.f32 %v4443, %v4469
          %v4478 = vadd.f32 %v4444, %v4470
          %v4479 = vadd.f32 %v4445, %v4471
          %4480 = vrot.lane.b32.xlu0 %v4472, 1
          %v4481 = vpop.permute.xlu0 %4480
          %4482 = vrot.lane.b32.xlu0 %v4474, 1
          %v4483 = vpop.permute.xlu0 %4482
          %4484 = vrot.lane.b32.xlu0 %v4476, 1
          %v4485 = vpop.permute.xlu0 %4484
          %4486 = vrot.lane.b32.xlu0 %v4478, 1
          %v4487 = vpop.permute.xlu0 %4486
          %4488 = vrot.lane.b32.xlu0 %v4473, 1
          %v4489 = vpop.permute.xlu0 %4488
          %4490 = vrot.lane.b32.xlu0 %v4475, 1
          %v4491 = vpop.permute.xlu0 %4490
          %4492 = vrot.lane.b32.xlu0 %v4477, 1
          %v4493 = vpop.permute.xlu0 %4492
          %4494 = vrot.lane.b32.xlu0 %v4479, 1
          %v4495 = vpop.permute.xlu0 %4494
          %v4496 = vsel %vm3248, %v4481, %v4489
          %v4497 = vsel %vm3248, %v4483, %v4491
          %v4498 = vsel %vm3248, %v4485, %v4493
          %v4499 = vsel %vm3248, %v4487, %v4495
          %v4500 = vsel %vm3248, %v4489, %v4481
          %v4501 = vsel %vm3248, %v4491, %v4483
          %v4502 = vsel %vm3248, %v4493, %v4485
          %v4503 = vsel %vm3248, %v4495, %v4487
          %v4504 = vsel %vm3263, %v4500, 0.0
          %v4505 = vsel %vm3264, %v4496, 0.0
          %v4506 = vsel %vm3263, %v4501, 0.0
          %v4507 = vsel %vm3264, %v4497, 0.0
          %v4508 = vsel %vm3263, %v4502, 0.0
          %v4509 = vsel %vm3264, %v4498, 0.0
          %v4510 = vsel %vm3263, %v4503, 0.0
          %v4511 = vsel %vm3264, %v4499, 0.0
          %v4512 = vadd.f32 %v4504, %v4472
          %v4513 = vadd.f32 %v4505, %v4473
          %v4514 = vadd.f32 %v4506, %v4474
          %v4515 = vadd.f32 %v4507, %v4475
          %v4516 = vadd.f32 %v4508, %v4476
          %v4517 = vadd.f32 %v4509, %v4477
          %v4518 = vadd.f32 %v4510, %v4478
          %v4519 = vadd.f32 %v4511, %v4479
          %4520 = vrot.lane.b32.xlu0 %v4472, 127
          %v4521 = vpop.permute.xlu0 %4520
          %4522 = vrot.lane.b32.xlu0 %v4474, 127
          %v4523 = vpop.permute.xlu0 %4522
          %4524 = vrot.lane.b32.xlu0 %v4476, 127
          %v4525 = vpop.permute.xlu0 %4524
          %4526 = vrot.lane.b32.xlu0 %v4478, 127
          %v4527 = vpop.permute.xlu0 %4526
          %4528 = vrot.lane.b32.xlu0 %v4473, 127
          %v4529 = vpop.permute.xlu0 %4528
          %4530 = vrot.lane.b32.xlu0 %v4475, 127
          %v4531 = vpop.permute.xlu0 %4530
          %4532 = vrot.lane.b32.xlu0 %v4477, 127
          %v4533 = vpop.permute.xlu0 %4532
          %4534 = vrot.lane.b32.xlu0 %v4479, 127
          %v4535 = vpop.permute.xlu0 %4534
          %v4536 = vsel %vm3301, %v4521, %v4529
          %v4537 = vsel %vm3301, %v4523, %v4531
          %v4538 = vsel %vm3301, %v4525, %v4533
          %v4539 = vsel %vm3301, %v4527, %v4535
          %v4540 = vsel %vm3301, %v4529, %v4521
          %v4541 = vsel %vm3301, %v4531, %v4523
          %v4542 = vsel %vm3301, %v4533, %v4525
          %v4543 = vsel %vm3301, %v4535, %v4527
          %v4544 = vsel %vm3316, %v4536, 0.0
          %v4545 = vsel %vm3317, %v4540, 0.0
          %v4546 = vsel %vm3316, %v4537, 0.0
          %v4547 = vsel %vm3317, %v4541, 0.0
          %v4548 = vsel %vm3316, %v4538, 0.0
          %v4549 = vsel %vm3317, %v4542, 0.0
          %v4550 = vsel %vm3316, %v4539, 0.0
          %v4551 = vsel %vm3317, %v4543, 0.0
          %v4552 = vadd.f32 %v4512, %v4544
          %v4553 = vadd.f32 %v4513, %v4545
          %v4554 = vadd.f32 %v4514, %v4546
          %v4555 = vadd.f32 %v4515, %v4547
          %v4556 = vadd.f32 %v4516, %v4548
          %v4557 = vadd.f32 %v4517, %v4549
          %v4558 = vadd.f32 %v4518, %v4550
          %v4559 = vadd.f32 %v4519, %v4551
          %v4560 = vand.u32 2147483647, %v4552
          %v4561 = vand.u32 2147483647, %v4553
          %v4562 = vand.u32 2147483647, %v4554
          %v4563 = vand.u32 2147483647, %v4555
          %v4564 = vand.u32 2147483647, %v4556
          %v4565 = vand.u32 2147483647, %v4557
          %v4566 = vand.u32 2147483647, %v4558
          %v4567 = vand.u32 2147483647, %v4559
          %v4568 = vmul.f32 %v4560, 0.027777778
          %v4569 = vmul.f32 %v4561, 0.027777778
          %v4570 = vmul.f32 %v4562, 0.027777778
          %v4571 = vmul.f32 %v4563, 0.027777778
          %v4572 = vmul.f32 %v4564, 0.027777778
          %v4573 = vmul.f32 %v4565, 0.027777778
          %v4574 = vmul.f32 %v4566, 0.027777778
          %v4575 = vmul.f32 %v4567, 0.027777778
          %4576 = vst [vmem:[%s196] sm:$0xff] %v4188
          %4577 = vst [vmem:[%s196 + $0x8] sm:$0xff] %v4189
          %4578 = vst [vmem:[%s196 + $0x10] sm:$0xff] %v4190
          %4579 = vst [vmem:[%s196 + $0x18] sm:$0xff] %v4191
          %4580 = vst [vmem:[%s196 + $0x20] sm:$0xff] %v4192
          %4581 = vst [vmem:[%s196 + $0x28] sm:$0xff] %v4193
          %4582 = vst [vmem:[%s196 + $0x30] sm:$0xff] %v4194
          %4583 = vst [vmem:[%s196 + $0x38] sm:$0xff] %v4195
          %s4584 = scalar_lea.vmem %s196, 64 [#allocation9]
          %4585 = vst [vmem:[%s4584] sm:$0xff] %v4200
          %4586 = vst [vmem:[%s4584 + $0x8] sm:$0xff] %v4201
          %4587 = vst [vmem:[%s4584 + $0x10] sm:$0xff] %v4202
          %4588 = vst [vmem:[%s4584 + $0x18] sm:$0xff] %v4203
          %4589 = vst [vmem:[%s4584 + $0x20] sm:$0xff] %v4204
          %4590 = vst [vmem:[%s4584 + $0x28] sm:$0xff] %v4205
          %4591 = vst [vmem:[%s4584 + $0x30] sm:$0xff] %v4206
          %4592 = vst [vmem:[%s4584 + $0x38] sm:$0xff] %v4207
          %s4593 = scalar_lea.vmem %s196, 128 [#allocation9]
          %4594 = vst [vmem:[%s4593] sm:$0xff] %v4078
          %4595 = vst [vmem:[%s4593 + $0x8] sm:$0xff] %v4093
          %4596 = vst [vmem:[%s4593 + $0x10] sm:$0xff] %v4108
          %4597 = vst [vmem:[%s4593 + $0x18] sm:$0xff] %v4123
          %4598 = vst [vmem:[%s4593 + $0x20] sm:$0xff] %v4138
          %4599 = vst [vmem:[%s4593 + $0x28] sm:$0xff] %v4153
          %4600 = vst [vmem:[%s4593 + $0x30] sm:$0xff] %v4168
          %4601 = vst [vmem:[%s4593 + $0x38] sm:$0xff] %v4183
          %4602 = vst [vmem:[%s203] sm:$0xff] %v4568
          %4603 = vst [vmem:[%s203 + $0x8] sm:$0xff] %v4569
          %4604 = vst [vmem:[%s203 + $0x10] sm:$0xff] %v4570
          %4605 = vst [vmem:[%s203 + $0x18] sm:$0xff] %v4571
          %4606 = vst [vmem:[%s203 + $0x20] sm:$0xff] %v4572
          %4607 = vst [vmem:[%s203 + $0x28] sm:$0xff] %v4573
          %4608 = vst [vmem:[%s203 + $0x30] sm:$0xff] %v4574
          %4609 = vst [vmem:[%s203 + $0x38] sm:$0xff] %v4575
        $region64: #{tpu_custom_call.1} parent=27 // pred_fallthru
          _
        %s4610 = sand.u32 %s88, 1
        %s4611 = scalar_lea.sflag [#allocation5], %s4610
        %s4612 = sand.u32 %s88, 1
        %s4613 = smul.addr %s4612, 192
        %s4614 = scalar_lea.vmem [#allocation9], %s4613
        %s4615 = sand.u32 %s116, 1
        %s4616 = scalar_lea.sflag [#allocation11], %s4615
        %s4617 = sand.u32 %s116, 1
        %s4618 = smul.addr %s4617, 64
        %s4619 = scalar_lea.vmem [#allocation10], %s4618
        // Predicated region
        $region65: #{tpu_custom_call.1} parent=27 // pred_check
          %p4620 = pneg %p98
        $region66: #{tpu_custom_call.1} parent=27 // pred_check_branch
          %4622 = sbr.rel (%p4620) target = $region68
        $region67: #{tpu_custom_call.1} parent=27 // pred_region
          #allocation19 [shape = 'u32[6]{0}', space=smem, size = 0x18, scoped, tag = 'DMA stride descriptor']
          %s4623 = smul.u32 4, %s29
          %4625 = vsyncadd %s4611, 0
          %s4626 = smul.addr %s4623, 2
          %s4627 = smul.addr %s28, 72
          %s4628 = sadd.s32 %s4626, %s4627
          %s4629 = smul.addr %s4628, 8
          %s4630 = scalar_lea.hbm %s3, %s4629
          %s4632 = sshll.u32 1, 14
          %s4633 = sxor.u32 4294967295, %s4632
          %s4636 = sshll.u32 7, 18
          %s4637 = sxor.u32 4294967295, %s4636
          %s4638 = sand.u32 0, %s4637
          %s4640 = sor.u32 %s4638, 0
          %s4641 = sshll.u32 %s4614, 4
          %s4642 = int_to_ptr.vmem [resolvable:$true] %s4641
          %s4643 = sshll.u32 %s4630, 4
          %s4644 = int_to_ptr.hbm [resolvable:$true] %s4643
          %4650 = sst [smem:[#allocation19]] 1024
          %s4651 = scalar_lea.smem [#allocation19], 1
          %4652 = sst [smem:[%s4651]] 3072
          %s4653 = scalar_lea.smem [#allocation19], 2
          %4654 = sst [smem:[%s4653]] 4
          %s4655 = scalar_lea.smem [#allocation19], 3
          %4656 = sst [smem:[%s4655]] 256
          %s4657 = scalar_lea.smem [#allocation19], 4
          %4658 = sst [smem:[%s4657]] 256
          %s4659 = scalar_lea.smem [#allocation19], 5
          %4660 = sst [smem:[%s4659]] 16
          %4662 = dma.general %s4642, 3072, %s4644, %s4611, [#allocation18], [#allocation19], %s4640, 0
        $region68: #{tpu_custom_call.1} parent=27 // pred_fallthru
          _
        // Predicated region
        $region69: #{tpu_custom_call.1} parent=27 // pred_check
          %p4663 = pneg %p126
        $region70: #{tpu_custom_call.1} parent=27 // pred_check_branch
          %4665 = sbr.rel (%p4663) target = $region72
        $region71: #{tpu_custom_call.1} parent=27 // pred_region
          %s4666 = smul.u32 4, %s29
          %4668 = vsyncadd %s4616, 0
          %s4669 = smul.addr %s4666, 2
          %s4670 = smul.addr %s28, 24
          %s4671 = sadd.s32 %s4669, %s4670
          %s4672 = smul.addr %s4671, 8
          %s4673 = scalar_lea.hbm %s4, %s4672
          %s4674 = sshll.u32 %s4619, 4
          %s4675 = int_to_ptr.vmem [resolvable:$true] %s4674
          %s4676 = sshll.u32 %s4673, 4
          %s4677 = int_to_ptr.hbm [resolvable:$true] %s4676
          %4682 = dma.vmem_to_hbm [thread:$0]  %s4675, 1024, %s4677, %s4616, 256, 256, 16
        $region72: #{tpu_custom_call.1} parent=27 // pred_fallthru
          _
      $region28: #{tpu_custom_call.1} parent=5 // pred_fallthru
        _
      %p4683 = scmp.le.s32.totalorder 2, %s19
      // Predicated region
      $region73: #{tpu_custom_call.1} parent=5 // pred_check
        %p4684 = pneg %p4683
      $region74: #{tpu_custom_call.1} parent=5 // pred_check_branch
        %4686 = sbr.rel (%p4684) target = $region76
      $region75: #{tpu_custom_call.1} parent=5 // pred_region
        %s4687 = ssub.s32 %s19, 2
        // Predicated region
        $region77: #{tpu_custom_call.1} parent=75 // pred_check
          %p4688 = pneg %p104
        $region78: #{tpu_custom_call.1} parent=75 // pred_check_branch
          %4690 = sbr.rel (%p4688) target = $region80
        $region79: #{tpu_custom_call.1} parent=75 // pred_region
          %s4691 = sand.u32 %s89, 1
          %s4692 = scalar_lea.sflag [#allocation5], %s4691
          %s4693 = sand.u32 %s89, 1
          %s4694 = smul.addr %s4693, 192
          %s4695 = scalar_lea.vmem [#allocation9], %s4694
          %4697 = dma.done %s4692, 3072
        $region80: #{tpu_custom_call.1} parent=75 // pred_fallthru
          _
        // Predicated region
        $region81: #{tpu_custom_call.1} parent=75 // pred_check
          %p4698 = pneg %p132
        $region82: #{tpu_custom_call.1} parent=75 // pred_check_branch
          %4700 = sbr.rel (%p4698) target = $region84
        $region83: #{tpu_custom_call.1} parent=75 // pred_region
          %s4701 = sand.u32 %s117, 1
          %s4702 = scalar_lea.sflag [#allocation11], %s4701
          %s4703 = sand.u32 %s117, 1
          %s4704 = smul.addr %s4703, 64
          %s4705 = scalar_lea.vmem [#allocation10], %s4704
          %4707 = dma.done %s4702, 1024
        $region84: #{tpu_custom_call.1} parent=75 // pred_fallthru
          _
      $region76: #{tpu_custom_call.1} parent=5 // pred_fallthru
        _
    $region6: #{tpu_custom_call.1} parent=1 // loop_footer
      %s23 = sadd.s32 1, %s19
    $region7: #{tpu_custom_call.1} parent=1 // loop_footer_branch
      %18 = sbr.rel target = $region3
    $region8: #{tpu_custom_call.1} parent=1 // loop_exit
      _
    %4708 = vsyncpa [#allocation5], 1
    %s4709 = scalar_lea.sflag [#allocation5], 1
    %4710 = vsyncpa %s4709, 1
    %4711 = vsyncpa [#allocation11], 1
    %s4712 = scalar_lea.sflag [#allocation11], 1
    %4713 = vsyncpa %s4712, 1
    %4714 = vsyncpa [#allocation6], 1
    %s4715 = scalar_lea.sflag [#allocation6], 1
    %4716 = vsyncpa %s4715, 1
    %4717 = vsyncpa [#allocation8], 1
  %4718 = vsyncmov [#allocation3]
  %s4719 = vpop.sfrf %4718
  %p4720 = scmp.eq.s32.totalorder %s4719, 0
  %p4721 = pneg %p4720
  %4723 = shalt.err (%p4721)
  %s4724 = scalar_lea.sflag [#allocation3], 1
  %4725 = vsyncmov %s4724
  %s4726 = vpop.sfrf %4725
  %p4727 = scmp.eq.s32.totalorder %s4726, 0
  %p4728 = pneg %p4727
  %4730 = shalt.err (%p4728)

</llo_original>
